<compile_context>
chip_gen: v7x
topology: tpu7x:2x2x1
jax: 0.10.0
libtpu: 0.0.40
codegen_flags: <defaults>
</compile_context>

<pallas_src>
import math
from functools import partial

import jax
import jax.numpy as jnp
from jax.experimental import pallas as pl
from jax.experimental.pallas import tpu as pltpu

INPUT_SIZE = 32
OUT_SIZE = 8 * 3  # 24

# Logical (in, out) dims for every Linear, in call order.
ENCODER_DIMS = [(INPUT_SIZE, 600), (600, 250), (250, 100), (100, 30)]
RESIDUAL_DIMS = [(INPUT_SIZE, 30)]
DECODER_DIMS = [(30, 100), (100, 250), (250, 600), (600, OUT_SIZE)]


def _round_up(n, m):
    return ((n + m - 1) // m) * m


# Lane-padded feature dims (the input keeps its real width of 32).
H1_PAD = _round_up(600, 128)        # 640
H2_PAD = _round_up(250, 128)        # 256
H3_PAD = _round_up(100, 128)        # 128
LAT_PAD = _round_up(30, 128)        # 128
OUT_PAD = _round_up(OUT_SIZE, 128)  # 128

FLOPS_PER_ROW = 2 * (INPUT_SIZE * 600 + 600 * 250 + 250 * 100 + 100 * 30
                     + INPUT_SIZE * 30
                     + 30 * 100 + 100 * 250 + 250 * 600 + 600 * OUT_SIZE)
TRANS_PER_ROW = 600 + 250 + 100 + 30 + 100 + 250 + 600

TM_DEFAULT_MAX = 1024  # large tiles amortize the ~0.35 us per-grid-step cost


def _vae_kernel(x_ref,
                w1r, b1r, w2, b2, w3, b3, w4, b4,        # encoder (+fused residual)
                wd1, bd1, wd2, bd2, wd3, bd3, wd4, bd4,  # decoder
                out_ref, *, act_dtype):
    """One batch tile of the VAE forward pass."""
    x = x_ref[...]  # (tm, 32) bf16

    def lin(h, w_ref, b_ref):
        # bf16 MXU operands, f32 accumulation, f32 bias add.
        return jnp.dot(h.astype(jnp.bfloat16), w_ref[...],
                       preferred_element_type=jnp.float32) + b_ref[...]

    def act(a_f32):
        # tanh in act_dtype: bf16 on v6e/v7x (bf16 EUP/VPU), f32 on v5e.
        return jnp.tanh(a_f32.astype(act_dtype))

    # Fused first encoder layer + residual projection: x @ [We1 | Wr].
    h0 = jnp.dot(x, w1r[...], preferred_element_type=jnp.float32) + b1r[...]
    h = act(h0[:, :H1_PAD])                      # (tm, 640) encoder layer 1
    residual = h0[:, H1_PAD:].astype(act_dtype)  # (tm, 128) raw residual, pads 0

    # Remaining encoder layers: Linear -> Tanh.
    h = act(lin(h, w2, b2))
    h = act(lin(h, w3, b3))
    encoded = act(lin(h, w4, b4))                # padded latent lanes stay 0

    z = encoded + residual

    # Decoder: (Linear -> Tanh) x3, final Linear (no activation).
    h = act(lin(z, wd1, bd1))
    h = act(lin(h, wd2, bd2))
    h = act(lin(h, wd3, bd3))
    out_ref[...] = lin(h, wd4, bd4).astype(out_ref.dtype)


def init_params(key):
    """PyTorch-style init: U(-1/sqrt(fan_in), 1/sqrt(fan_in)).

    Returns unpadded f32 params laid out as W:(in, out), b:(1, out).
    """
    params = []
    for (fan_in, fan_out) in ENCODER_DIMS + RESIDUAL_DIMS + DECODER_DIMS:
        key, kw, kb = jax.random.split(key, 3)
        bound = 1.0 / math.sqrt(fan_in)
        w = jax.random.uniform(kw, (fan_in, fan_out), jnp.float32, -bound, bound)
        b = jax.random.uniform(kb, (1, fan_out), jnp.float32, -bound, bound)
        params += [w, b]
    return params


def pack_params(params):
    """Zero-pad to lane multiples, cast weights to bf16, fuse We1 with Wr."""
    (we1, be1, we2, be2, we3, be3, we4, be4,
     wr, br,
     wd1, bd1, wd2, bd2, wd3, bd3, wd4, bd4) = params

    def pad_w(w, rp, cp):
        out = jnp.zeros((rp, cp), jnp.bfloat16)
        return out.at[:w.shape[0], :w.shape[1]].set(w.astype(jnp.bfloat16))

    def pad_b(b, cp):
        out = jnp.zeros((1, cp), jnp.float32)
        return out.at[:, :b.shape[1]].set(b)

    # Fused layer-1 + residual weight: in-dim stays 32 (full array dim; also a
    # bf16 sublane-packing multiple of 16).
    w1r = jnp.concatenate([pad_w(we1, INPUT_SIZE, H1_PAD),
                           pad_w(wr, INPUT_SIZE, LAT_PAD)], axis=1)   # (32, 768)
    b1r = jnp.concatenate([pad_b(be1, H1_PAD),
                           pad_b(br, LAT_PAD)], axis=1)               # (1, 768)

    return [
        w1r, b1r,
        pad_w(we2, H1_PAD, H2_PAD), pad_b(be2, H2_PAD),
        pad_w(we3, H2_PAD, H3_PAD), pad_b(be3, H3_PAD),
        pad_w(we4, H3_PAD, LAT_PAD), pad_b(be4, LAT_PAD),
        pad_w(wd1, LAT_PAD, H3_PAD), pad_b(bd1, H3_PAD),
        pad_w(wd2, H3_PAD, H2_PAD), pad_b(bd2, H2_PAD),
        pad_w(wd3, H2_PAD, H1_PAD), pad_b(bd3, H1_PAD),
        pad_w(wd4, H1_PAD, OUT_PAD), pad_b(bd4, OUT_PAD),
    ]


def _act_dtype_for_device():
    """bf16 activations/tanh only on generations with bf16 VPU/EUP (v6e, v7x)."""
    try:
        kind = jax.devices()[0].device_kind.lower()
    except Exception:
        return jnp.float32
    if ("v6" in kind) or ("v7" in kind) or ("7x" in kind):
        return jnp.bfloat16
    return jnp.float32  # v5e and earlier: keep f32 tanh


def vae_forward(x, packed, tm=None, act_dtype=None):
    """x: (B, INPUT_SIZE) f32.  packed: output of pack_params.  Returns (B, 24) f32."""
    B = x.shape[0]
    if act_dtype is None:
        act_dtype = _act_dtype_for_device()

    # Batch tile: multiple of 16 (bf16 sublane packing).  Default heuristic
    # targets an even grid of >= 2 steps (both v7x TensorCores busy), capped at
    # TM_DEFAULT_MAX for large batches.
    if tm is None:
        tm = min(TM_DEFAULT_MAX, max(16, _round_up(pl.cdiv(B, 2), 16)))
    tm = max(16, _round_up(tm, 16))
    assert tm % 16 == 0, "batch tile must be a bf16 sublane-packing multiple (16)"
    B_pad = _round_up(B, tm)
    grid = B_pad // tm

    # Pad only the batch rows (zeros flow harmlessly through the network).
    x_pad = jnp.zeros((B_pad, INPUT_SIZE), jnp.bfloat16)
    x_pad = x_pad.at[:B, :].set(x.astype(jnp.bfloat16))

    x_spec = pl.BlockSpec((tm, INPUT_SIZE), lambda i: (i, 0))
    out_spec = pl.BlockSpec((tm, OUT_PAD), lambda i: (i, 0))

    param_bytes = sum(int(p.size) * p.dtype.itemsize for p in packed)
    cost = pl.CostEstimate(
        flops=FLOPS_PER_ROW * B_pad,
        transcendentals=TRANS_PER_ROW * B_pad,
        bytes_accessed=param_bytes + int(x_pad.size) * 2 + B_pad * OUT_PAD * 4,
    )

    # Large tiles can exceed v5e's 16 MiB default scoped-VMEM limit.
    vmem_limit = 64 * 1024 * 1024 if tm >= 1024 else None

    def run(single_buffer_weights):
        def pspec(p):
            if single_buffer_weights:
                # Grid-invariant index map -> single buffer, no second copy.
                return pl.BlockSpec(p.shape, lambda i: (0, 0),
                                    pipeline_mode=pl.Buffered(1))
            return pl.BlockSpec(p.shape, lambda i: (0, 0))

        return pl.pallas_call(
            partial(_vae_kernel, act_dtype=act_dtype),
            out_shape=jax.ShapeDtypeStruct((B_pad, OUT_PAD), jnp.float32),
            grid_spec=pltpu.PrefetchScalarGridSpec(
                num_scalar_prefetch=0,
                grid=(grid,),
                in_specs=[x_spec] + [pspec(p) for p in packed],
                out_specs=out_spec,
            ),
            compiler_params=pltpu.CompilerParams(
                dimension_semantics=("parallel",),
                vmem_limit_bytes=vmem_limit,
            ),
            cost_estimate=cost,
        )(x_pad, *packed)

    try:
        out = run(True)
    except Exception:
        # This jax version rejects pipeline_mode=Buffered(1): fall back to the
        # default double-buffered weight blocks (correctness unaffected).
        out = run(False)

    return out[:B, :OUT_SIZE]


def vae_forward_ref(x, params):
    """Pure-JAX f32 reference (unpadded params) for correctness checking."""
    (we1, be1, we2, be2, we3, be3, we4, be4,
     wr, br,
     wd1, bd1, wd2, bd2, wd3, bd3, wd4, bd4) = params
    h = jnp.tanh(x @ we1 + be1)
    h = jnp.tanh(h @ we2 + be2)
    h = jnp.tanh(h @ we3 + be3)
    enc = jnp.tanh(h @ we4 + be4)
    res = x @ wr + br
    z = enc + res
    h = jnp.tanh(z @ wd1 + bd1)
    h = jnp.tanh(h @ wd2 + bd2)
    h = jnp.tanh(h @ wd3 + bd3)
    return h @ wd4 + bd4


if __name__ == "__main__":
    key = jax.random.PRNGKey(0)
    key, kx1, kx2 = jax.random.split(key, 3)

    params = init_params(key)
    packed = pack_params(params)

    # Test 1: explicit tm=16 (bf16-tile aligned) -> 2 pipelined grid steps.
    b1 = 24
    x1 = jax.random.normal(kx1, (b1, INPUT_SIZE), jnp.float32)
    out1 = jax.block_until_ready(vae_forward(x1, packed, tm=16))
    ref1 = vae_forward_ref(x1, params)
    assert out1.shape == (b1, OUT_SIZE)
    err1 = float(jnp.max(jnp.abs(out1 - ref1)))
    assert jnp.allclose(out1, ref1, atol=5e-2, rtol=5e-2), err1

    # Test 2: batch not a sublane multiple, auto tm (even-grid heuristic),
    # exercises row padding + slice-back.
    b2 = 13
    x2 = jax.random.normal(kx2, (b2, INPUT_SIZE), jnp.float32)
    out2 = jax.block_until_ready(vae_forward(x2, packed))
    ref2 = vae_forward_ref(x2, params)
    assert out2.shape == (b2, OUT_SIZE)
    err2 = float(jnp.max(jnp.abs(out2 - ref2)))
    assert jnp.allclose(out2, ref2, atol=5e-2, rtol=5e-2), err2

    print("KERNEL_OK")
</pallas_src>

<mosaic_0001>
module attributes {stable_mosaic.version = 11 : i64} {
  func.func @_vae_kernel(%arg0: i32, %arg1: memref<16x32xbf16, #tpu.memory_space<vmem>>, %arg2: memref<32x768xbf16, #tpu.memory_space<vmem>>, %arg3: memref<1x768xf32, #tpu.memory_space<vmem>>, %arg4: memref<640x256xbf16, #tpu.memory_space<vmem>>, %arg5: memref<1x256xf32, #tpu.memory_space<vmem>>, %arg6: memref<256x128xbf16, #tpu.memory_space<vmem>>, %arg7: memref<1x128xf32, #tpu.memory_space<vmem>>, %arg8: memref<128x128xbf16, #tpu.memory_space<vmem>>, %arg9: memref<1x128xf32, #tpu.memory_space<vmem>>, %arg10: memref<128x128xbf16, #tpu.memory_space<vmem>>, %arg11: memref<1x128xf32, #tpu.memory_space<vmem>>, %arg12: memref<128x256xbf16, #tpu.memory_space<vmem>>, %arg13: memref<1x256xf32, #tpu.memory_space<vmem>>, %arg14: memref<256x640xbf16, #tpu.memory_space<vmem>>, %arg15: memref<1x640xf32, #tpu.memory_space<vmem>>, %arg16: memref<640x128xbf16, #tpu.memory_space<vmem>>, %arg17: memref<1x128xf32, #tpu.memory_space<vmem>>, %arg18: memref<16x128xf32, #tpu.memory_space<vmem>>) attributes {dimension_semantics = [#tpu.dimension_semantics<parallel>], iteration_bounds = array<i64: 2>, scalar_prefetch = 0 : i64, scratch_operands = 0 : i64, tpu.core_type = #tpu.core_type<tc>, window_params = [{transform_indices = @transform_0, window_bounds = array<i64: 16, 32>}, {pipeline_mode = #tpu.pipeline_mode<synchronous>, transform_indices = @transform_1, window_bounds = array<i64: 32, 768>}, {pipeline_mode = #tpu.pipeline_mode<synchronous>, transform_indices = @transform_2, window_bounds = array<i64: 1, 768>}, {pipeline_mode = #tpu.pipeline_mode<synchronous>, transform_indices = @transform_3, window_bounds = array<i64: 640, 256>}, {pipeline_mode = #tpu.pipeline_mode<synchronous>, transform_indices = @transform_4, window_bounds = array<i64: 1, 256>}, {pipeline_mode = #tpu.pipeline_mode<synchronous>, transform_indices = @transform_5, window_bounds = array<i64: 256, 128>}, {pipeline_mode = #tpu.pipeline_mode<synchronous>, transform_indices = @transform_6, window_bounds = array<i64: 1, 128>}, {pipeline_mode = #tpu.pipeline_mode<synchronous>, transform_indices = @transform_7, window_bounds = array<i64: 128, 128>}, {pipeline_mode = #tpu.pipeline_mode<synchronous>, transform_indices = @transform_8, window_bounds = array<i64: 1, 128>}, {pipeline_mode = #tpu.pipeline_mode<synchronous>, transform_indices = @transform_9, window_bounds = array<i64: 128, 128>}, {pipeline_mode = #tpu.pipeline_mode<synchronous>, transform_indices = @transform_10, window_bounds = array<i64: 1, 128>}, {pipeline_mode = #tpu.pipeline_mode<synchronous>, transform_indices = @transform_11, window_bounds = array<i64: 128, 256>}, {pipeline_mode = #tpu.pipeline_mode<synchronous>, transform_indices = @transform_12, window_bounds = array<i64: 1, 256>}, {pipeline_mode = #tpu.pipeline_mode<synchronous>, transform_indices = @transform_13, window_bounds = array<i64: 256, 640>}, {pipeline_mode = #tpu.pipeline_mode<synchronous>, transform_indices = @transform_14, window_bounds = array<i64: 1, 640>}, {pipeline_mode = #tpu.pipeline_mode<synchronous>, transform_indices = @transform_15, window_bounds = array<i64: 640, 128>}, {pipeline_mode = #tpu.pipeline_mode<synchronous>, transform_indices = @transform_16, window_bounds = array<i64: 1, 128>}, {transform_indices = @transform_17, window_bounds = array<i64: 16, 128>}]} {
    %c0 = arith.constant 0 : index
    %c0_0 = arith.constant 0 : index
    %0 = vector.load %arg1[%c0, %c0_0] : memref<16x32xbf16, #tpu.memory_space<vmem>>, vector<16x32xbf16>
    %c0_1 = arith.constant 0 : index
    %c0_2 = arith.constant 0 : index
    %1 = vector.load %arg2[%c0_1, %c0_2] : memref<32x768xbf16, #tpu.memory_space<vmem>>, vector<32x768xbf16>
    %cst = arith.constant dense<0.000000e+00> : vector<16x768xf32>
    %2 = tpu.matmul %0, %1, %cst {dimension_numbers = #tpu.dot_dimension_numbers<[1], [0], [0], [1], [0, 0, 1, 1], [], []>} : vector<16x32xbf16>, vector<32x768xbf16>, vector<16x768xf32> -> vector<16x768xf32>
    %c0_3 = arith.constant 0 : index
    %c0_4 = arith.constant 0 : index
    %3 = vector.load %arg3[%c0_3, %c0_4] : memref<1x768xf32, #tpu.memory_space<vmem>>, vector<1x768xf32>
    %4 = vector.broadcast %3 : vector<1x768xf32> to vector<16x768xf32>
    %5 = arith.addf %2, %4 : vector<16x768xf32>
    %6 = vector.extract_strided_slice %5 {offsets = [0, 0], sizes = [16, 640], strides = [1, 1]} : vector<16x768xf32> to vector<16x640xf32>
    %7 = math.tanh %6 : vector<16x640xf32>
    %8 = vector.extract_strided_slice %5 {offsets = [0, 640], sizes = [16, 128], strides = [1, 1]} : vector<16x768xf32> to vector<16x128xf32>
    %9 = arith.truncf %7 : vector<16x640xf32> to vector<16x640xbf16>
    %c0_5 = arith.constant 0 : index
    %c0_6 = arith.constant 0 : index
    %10 = vector.load %arg4[%c0_5, %c0_6] : memref<640x256xbf16, #tpu.memory_space<vmem>>, vector<640x256xbf16>
    %cst_7 = arith.constant dense<0.000000e+00> : vector<16x256xf32>
    %11 = tpu.matmul %9, %10, %cst_7 {dimension_numbers = #tpu.dot_dimension_numbers<[1], [0], [0], [1], [0, 0, 1, 1], [], []>} : vector<16x640xbf16>, vector<640x256xbf16>, vector<16x256xf32> -> vector<16x256xf32>
    %c0_8 = arith.constant 0 : index
    %c0_9 = arith.constant 0 : index
    %12 = vector.load %arg5[%c0_8, %c0_9] : memref<1x256xf32, #tpu.memory_space<vmem>>, vector<1x256xf32>
    %13 = vector.broadcast %12 : vector<1x256xf32> to vector<16x256xf32>
    %14 = arith.addf %11, %13 : vector<16x256xf32>
    %15 = math.tanh %14 : vector<16x256xf32>
    %16 = arith.truncf %15 : vector<16x256xf32> to vector<16x256xbf16>
    %c0_10 = arith.constant 0 : index
    %c0_11 = arith.constant 0 : index
    %17 = vector.load %arg6[%c0_10, %c0_11] : memref<256x128xbf16, #tpu.memory_space<vmem>>, vector<256x128xbf16>
    %cst_12 = arith.constant dense<0.000000e+00> : vector<16x128xf32>
    %18 = tpu.matmul %16, %17, %cst_12 {dimension_numbers = #tpu.dot_dimension_numbers<[1], [0], [0], [1], [0, 0, 1, 1], [], []>} : vector<16x256xbf16>, vector<256x128xbf16>, vector<16x128xf32> -> vector<16x128xf32>
    %c0_13 = arith.constant 0 : index
    %c0_14 = arith.constant 0 : index
    %19 = vector.load %arg7[%c0_13, %c0_14] : memref<1x128xf32, #tpu.memory_space<vmem>>, vector<1x128xf32>
    %20 = vector.broadcast %19 : vector<1x128xf32> to vector<16x128xf32>
    %21 = arith.addf %18, %20 : vector<16x128xf32>
    %22 = math.tanh %21 : vector<16x128xf32>
    %23 = arith.truncf %22 : vector<16x128xf32> to vector<16x128xbf16>
    %c0_15 = arith.constant 0 : index
    %c0_16 = arith.constant 0 : index
    %24 = vector.load %arg8[%c0_15, %c0_16] : memref<128x128xbf16, #tpu.memory_space<vmem>>, vector<128x128xbf16>
    %cst_17 = arith.constant dense<0.000000e+00> : vector<16x128xf32>
    %25 = tpu.matmul %23, %24, %cst_17 {dimension_numbers = #tpu.dot_dimension_numbers<[1], [0], [0], [1], [0, 0, 1, 1], [], []>} : vector<16x128xbf16>, vector<128x128xbf16>, vector<16x128xf32> -> vector<16x128xf32>
    %c0_18 = arith.constant 0 : index
    %c0_19 = arith.constant 0 : index
    %26 = vector.load %arg9[%c0_18, %c0_19] : memref<1x128xf32, #tpu.memory_space<vmem>>, vector<1x128xf32>
    %27 = vector.broadcast %26 : vector<1x128xf32> to vector<16x128xf32>
    %28 = arith.addf %25, %27 : vector<16x128xf32>
    %29 = math.tanh %28 : vector<16x128xf32>
    %30 = arith.addf %29, %8 : vector<16x128xf32>
    %31 = arith.truncf %30 : vector<16x128xf32> to vector<16x128xbf16>
    %c0_20 = arith.constant 0 : index
    %c0_21 = arith.constant 0 : index
    %32 = vector.load %arg10[%c0_20, %c0_21] : memref<128x128xbf16, #tpu.memory_space<vmem>>, vector<128x128xbf16>
    %cst_22 = arith.constant dense<0.000000e+00> : vector<16x128xf32>
    %33 = tpu.matmul %31, %32, %cst_22 {dimension_numbers = #tpu.dot_dimension_numbers<[1], [0], [0], [1], [0, 0, 1, 1], [], []>} : vector<16x128xbf16>, vector<128x128xbf16>, vector<16x128xf32> -> vector<16x128xf32>
    %c0_23 = arith.constant 0 : index
    %c0_24 = arith.constant 0 : index
    %34 = vector.load %arg11[%c0_23, %c0_24] : memref<1x128xf32, #tpu.memory_space<vmem>>, vector<1x128xf32>
    %35 = vector.broadcast %34 : vector<1x128xf32> to vector<16x128xf32>
    %36 = arith.addf %33, %35 : vector<16x128xf32>
    %37 = math.tanh %36 : vector<16x128xf32>
    %38 = arith.truncf %37 : vector<16x128xf32> to vector<16x128xbf16>
    %c0_25 = arith.constant 0 : index
    %c0_26 = arith.constant 0 : index
    %39 = vector.load %arg12[%c0_25, %c0_26] : memref<128x256xbf16, #tpu.memory_space<vmem>>, vector<128x256xbf16>
    %cst_27 = arith.constant dense<0.000000e+00> : vector<16x256xf32>
    %40 = tpu.matmul %38, %39, %cst_27 {dimension_numbers = #tpu.dot_dimension_numbers<[1], [0], [0], [1], [0, 0, 1, 1], [], []>} : vector<16x128xbf16>, vector<128x256xbf16>, vector<16x256xf32> -> vector<16x256xf32>
    %c0_28 = arith.constant 0 : index
    %c0_29 = arith.constant 0 : index
    %41 = vector.load %arg13[%c0_28, %c0_29] : memref<1x256xf32, #tpu.memory_space<vmem>>, vector<1x256xf32>
    %42 = vector.broadcast %41 : vector<1x256xf32> to vector<16x256xf32>
    %43 = arith.addf %40, %42 : vector<16x256xf32>
    %44 = math.tanh %43 : vector<16x256xf32>
    %45 = arith.truncf %44 : vector<16x256xf32> to vector<16x256xbf16>
    %c0_30 = arith.constant 0 : index
    %c0_31 = arith.constant 0 : index
    %46 = vector.load %arg14[%c0_30, %c0_31] : memref<256x640xbf16, #tpu.memory_space<vmem>>, vector<256x640xbf16>
    %cst_32 = arith.constant dense<0.000000e+00> : vector<16x640xf32>
    %47 = tpu.matmul %45, %46, %cst_32 {dimension_numbers = #tpu.dot_dimension_numbers<[1], [0], [0], [1], [0, 0, 1, 1], [], []>} : vector<16x256xbf16>, vector<256x640xbf16>, vector<16x640xf32> -> vector<16x640xf32>
    %c0_33 = arith.constant 0 : index
    %c0_34 = arith.constant 0 : index
    %48 = vector.load %arg15[%c0_33, %c0_34] : memref<1x640xf32, #tpu.memory_space<vmem>>, vector<1x640xf32>
    %49 = vector.broadcast %48 : vector<1x640xf32> to vector<16x640xf32>
    %50 = arith.addf %47, %49 : vector<16x640xf32>
    %51 = math.tanh %50 : vector<16x640xf32>
    %52 = arith.truncf %51 : vector<16x640xf32> to vector<16x640xbf16>
    %c0_35 = arith.constant 0 : index
    %c0_36 = arith.constant 0 : index
    %53 = vector.load %arg16[%c0_35, %c0_36] : memref<640x128xbf16, #tpu.memory_space<vmem>>, vector<640x128xbf16>
    %cst_37 = arith.constant dense<0.000000e+00> : vector<16x128xf32>
    %54 = tpu.matmul %52, %53, %cst_37 {dimension_numbers = #tpu.dot_dimension_numbers<[1], [0], [0], [1], [0, 0, 1, 1], [], []>} : vector<16x640xbf16>, vector<640x128xbf16>, vector<16x128xf32> -> vector<16x128xf32>
    %c0_38 = arith.constant 0 : index
    %c0_39 = arith.constant 0 : index
    %55 = vector.load %arg17[%c0_38, %c0_39] : memref<1x128xf32, #tpu.memory_space<vmem>>, vector<1x128xf32>
    %56 = vector.broadcast %55 : vector<1x128xf32> to vector<16x128xf32>
    %57 = arith.addf %54, %56 : vector<16x128xf32>
    %c0_40 = arith.constant 0 : index
    %c0_41 = arith.constant 0 : index
    %58 = vector.load %arg18[%c0_40, %c0_41] : memref<16x128xf32, #tpu.memory_space<vmem>>, vector<16x128xf32>
    tpu.vector_store %arg18[%c0_40, %c0_41], %57 {strides = array<i32>} : memref<16x128xf32, #tpu.memory_space<vmem>>, vector<16x128xf32>,
    return
  }
  func.func @transform_0(%arg0: i32) -> (i32, i32) {
    %c0_i32 = arith.constant 0 : i32
    %c0_i32_0 = arith.constant 0 : i32
    return %arg0, %c0_i32 : i32, i32
  }
  func.func @transform_1(%arg0: i32) -> (i32, i32) {
    %c0_i32 = arith.constant 0 : i32
    %c0_i32_0 = arith.constant 0 : i32
    %c0_i32_1 = arith.constant 0 : i32
    return %c0_i32, %c0_i32_0 : i32, i32
  }
  func.func @transform_2(%arg0: i32) -> (i32, i32) {
    %c0_i32 = arith.constant 0 : i32
    %c0_i32_0 = arith.constant 0 : i32
    %c0_i32_1 = arith.constant 0 : i32
    return %c0_i32, %c0_i32_0 : i32, i32
  }
  func.func @transform_3(%arg0: i32) -> (i32, i32) {
    %c0_i32 = arith.constant 0 : i32
    %c0_i32_0 = arith.constant 0 : i32
    %c0_i32_1 = arith.constant 0 : i32
    return %c0_i32, %c0_i32_0 : i32, i32
  }
  func.func @transform_4(%arg0: i32) -> (i32, i32) {
    %c0_i32 = arith.constant 0 : i32
    %c0_i32_0 = arith.constant 0 : i32
    %c0_i32_1 = arith.constant 0 : i32
    return %c0_i32, %c0_i32_0 : i32, i32
  }
  func.func @transform_5(%arg0: i32) -> (i32, i32) {
    %c0_i32 = arith.constant 0 : i32
    %c0_i32_0 = arith.constant 0 : i32
    %c0_i32_1 = arith.constant 0 : i32
    return %c0_i32, %c0_i32_0 : i32, i32
  }
  func.func @transform_6(%arg0: i32) -> (i32, i32) {
    %c0_i32 = arith.constant 0 : i32
    %c0_i32_0 = arith.constant 0 : i32
    %c0_i32_1 = arith.constant 0 : i32
    return %c0_i32, %c0_i32_0 : i32, i32
  }
  func.func @transform_7(%arg0: i32) -> (i32, i32) {
    %c0_i32 = arith.constant 0 : i32
    %c0_i32_0 = arith.constant 0 : i32
    %c0_i32_1 = arith.constant 0 : i32
    return %c0_i32, %c0_i32_0 : i32, i32
  }
  func.func @transform_8(%arg0: i32) -> (i32, i32) {
    %c0_i32 = arith.constant 0 : i32
    %c0_i32_0 = arith.constant 0 : i32
    %c0_i32_1 = arith.constant 0 : i32
    return %c0_i32, %c0_i32_0 : i32, i32
  }
  func.func @transform_9(%arg0: i32) -> (i32, i32) {
    %c0_i32 = arith.constant 0 : i32
    %c0_i32_0 = arith.constant 0 : i32
    %c0_i32_1 = arith.constant 0 : i32
    return %c0_i32, %c0_i32_0 : i32, i32
  }
  func.func @transform_10(%arg0: i32) -> (i32, i32) {
    %c0_i32 = arith.constant 0 : i32
    %c0_i32_0 = arith.constant 0 : i32
    %c0_i32_1 = arith.constant 0 : i32
    return %c0_i32, %c0_i32_0 : i32, i32
  }
  func.func @transform_11(%arg0: i32) -> (i32, i32) {
    %c0_i32 = arith.constant 0 : i32
    %c0_i32_0 = arith.constant 0 : i32
    %c0_i32_1 = arith.constant 0 : i32
    return %c0_i32, %c0_i32_0 : i32, i32
  }
  func.func @transform_12(%arg0: i32) -> (i32, i32) {
    %c0_i32 = arith.constant 0 : i32
    %c0_i32_0 = arith.constant 0 : i32
    %c0_i32_1 = arith.constant 0 : i32
    return %c0_i32, %c0_i32_0 : i32, i32
  }
  func.func @transform_13(%arg0: i32) -> (i32, i32) {
    %c0_i32 = arith.constant 0 : i32
    %c0_i32_0 = arith.constant 0 : i32
    %c0_i32_1 = arith.constant 0 : i32
    return %c0_i32, %c0_i32_0 : i32, i32
  }
  func.func @transform_14(%arg0: i32) -> (i32, i32) {
    %c0_i32 = arith.constant 0 : i32
    %c0_i32_0 = arith.constant 0 : i32
    %c0_i32_1 = arith.constant 0 : i32
    return %c0_i32, %c0_i32_0 : i32, i32
  }
  func.func @transform_15(%arg0: i32) -> (i32, i32) {
    %c0_i32 = arith.constant 0 : i32
    %c0_i32_0 = arith.constant 0 : i32
    %c0_i32_1 = arith.constant 0 : i32
    return %c0_i32, %c0_i32_0 : i32, i32
  }
  func.func @transform_16(%arg0: i32) -> (i32, i32) {
    %c0_i32 = arith.constant 0 : i32
    %c0_i32_0 = arith.constant 0 : i32
    %c0_i32_1 = arith.constant 0 : i32
    return %c0_i32, %c0_i32_0 : i32, i32
  }
  func.func @transform_17(%arg0: i32) -> (i32, i32) {
    %c0_i32 = arith.constant 0 : i32
    %c0_i32_0 = arith.constant 0 : i32
    return %arg0, %c0_i32 : i32, i32
  }
}

module attributes {stable_mosaic.version = 11 : i64} {
  func.func @_vae_kernel(%arg0: i32, %arg1: memref<16x32xbf16, #tpu.memory_space<vmem>>, %arg2: memref<32x768xbf16, #tpu.memory_space<vmem>>, %arg3: memref<1x768xf32, #tpu.memory_space<vmem>>, %arg4: memref<640x256xbf16, #tpu.memory_space<vmem>>, %arg5: memref<1x256xf32, #tpu.memory_space<vmem>>, %arg6: memref<256x128xbf16, #tpu.memory_space<vmem>>, %arg7: memref<1x128xf32, #tpu.memory_space<vmem>>, %arg8: memref<128x128xbf16, #tpu.memory_space<vmem>>, %arg9: memref<1x128xf32, #tpu.memory_space<vmem>>, %arg10: memref<128x128xbf16, #tpu.memory_space<vmem>>, %arg11: memref<1x128xf32, #tpu.memory_space<vmem>>, %arg12: memref<128x256xbf16, #tpu.memory_space<vmem>>, %arg13: memref<1x256xf32, #tpu.memory_space<vmem>>, %arg14: memref<256x640xbf16, #tpu.memory_space<vmem>>, %arg15: memref<1x640xf32, #tpu.memory_space<vmem>>, %arg16: memref<640x128xbf16, #tpu.memory_space<vmem>>, %arg17: memref<1x128xf32, #tpu.memory_space<vmem>>, %arg18: memref<16x128xf32, #tpu.memory_space<vmem>>) attributes {dimension_semantics = [#tpu.dimension_semantics<parallel>], iteration_bounds = array<i64: 2>, scalar_prefetch = 0 : i64, scratch_operands = 0 : i64, tpu.core_type = #tpu.core_type<tc>, window_params = [{transform_indices = @transform_0, window_bounds = array<i64: 16, 32>}, {pipeline_mode = #tpu.pipeline_mode<synchronous>, transform_indices = @transform_1, window_bounds = array<i64: 32, 768>}, {pipeline_mode = #tpu.pipeline_mode<synchronous>, transform_indices = @transform_2, window_bounds = array<i64: 1, 768>}, {pipeline_mode = #tpu.pipeline_mode<synchronous>, transform_indices = @transform_3, window_bounds = array<i64: 640, 256>}, {pipeline_mode = #tpu.pipeline_mode<synchronous>, transform_indices = @transform_4, window_bounds = array<i64: 1, 256>}, {pipeline_mode = #tpu.pipeline_mode<synchronous>, transform_indices = @transform_5, window_bounds = array<i64: 256, 128>}, {pipeline_mode = #tpu.pipeline_mode<synchronous>, transform_indices = @transform_6, window_bounds = array<i64: 1, 128>}, {pipeline_mode = #tpu.pipeline_mode<synchronous>, transform_indices = @transform_7, window_bounds = array<i64: 128, 128>}, {pipeline_mode = #tpu.pipeline_mode<synchronous>, transform_indices = @transform_8, window_bounds = array<i64: 1, 128>}, {pipeline_mode = #tpu.pipeline_mode<synchronous>, transform_indices = @transform_9, window_bounds = array<i64: 128, 128>}, {pipeline_mode = #tpu.pipeline_mode<synchronous>, transform_indices = @transform_10, window_bounds = array<i64: 1, 128>}, {pipeline_mode = #tpu.pipeline_mode<synchronous>, transform_indices = @transform_11, window_bounds = array<i64: 128, 256>}, {pipeline_mode = #tpu.pipeline_mode<synchronous>, transform_indices = @transform_12, window_bounds = array<i64: 1, 256>}, {pipeline_mode = #tpu.pipeline_mode<synchronous>, transform_indices = @transform_13, window_bounds = array<i64: 256, 640>}, {pipeline_mode = #tpu.pipeline_mode<synchronous>, transform_indices = @transform_14, window_bounds = array<i64: 1, 640>}, {pipeline_mode = #tpu.pipeline_mode<synchronous>, transform_indices = @transform_15, window_bounds = array<i64: 640, 128>}, {pipeline_mode = #tpu.pipeline_mode<synchronous>, transform_indices = @transform_16, window_bounds = array<i64: 1, 128>}, {transform_indices = @transform_17, window_bounds = array<i64: 16, 128>}]} {
    %c0 = arith.constant 0 : index
    %c0_0 = arith.constant 0 : index
    %0 = vector.load %arg1[%c0, %c0_0] : memref<16x32xbf16, #tpu.memory_space<vmem>>, vector<16x32xbf16>
    %c0_1 = arith.constant 0 : index
    %c0_2 = arith.constant 0 : index
    %1 = vector.load %arg2[%c0_1, %c0_2] : memref<32x768xbf16, #tpu.memory_space<vmem>>, vector<32x768xbf16>
    %cst = arith.constant dense<0.000000e+00> : vector<16x768xf32>
    %2 = tpu.matmul %0, %1, %cst {dimension_numbers = #tpu.dot_dimension_numbers<[1], [0], [0], [1], [0, 0, 1, 1], [], []>} : vector<16x32xbf16>, vector<32x768xbf16>, vector<16x768xf32> -> vector<16x768xf32>
    %c0_3 = arith.constant 0 : index
    %c0_4 = arith.constant 0 : index
    %3 = vector.load %arg3[%c0_3, %c0_4] : memref<1x768xf32, #tpu.memory_space<vmem>>, vector<1x768xf32>
    %4 = vector.broadcast %3 : vector<1x768xf32> to vector<16x768xf32>
    %5 = arith.addf %2, %4 : vector<16x768xf32>
    %6 = vector.extract_strided_slice %5 {offsets = [0, 0], sizes = [16, 640], strides = [1, 1]} : vector<16x768xf32> to vector<16x640xf32>
    %7 = math.tanh %6 : vector<16x640xf32>
    %8 = vector.extract_strided_slice %5 {offsets = [0, 640], sizes = [16, 128], strides = [1, 1]} : vector<16x768xf32> to vector<16x128xf32>
    %9 = arith.truncf %7 : vector<16x640xf32> to vector<16x640xbf16>
    %c0_5 = arith.constant 0 : index
    %c0_6 = arith.constant 0 : index
    %10 = vector.load %arg4[%c0_5, %c0_6] : memref<640x256xbf16, #tpu.memory_space<vmem>>, vector<640x256xbf16>
    %cst_7 = arith.constant dense<0.000000e+00> : vector<16x256xf32>
    %11 = tpu.matmul %9, %10, %cst_7 {dimension_numbers = #tpu.dot_dimension_numbers<[1], [0], [0], [1], [0, 0, 1, 1], [], []>} : vector<16x640xbf16>, vector<640x256xbf16>, vector<16x256xf32> -> vector<16x256xf32>
    %c0_8 = arith.constant 0 : index
    %c0_9 = arith.constant 0 : index
    %12 = vector.load %arg5[%c0_8, %c0_9] : memref<1x256xf32, #tpu.memory_space<vmem>>, vector<1x256xf32>
    %13 = vector.broadcast %12 : vector<1x256xf32> to vector<16x256xf32>
    %14 = arith.addf %11, %13 : vector<16x256xf32>
    %15 = math.tanh %14 : vector<16x256xf32>
    %16 = arith.truncf %15 : vector<16x256xf32> to vector<16x256xbf16>
    %c0_10 = arith.constant 0 : index
    %c0_11 = arith.constant 0 : index
    %17 = vector.load %arg6[%c0_10, %c0_11] : memref<256x128xbf16, #tpu.memory_space<vmem>>, vector<256x128xbf16>
    %cst_12 = arith.constant dense<0.000000e+00> : vector<16x128xf32>
    %18 = tpu.matmul %16, %17, %cst_12 {dimension_numbers = #tpu.dot_dimension_numbers<[1], [0], [0], [1], [0, 0, 1, 1], [], []>} : vector<16x256xbf16>, vector<256x128xbf16>, vector<16x128xf32> -> vector<16x128xf32>
    %c0_13 = arith.constant 0 : index
    %c0_14 = arith.constant 0 : index
    %19 = vector.load %arg7[%c0_13, %c0_14] : memref<1x128xf32, #tpu.memory_space<vmem>>, vector<1x128xf32>
    %20 = vector.broadcast %19 : vector<1x128xf32> to vector<16x128xf32>
    %21 = arith.addf %18, %20 : vector<16x128xf32>
    %22 = math.tanh %21 : vector<16x128xf32>
    %23 = arith.truncf %22 : vector<16x128xf32> to vector<16x128xbf16>
    %c0_15 = arith.constant 0 : index
    %c0_16 = arith.constant 0 : index
    %24 = vector.load %arg8[%c0_15, %c0_16] : memref<128x128xbf16, #tpu.memory_space<vmem>>, vector<128x128xbf16>
    %cst_17 = arith.constant dense<0.000000e+00> : vector<16x128xf32>
    %25 = tpu.matmul %23, %24, %cst_17 {dimension_numbers = #tpu.dot_dimension_numbers<[1], [0], [0], [1], [0, 0, 1, 1], [], []>} : vector<16x128xbf16>, vector<128x128xbf16>, vector<16x128xf32> -> vector<16x128xf32>
    %c0_18 = arith.constant 0 : index
    %c0_19 = arith.constant 0 : index
    %26 = vector.load %arg9[%c0_18, %c0_19] : memref<1x128xf32, #tpu.memory_space<vmem>>, vector<1x128xf32>
    %27 = vector.broadcast %26 : vector<1x128xf32> to vector<16x128xf32>
    %28 = arith.addf %25, %27 : vector<16x128xf32>
    %29 = math.tanh %28 : vector<16x128xf32>
    %30 = arith.addf %29, %8 : vector<16x128xf32>
    %31 = arith.truncf %30 : vector<16x128xf32> to vector<16x128xbf16>
    %c0_20 = arith.constant 0 : index
    %c0_21 = arith.constant 0 : index
    %32 = vector.load %arg10[%c0_20, %c0_21] : memref<128x128xbf16, #tpu.memory_space<vmem>>, vector<128x128xbf16>
    %cst_22 = arith.constant dense<0.000000e+00> : vector<16x128xf32>
    %33 = tpu.matmul %31, %32, %cst_22 {dimension_numbers = #tpu.dot_dimension_numbers<[1], [0], [0], [1], [0, 0, 1, 1], [], []>} : vector<16x128xbf16>, vector<128x128xbf16>, vector<16x128xf32> -> vector<16x128xf32>
    %c0_23 = arith.constant 0 : index
    %c0_24 = arith.constant 0 : index
    %34 = vector.load %arg11[%c0_23, %c0_24] : memref<1x128xf32, #tpu.memory_space<vmem>>, vector<1x128xf32>
    %35 = vector.broadcast %34 : vector<1x128xf32> to vector<16x128xf32>
    %36 = arith.addf %33, %35 : vector<16x128xf32>
    %37 = math.tanh %36 : vector<16x128xf32>
    %38 = arith.truncf %37 : vector<16x128xf32> to vector<16x128xbf16>
    %c0_25 = arith.constant 0 : index
    %c0_26 = arith.constant 0 : index
    %39 = vector.load %arg12[%c0_25, %c0_26] : memref<128x256xbf16, #tpu.memory_space<vmem>>, vector<128x256xbf16>
    %cst_27 = arith.constant dense<0.000000e+00> : vector<16x256xf32>
    %40 = tpu.matmul %38, %39, %cst_27 {dimension_numbers = #tpu.dot_dimension_numbers<[1], [0], [0], [1], [0, 0, 1, 1], [], []>} : vector<16x128xbf16>, vector<128x256xbf16>, vector<16x256xf32> -> vector<16x256xf32>
    %c0_28 = arith.constant 0 : index
    %c0_29 = arith.constant 0 : index
    %41 = vector.load %arg13[%c0_28, %c0_29] : memref<1x256xf32, #tpu.memory_space<vmem>>, vector<1x256xf32>
    %42 = vector.broadcast %41 : vector<1x256xf32> to vector<16x256xf32>
    %43 = arith.addf %40, %42 : vector<16x256xf32>
    %44 = math.tanh %43 : vector<16x256xf32>
    %45 = arith.truncf %44 : vector<16x256xf32> to vector<16x256xbf16>
    %c0_30 = arith.constant 0 : index
    %c0_31 = arith.constant 0 : index
    %46 = vector.load %arg14[%c0_30, %c0_31] : memref<256x640xbf16, #tpu.memory_space<vmem>>, vector<256x640xbf16>
    %cst_32 = arith.constant dense<0.000000e+00> : vector<16x640xf32>
    %47 = tpu.matmul %45, %46, %cst_32 {dimension_numbers = #tpu.dot_dimension_numbers<[1], [0], [0], [1], [0, 0, 1, 1], [], []>} : vector<16x256xbf16>, vector<256x640xbf16>, vector<16x640xf32> -> vector<16x640xf32>
    %c0_33 = arith.constant 0 : index
    %c0_34 = arith.constant 0 : index
    %48 = vector.load %arg15[%c0_33, %c0_34] : memref<1x640xf32, #tpu.memory_space<vmem>>, vector<1x640xf32>
    %49 = vector.broadcast %48 : vector<1x640xf32> to vector<16x640xf32>
    %50 = arith.addf %47, %49 : vector<16x640xf32>
    %51 = math.tanh %50 : vector<16x640xf32>
    %52 = arith.truncf %51 : vector<16x640xf32> to vector<16x640xbf16>
    %c0_35 = arith.constant 0 : index
    %c0_36 = arith.constant 0 : index
    %53 = vector.load %arg16[%c0_35, %c0_36] : memref<640x128xbf16, #tpu.memory_space<vmem>>, vector<640x128xbf16>
    %cst_37 = arith.constant dense<0.000000e+00> : vector<16x128xf32>
    %54 = tpu.matmul %52, %53, %cst_37 {dimension_numbers = #tpu.dot_dimension_numbers<[1], [0], [0], [1], [0, 0, 1, 1], [], []>} : vector<16x640xbf16>, vector<640x128xbf16>, vector<16x128xf32> -> vector<16x128xf32>
    %c0_38 = arith.constant 0 : index
    %c0_39 = arith.constant 0 : index
    %55 = vector.load %arg17[%c0_38, %c0_39] : memref<1x128xf32, #tpu.memory_space<vmem>>, vector<1x128xf32>
    %56 = vector.broadcast %55 : vector<1x128xf32> to vector<16x128xf32>
    %57 = arith.addf %54, %56 : vector<16x128xf32>
    %c0_40 = arith.constant 0 : index
    %c0_41 = arith.constant 0 : index
    %58 = vector.load %arg18[%c0_40, %c0_41] : memref<16x128xf32, #tpu.memory_space<vmem>>, vector<16x128xf32>
    tpu.vector_store %arg18[%c0_40, %c0_41], %57 {strides = array<i32>} : memref<16x128xf32, #tpu.memory_space<vmem>>, vector<16x128xf32>,
    return
  }
  func.func @transform_0(%arg0: i32) -> (i32, i32) {
    %c0_i32 = arith.constant 0 : i32
    %c0_i32_0 = arith.constant 0 : i32
    return %arg0, %c0_i32 : i32, i32
  }
  func.func @transform_1(%arg0: i32) -> (i32, i32) {
    %c0_i32 = arith.constant 0 : i32
    %c0_i32_0 = arith.constant 0 : i32
    %c0_i32_1 = arith.constant 0 : i32
    return %c0_i32, %c0_i32_0 : i32, i32
  }
  func.func @transform_2(%arg0: i32) -> (i32, i32) {
    %c0_i32 = arith.constant 0 : i32
    %c0_i32_0 = arith.constant 0 : i32
    %c0_i32_1 = arith.constant 0 : i32
    return %c0_i32, %c0_i32_0 : i32, i32
  }
  func.func @transform_3(%arg0: i32) -> (i32, i32) {
    %c0_i32 = arith.constant 0 : i32
    %c0_i32_0 = arith.constant 0 : i32
    %c0_i32_1 = arith.constant 0 : i32
    return %c0_i32, %c0_i32_0 : i32, i32
  }
  func.func @transform_4(%arg0: i32) -> (i32, i32) {
    %c0_i32 = arith.constant 0 : i32
    %c0_i32_0 = arith.constant 0 : i32
    %c0_i32_1 = arith.constant 0 : i32
    return %c0_i32, %c0_i32_0 : i32, i32
  }
  func.func @transform_5(%arg0: i32) -> (i32, i32) {
    %c0_i32 = arith.constant 0 : i32
    %c0_i32_0 = arith.constant 0 : i32
    %c0_i32_1 = arith.constant 0 : i32
    return %c0_i32, %c0_i32_0 : i32, i32
  }
  func.func @transform_6(%arg0: i32) -> (i32, i32) {
    %c0_i32 = arith.constant 0 : i32
    %c0_i32_0 = arith.constant 0 : i32
    %c0_i32_1 = arith.constant 0 : i32
    return %c0_i32, %c0_i32_0 : i32, i32
  }
  func.func @transform_7(%arg0: i32) -> (i32, i32) {
    %c0_i32 = arith.constant 0 : i32
    %c0_i32_0 = arith.constant 0 : i32
    %c0_i32_1 = arith.constant 0 : i32
    return %c0_i32, %c0_i32_0 : i32, i32
  }
  func.func @transform_8(%arg0: i32) -> (i32, i32) {
    %c0_i32 = arith.constant 0 : i32
    %c0_i32_0 = arith.constant 0 : i32
    %c0_i32_1 = arith.constant 0 : i32
    return %c0_i32, %c0_i32_0 : i32, i32
  }
  func.func @transform_9(%arg0: i32) -> (i32, i32) {
    %c0_i32 = arith.constant 0 : i32
    %c0_i32_0 = arith.constant 0 : i32
    %c0_i32_1 = arith.constant 0 : i32
    return %c0_i32, %c0_i32_0 : i32, i32
  }
  func.func @transform_10(%arg0: i32) -> (i32, i32) {
    %c0_i32 = arith.constant 0 : i32
    %c0_i32_0 = arith.constant 0 : i32
    %c0_i32_1 = arith.constant 0 : i32
    return %c0_i32, %c0_i32_0 : i32, i32
  }
  func.func @transform_11(%arg0: i32) -> (i32, i32) {
    %c0_i32 = arith.constant 0 : i32
    %c0_i32_0 = arith.constant 0 : i32
    %c0_i32_1 = arith.constant 0 : i32
    return %c0_i32, %c0_i32_0 : i32, i32
  }
  func.func @transform_12(%arg0: i32) -> (i32, i32) {
    %c0_i32 = arith.constant 0 : i32
    %c0_i32_0 = arith.constant 0 : i32
    %c0_i32_1 = arith.constant 0 : i32
    return %c0_i32, %c0_i32_0 : i32, i32
  }
  func.func @transform_13(%arg0: i32) -> (i32, i32) {
    %c0_i32 = arith.constant 0 : i32
    %c0_i32_0 = arith.constant 0 : i32
    %c0_i32_1 = arith.constant 0 : i32
    return %c0_i32, %c0_i32_0 : i32, i32
  }
  func.func @transform_14(%arg0: i32) -> (i32, i32) {
    %c0_i32 = arith.constant 0 : i32
    %c0_i32_0 = arith.constant 0 : i32
    %c0_i32_1 = arith.constant 0 : i32
    return %c0_i32, %c0_i32_0 : i32, i32
  }
  func.func @transform_15(%arg0: i32) -> (i32, i32) {
    %c0_i32 = arith.constant 0 : i32
    %c0_i32_0 = arith.constant 0 : i32
    %c0_i32_1 = arith.constant 0 : i32
    return %c0_i32, %c0_i32_0 : i32, i32
  }
  func.func @transform_16(%arg0: i32) -> (i32, i32) {
    %c0_i32 = arith.constant 0 : i32
    %c0_i32_0 = arith.constant 0 : i32
    %c0_i32_1 = arith.constant 0 : i32
    return %c0_i32, %c0_i32_0 : i32, i32
  }
  func.func @transform_17(%arg0: i32) -> (i32, i32) {
    %c0_i32 = arith.constant 0 : i32
    %c0_i32_0 = arith.constant 0 : i32
    return %arg0, %c0_i32 : i32, i32
  }
}

</mosaic_0001>

<llo_original>
// kernel: tpu_custom_call.1
$region0: #{tpu_custom_call.1}
  #allocation0 [shape = 'u32[]', space=smem, size = 0x4, offset = 0x4, fixed_abs, tag = 'smem constant byte address 0x4 - core index']
  #allocation1 [shape = 'u32[144,128]{1,0:T(1,128)}', space=vmem, size = 0x12000, scoped, tag = 'internal scratch']
  %s0 = inlined_call_operand.hbm [shape: bf16[32,32], index: 0, kind: input, shape index: {}]
  %s1 = inlined_call_operand.hbm [shape: bf16[32,768], index: 1, kind: input, shape index: {}]
  %s2 = inlined_call_operand.vmem [shape: f32[1,768], index: 2, kind: input, shape index: {}]
  %s3 = inlined_call_operand.hbm [shape: bf16[640,256], index: 3, kind: input, shape index: {}]
  %s4 = inlined_call_operand.vmem [shape: f32[1,256], index: 4, kind: input, shape index: {}]
  %s5 = inlined_call_operand.hbm [shape: bf16[256,128], index: 5, kind: input, shape index: {}]
  %s6 = inlined_call_operand.vmem [shape: f32[1,128], index: 6, kind: input, shape index: {}]
  %s7 = inlined_call_operand.hbm [shape: bf16[128,128], index: 7, kind: input, shape index: {}]
  %s8 = inlined_call_operand.vmem [shape: f32[1,128], index: 8, kind: input, shape index: {}]
  %s9 = inlined_call_operand.hbm [shape: bf16[128,128], index: 9, kind: input, shape index: {}]
  %s10 = inlined_call_operand.vmem [shape: f32[1,128], index: 10, kind: input, shape index: {}]
  %s11 = inlined_call_operand.hbm [shape: bf16[128,256], index: 11, kind: input, shape index: {}]
  %s12 = inlined_call_operand.vmem [shape: f32[1,256], index: 12, kind: input, shape index: {}]
  %s13 = inlined_call_operand.hbm [shape: bf16[256,640], index: 13, kind: input, shape index: {}]
  %s14 = inlined_call_operand.vmem [shape: f32[1,640], index: 14, kind: input, shape index: {}]
  %s15 = inlined_call_operand.hbm [shape: bf16[640,128], index: 15, kind: input, shape index: {}]
  %s16 = inlined_call_operand.vmem [shape: f32[1,128], index: 16, kind: input, shape index: {}]
  %s17 = inlined_call_operand.hbm [shape: f32[32,128], index: 17, kind: output, shape index: {}]
  %s18 = sld [smem:[#allocation0]]
  $region137: #{tpu_custom_call.1} parent=0
    _
  %s20 = ssub.s32 1, %s18
  %s21 = scalar_select 0, %s20, %s18
  $region1: #{tpu_custom_call.1} parent=0
    #allocation2 [shape = 'u8[8192]{0}', space=vmem, size = 0x2000, scoped, tag = 'input window, operand 0']
    #allocation3 [shape = 's32[2]{0}', space=sflag, size = 0x8, scoped, tag = 'scoped memory for tpu_custom_call.1']
    #allocation4 [shape = 's32[2]{0}', space=sflag, size = 0x8, scoped, tag = 'scoped memory for tpu_custom_call.1']
    #allocation5 [shape = 'u8[49152]{0}', space=vmem, size = 0xc000, scoped, tag = 'input window, operand 1, single buffered']
    #allocation6 [shape = 's32[1]{0}', space=sflag, size = 0x4, scoped, tag = 'scoped memory for tpu_custom_call.1']
    #allocation7 [shape = 'u8[327680]{0}', space=vmem, size = 0x50000, scoped, tag = 'input window, operand 3, single buffered']
    #allocation8 [shape = 'u8[65536]{0}', space=vmem, size = 0x10000, scoped, tag = 'input window, operand 5, single buffered']
    #allocation9 [shape = 's32[1]{0}', space=sflag, size = 0x4, scoped, tag = 'scoped memory for tpu_custom_call.1']
    #allocation10 [shape = 'u8[32768]{0}', space=vmem, size = 0x8000, scoped, tag = 'input window, operand 7, single buffered']
    #allocation11 [shape = 'u8[32768]{0}', space=vmem, size = 0x8000, scoped, tag = 'input window, operand 9, single buffered']
    #allocation12 [shape = 's32[1]{0}', space=sflag, size = 0x4, scoped, tag = 'scoped memory for tpu_custom_call.1']
    #allocation13 [shape = 'u8[65536]{0}', space=vmem, size = 0x10000, scoped, tag = 'input window, operand 11, single buffered']
    #allocation14 [shape = 'u8[327680]{0}', space=vmem, size = 0x50000, scoped, tag = 'input window, operand 13, single buffered']
    #allocation15 [shape = 's32[1]{0}', space=sflag, size = 0x4, scoped, tag = 'scoped memory for tpu_custom_call.1']
    #allocation16 [shape = 'u8[163840]{0}', space=vmem, size = 0x28000, scoped, tag = 'input window, operand 15, single buffered']
    #allocation17 [shape = 'u8[16384]{0}', space=vmem, size = 0x4000, scoped, tag = 'output window, operand 0']
    %22 = vsyncpa [#allocation3], 0
    %s23 = scalar_lea.sflag [#allocation3], 1
    %24 = vsyncpa %s23, 0
    %25 = vsyncpa [#allocation6], 0
    %26 = vsyncpa [#allocation9], 0
    %27 = vsyncpa [#allocation12], 0
    %28 = vsyncpa [#allocation15], 0
    %29 = vsyncpa [#allocation4], 0
    %s30 = scalar_lea.sflag [#allocation4], 1
    %31 = vsyncpa %s30, 0
    loop: start=0, step=1, limit=4
    $region2: #{tpu_custom_call.1} parent=1 // loop_pre_header
      _
    $region3: #{tpu_custom_call.1} parent=1 // loop_header
      %s33 = sphi 0, %s37
      %p34 = scmp.ge.s32.totalorder %s33, 4
      %s43 = sphi 0, %s45
      %s46 = sphi 0, %s43
      %s47 = sphi 0, %s46
      %s63 = sphi 0, %s47
      %s67 = sphi 0, %s67
      %s69 = sphi 0, %s67
      %s70 = sphi 0, %s69
      %s84 = sphi 0, %s70
      %s88 = sphi 0, %s88
      %s90 = sphi 0, %s88
      %s91 = sphi 0, %s90
      %s105 = sphi 0, %s91
      %s109 = sphi 0, %s109
      %s111 = sphi 0, %s109
      %s112 = sphi 0, %s111
      %s126 = sphi 0, %s112
      %s130 = sphi 0, %s130
      %s132 = sphi 0, %s130
      %s133 = sphi 0, %s132
      %s147 = sphi 0, %s133
      %s151 = sphi 0, %s151
      %s153 = sphi 0, %s151
      %s154 = sphi 0, %s153
      %s168 = sphi 0, %s154
      %s172 = sphi 0, %s172
      %s174 = sphi 0, %s172
      %s175 = sphi 0, %s174
      %s189 = sphi 0, %s175
      %s193 = sphi 0, %s193
      %s195 = sphi 0, %s193
      %s196 = sphi 0, %s195
      %s210 = sphi 0, %s196
      %s214 = sphi 0, %s214
      %s216 = sphi 0, %s214
      %s217 = sphi 0, %s216
      %s231 = sphi 0, %s217
      %s235 = sphi 0, %s235
      %s237 = sphi 0, %s235
      %s238 = sphi 0, %s237
      %s252 = sphi 0, %s238
      %s256 = sphi 0, %s256
      %s258 = sphi 0, %s256
      %s259 = sphi 0, %s258
      %s273 = sphi 0, %s259
      %s277 = sphi 0, %s277
      %s279 = sphi 0, %s277
      %s280 = sphi 0, %s279
      %s294 = sphi 0, %s280
      %s298 = sphi 0, %s298
      %s300 = sphi 0, %s298
      %s301 = sphi 0, %s300
      %s315 = sphi 0, %s301
      %s319 = sphi 0, %s319
      %s321 = sphi 0, %s319
      %s322 = sphi 0, %s321
      %s336 = sphi 0, %s322
      %s340 = sphi 0, %s340
      %s342 = sphi 0, %s340
      %s343 = sphi 0, %s342
      %s357 = sphi 0, %s343
      %s361 = sphi 0, %s361
      %s363 = sphi 0, %s361
      %s364 = sphi 0, %s363
      %s378 = sphi 0, %s364
      %s382 = sphi 0, %s382
      %s384 = sphi 0, %s382
      %s385 = sphi 0, %s384
      %s399 = sphi 0, %s385
      %s405 = sphi 0, %s407
      %s408 = sphi 0, %s405
      %s409 = sphi 0, %s408
      %s425 = sphi 0, %s409
    $region4: #{tpu_custom_call.1} parent=1 // loop_header_branch
      %36 = sbr.rel (%p34) target = $region8
    $region5: #{tpu_custom_call.1} parent=1 // loop_body
      %s38 = ssub.s32 %s33, 1
      %s39 = ssub.s32 %s33, 2
      %s40 = sadd.s32 %s33, 1
      %s41 = ssub.s32 %s33, %s40
      %p42 = scmp.eq.s32.totalorder %s41, 0
      %s44 = sadd.s32 %s43, 1
      %s45 = scalar_select %p42, %s43, %s44
      %p48 = pneg %p42
      %p49 = scmp.eq.s32.totalorder %s33, 1
      %p50 = por %p48, %p49
      %p51 = scmp.ne.s32.totalorder %s43, %s46
      %p52 = scmp.eq.s32.totalorder %s33, 0
      %p53 = por %p51, %p52
      %p54 = scmp.ne.s32.totalorder %s43, %s46
      %p55 = scmp.eq.s32.totalorder %s38, 1
      %p56 = por %p54, %p55
      %p57 = scmp.ne.s32.totalorder %s46, %s47
      %p58 = scmp.eq.s32.totalorder %s38, 0
      %p59 = por %p57, %p58
      %p60 = scmp.ne.s32.totalorder %s46, %s47
      %p61 = scmp.eq.s32.totalorder %s39, 1
      %p62 = por %p60, %p61
      %p64 = scmp.ne.s32.totalorder %s47, %s63
      %p65 = scmp.eq.s32.totalorder %s39, 0
      %p66 = por %p64, %p65
      %s68 = sadd.s32 %s67, 1
      %p71 = scmp.eq.s32.totalorder %s33, 1
      %p72 = scmp.ne.s32.totalorder %s67, %s69
      %p73 = scmp.eq.s32.totalorder %s33, 0
      %p74 = por %p72, %p73
      %p75 = scmp.ne.s32.totalorder %s67, %s69
      %p76 = scmp.eq.s32.totalorder %s38, 1
      %p77 = por %p75, %p76
      %p78 = scmp.ne.s32.totalorder %s69, %s70
      %p79 = scmp.eq.s32.totalorder %s38, 0
      %p80 = por %p78, %p79
      %p81 = scmp.ne.s32.totalorder %s69, %s70
      %p82 = scmp.eq.s32.totalorder %s39, 1
      %p83 = por %p81, %p82
      %p85 = scmp.ne.s32.totalorder %s70, %s84
      %p86 = scmp.eq.s32.totalorder %s39, 0
      %p87 = por %p85, %p86
      %s89 = sadd.s32 %s88, 1
      %p92 = scmp.eq.s32.totalorder %s33, 1
      %p93 = scmp.ne.s32.totalorder %s88, %s90
      %p94 = scmp.eq.s32.totalorder %s33, 0
      %p95 = por %p93, %p94
      %p96 = scmp.ne.s32.totalorder %s88, %s90
      %p97 = scmp.eq.s32.totalorder %s38, 1
      %p98 = por %p96, %p97
      %p99 = scmp.ne.s32.totalorder %s90, %s91
      %p100 = scmp.eq.s32.totalorder %s38, 0
      %p101 = por %p99, %p100
      %p102 = scmp.ne.s32.totalorder %s90, %s91
      %p103 = scmp.eq.s32.totalorder %s39, 1
      %p104 = por %p102, %p103
      %p106 = scmp.ne.s32.totalorder %s91, %s105
      %p107 = scmp.eq.s32.totalorder %s39, 0
      %p108 = por %p106, %p107
      %s110 = sadd.s32 %s109, 1
      %p113 = scmp.eq.s32.totalorder %s33, 1
      %p114 = scmp.ne.s32.totalorder %s109, %s111
      %p115 = scmp.eq.s32.totalorder %s33, 0
      %p116 = por %p114, %p115
      %p117 = scmp.ne.s32.totalorder %s109, %s111
      %p118 = scmp.eq.s32.totalorder %s38, 1
      %p119 = por %p117, %p118
      %p120 = scmp.ne.s32.totalorder %s111, %s112
      %p121 = scmp.eq.s32.totalorder %s38, 0
      %p122 = por %p120, %p121
      %p123 = scmp.ne.s32.totalorder %s111, %s112
      %p124 = scmp.eq.s32.totalorder %s39, 1
      %p125 = por %p123, %p124
      %p127 = scmp.ne.s32.totalorder %s112, %s126
      %p128 = scmp.eq.s32.totalorder %s39, 0
      %p129 = por %p127, %p128
      %s131 = sadd.s32 %s130, 1
      %p134 = scmp.eq.s32.totalorder %s33, 1
      %p135 = scmp.ne.s32.totalorder %s130, %s132
      %p136 = scmp.eq.s32.totalorder %s33, 0
      %p137 = por %p135, %p136
      %p138 = scmp.ne.s32.totalorder %s130, %s132
      %p139 = scmp.eq.s32.totalorder %s38, 1
      %p140 = por %p138, %p139
      %p141 = scmp.ne.s32.totalorder %s132, %s133
      %p142 = scmp.eq.s32.totalorder %s38, 0
      %p143 = por %p141, %p142
      %p144 = scmp.ne.s32.totalorder %s132, %s133
      %p145 = scmp.eq.s32.totalorder %s39, 1
      %p146 = por %p144, %p145
      %p148 = scmp.ne.s32.totalorder %s133, %s147
      %p149 = scmp.eq.s32.totalorder %s39, 0
      %p150 = por %p148, %p149
      %s152 = sadd.s32 %s151, 1
      %p155 = scmp.eq.s32.totalorder %s33, 1
      %p156 = scmp.ne.s32.totalorder %s151, %s153
      %p157 = scmp.eq.s32.totalorder %s33, 0
      %p158 = por %p156, %p157
      %p159 = scmp.ne.s32.totalorder %s151, %s153
      %p160 = scmp.eq.s32.totalorder %s38, 1
      %p161 = por %p159, %p160
      %p162 = scmp.ne.s32.totalorder %s153, %s154
      %p163 = scmp.eq.s32.totalorder %s38, 0
      %p164 = por %p162, %p163
      %p165 = scmp.ne.s32.totalorder %s153, %s154
      %p166 = scmp.eq.s32.totalorder %s39, 1
      %p167 = por %p165, %p166
      %p169 = scmp.ne.s32.totalorder %s154, %s168
      %p170 = scmp.eq.s32.totalorder %s39, 0
      %p171 = por %p169, %p170
      %s173 = sadd.s32 %s172, 1
      %p176 = scmp.eq.s32.totalorder %s33, 1
      %p177 = scmp.ne.s32.totalorder %s172, %s174
      %p178 = scmp.eq.s32.totalorder %s33, 0
      %p179 = por %p177, %p178
      %p180 = scmp.ne.s32.totalorder %s172, %s174
      %p181 = scmp.eq.s32.totalorder %s38, 1
      %p182 = por %p180, %p181
      %p183 = scmp.ne.s32.totalorder %s174, %s175
      %p184 = scmp.eq.s32.totalorder %s38, 0
      %p185 = por %p183, %p184
      %p186 = scmp.ne.s32.totalorder %s174, %s175
      %p187 = scmp.eq.s32.totalorder %s39, 1
      %p188 = por %p186, %p187
      %p190 = scmp.ne.s32.totalorder %s175, %s189
      %p191 = scmp.eq.s32.totalorder %s39, 0
      %p192 = por %p190, %p191
      %s194 = sadd.s32 %s193, 1
      %p197 = scmp.eq.s32.totalorder %s33, 1
      %p198 = scmp.ne.s32.totalorder %s193, %s195
      %p199 = scmp.eq.s32.totalorder %s33, 0
      %p200 = por %p198, %p199
      %p201 = scmp.ne.s32.totalorder %s193, %s195
      %p202 = scmp.eq.s32.totalorder %s38, 1
      %p203 = por %p201, %p202
      %p204 = scmp.ne.s32.totalorder %s195, %s196
      %p205 = scmp.eq.s32.totalorder %s38, 0
      %p206 = por %p204, %p205
      %p207 = scmp.ne.s32.totalorder %s195, %s196
      %p208 = scmp.eq.s32.totalorder %s39, 1
      %p209 = por %p207, %p208
      %p211 = scmp.ne.s32.totalorder %s196, %s210
      %p212 = scmp.eq.s32.totalorder %s39, 0
      %p213 = por %p211, %p212
      %s215 = sadd.s32 %s214, 1
      %p218 = scmp.eq.s32.totalorder %s33, 1
      %p219 = scmp.ne.s32.totalorder %s214, %s216
      %p220 = scmp.eq.s32.totalorder %s33, 0
      %p221 = por %p219, %p220
      %p222 = scmp.ne.s32.totalorder %s214, %s216
      %p223 = scmp.eq.s32.totalorder %s38, 1
      %p224 = por %p222, %p223
      %p225 = scmp.ne.s32.totalorder %s216, %s217
      %p226 = scmp.eq.s32.totalorder %s38, 0
      %p227 = por %p225, %p226
      %p228 = scmp.ne.s32.totalorder %s216, %s217
      %p229 = scmp.eq.s32.totalorder %s39, 1
      %p230 = por %p228, %p229
      %p232 = scmp.ne.s32.totalorder %s217, %s231
      %p233 = scmp.eq.s32.totalorder %s39, 0
      %p234 = por %p232, %p233
      %s236 = sadd.s32 %s235, 1
      %p239 = scmp.eq.s32.totalorder %s33, 1
      %p240 = scmp.ne.s32.totalorder %s235, %s237
      %p241 = scmp.eq.s32.totalorder %s33, 0
      %p242 = por %p240, %p241
      %p243 = scmp.ne.s32.totalorder %s235, %s237
      %p244 = scmp.eq.s32.totalorder %s38, 1
      %p245 = por %p243, %p244
      %p246 = scmp.ne.s32.totalorder %s237, %s238
      %p247 = scmp.eq.s32.totalorder %s38, 0
      %p248 = por %p246, %p247
      %p249 = scmp.ne.s32.totalorder %s237, %s238
      %p250 = scmp.eq.s32.totalorder %s39, 1
      %p251 = por %p249, %p250
      %p253 = scmp.ne.s32.totalorder %s238, %s252
      %p254 = scmp.eq.s32.totalorder %s39, 0
      %p255 = por %p253, %p254
      %s257 = sadd.s32 %s256, 1
      %p260 = scmp.eq.s32.totalorder %s33, 1
      %p261 = scmp.ne.s32.totalorder %s256, %s258
      %p262 = scmp.eq.s32.totalorder %s33, 0
      %p263 = por %p261, %p262
      %p264 = scmp.ne.s32.totalorder %s256, %s258
      %p265 = scmp.eq.s32.totalorder %s38, 1
      %p266 = por %p264, %p265
      %p267 = scmp.ne.s32.totalorder %s258, %s259
      %p268 = scmp.eq.s32.totalorder %s38, 0
      %p269 = por %p267, %p268
      %p270 = scmp.ne.s32.totalorder %s258, %s259
      %p271 = scmp.eq.s32.totalorder %s39, 1
      %p272 = por %p270, %p271
      %p274 = scmp.ne.s32.totalorder %s259, %s273
      %p275 = scmp.eq.s32.totalorder %s39, 0
      %p276 = por %p274, %p275
      %s278 = sadd.s32 %s277, 1
      %p281 = scmp.eq.s32.totalorder %s33, 1
      %p282 = scmp.ne.s32.totalorder %s277, %s279
      %p283 = scmp.eq.s32.totalorder %s33, 0
      %p284 = por %p282, %p283
      %p285 = scmp.ne.s32.totalorder %s277, %s279
      %p286 = scmp.eq.s32.totalorder %s38, 1
      %p287 = por %p285, %p286
      %p288 = scmp.ne.s32.totalorder %s279, %s280
      %p289 = scmp.eq.s32.totalorder %s38, 0
      %p290 = por %p288, %p289
      %p291 = scmp.ne.s32.totalorder %s279, %s280
      %p292 = scmp.eq.s32.totalorder %s39, 1
      %p293 = por %p291, %p292
      %p295 = scmp.ne.s32.totalorder %s280, %s294
      %p296 = scmp.eq.s32.totalorder %s39, 0
      %p297 = por %p295, %p296
      %s299 = sadd.s32 %s298, 1
      %p302 = scmp.eq.s32.totalorder %s33, 1
      %p303 = scmp.ne.s32.totalorder %s298, %s300
      %p304 = scmp.eq.s32.totalorder %s33, 0
      %p305 = por %p303, %p304
      %p306 = scmp.ne.s32.totalorder %s298, %s300
      %p307 = scmp.eq.s32.totalorder %s38, 1
      %p308 = por %p306, %p307
      %p309 = scmp.ne.s32.totalorder %s300, %s301
      %p310 = scmp.eq.s32.totalorder %s38, 0
      %p311 = por %p309, %p310
      %p312 = scmp.ne.s32.totalorder %s300, %s301
      %p313 = scmp.eq.s32.totalorder %s39, 1
      %p314 = por %p312, %p313
      %p316 = scmp.ne.s32.totalorder %s301, %s315
      %p317 = scmp.eq.s32.totalorder %s39, 0
      %p318 = por %p316, %p317
      %s320 = sadd.s32 %s319, 1
      %p323 = scmp.eq.s32.totalorder %s33, 1
      %p324 = scmp.ne.s32.totalorder %s319, %s321
      %p325 = scmp.eq.s32.totalorder %s33, 0
      %p326 = por %p324, %p325
      %p327 = scmp.ne.s32.totalorder %s319, %s321
      %p328 = scmp.eq.s32.totalorder %s38, 1
      %p329 = por %p327, %p328
      %p330 = scmp.ne.s32.totalorder %s321, %s322
      %p331 = scmp.eq.s32.totalorder %s38, 0
      %p332 = por %p330, %p331
      %p333 = scmp.ne.s32.totalorder %s321, %s322
      %p334 = scmp.eq.s32.totalorder %s39, 1
      %p335 = por %p333, %p334
      %p337 = scmp.ne.s32.totalorder %s322, %s336
      %p338 = scmp.eq.s32.totalorder %s39, 0
      %p339 = por %p337, %p338
      %s341 = sadd.s32 %s340, 1
      %p344 = scmp.eq.s32.totalorder %s33, 1
      %p345 = scmp.ne.s32.totalorder %s340, %s342
      %p346 = scmp.eq.s32.totalorder %s33, 0
      %p347 = por %p345, %p346
      %p348 = scmp.ne.s32.totalorder %s340, %s342
      %p349 = scmp.eq.s32.totalorder %s38, 1
      %p350 = por %p348, %p349
      %p351 = scmp.ne.s32.totalorder %s342, %s343
      %p352 = scmp.eq.s32.totalorder %s38, 0
      %p353 = por %p351, %p352
      %p354 = scmp.ne.s32.totalorder %s342, %s343
      %p355 = scmp.eq.s32.totalorder %s39, 1
      %p356 = por %p354, %p355
      %p358 = scmp.ne.s32.totalorder %s343, %s357
      %p359 = scmp.eq.s32.totalorder %s39, 0
      %p360 = por %p358, %p359
      %s362 = sadd.s32 %s361, 1
      %p365 = scmp.eq.s32.totalorder %s33, 1
      %p366 = scmp.ne.s32.totalorder %s361, %s363
      %p367 = scmp.eq.s32.totalorder %s33, 0
      %p368 = por %p366, %p367
      %p369 = scmp.ne.s32.totalorder %s361, %s363
      %p370 = scmp.eq.s32.totalorder %s38, 1
      %p371 = por %p369, %p370
      %p372 = scmp.ne.s32.totalorder %s363, %s364
      %p373 = scmp.eq.s32.totalorder %s38, 0
      %p374 = por %p372, %p373
      %p375 = scmp.ne.s32.totalorder %s363, %s364
      %p376 = scmp.eq.s32.totalorder %s39, 1
      %p377 = por %p375, %p376
      %p379 = scmp.ne.s32.totalorder %s364, %s378
      %p380 = scmp.eq.s32.totalorder %s39, 0
      %p381 = por %p379, %p380
      %s383 = sadd.s32 %s382, 1
      %p386 = scmp.eq.s32.totalorder %s33, 1
      %p387 = scmp.ne.s32.totalorder %s382, %s384
      %p388 = scmp.eq.s32.totalorder %s33, 0
      %p389 = por %p387, %p388
      %p390 = scmp.ne.s32.totalorder %s382, %s384
      %p391 = scmp.eq.s32.totalorder %s38, 1
      %p392 = por %p390, %p391
      %p393 = scmp.ne.s32.totalorder %s384, %s385
      %p394 = scmp.eq.s32.totalorder %s38, 0
      %p395 = por %p393, %p394
      %p396 = scmp.ne.s32.totalorder %s384, %s385
      %p397 = scmp.eq.s32.totalorder %s39, 1
      %p398 = por %p396, %p397
      %p400 = scmp.ne.s32.totalorder %s385, %s399
      %p401 = scmp.eq.s32.totalorder %s39, 0
      %p402 = por %p400, %p401
      %s403 = ssub.s32 %s33, %s40
      %p404 = scmp.eq.s32.totalorder %s403, 0
      %s406 = sadd.s32 %s405, 1
      %s407 = scalar_select %p404, %s405, %s406
      %p410 = pneg %p404
      %p411 = scmp.eq.s32.totalorder %s33, 1
      %p412 = por %p410, %p411
      %p413 = scmp.ne.s32.totalorder %s405, %s408
      %p414 = scmp.eq.s32.totalorder %s33, 0
      %p415 = por %p413, %p414
      %p416 = scmp.ne.s32.totalorder %s405, %s408
      %p417 = scmp.eq.s32.totalorder %s38, 1
      %p418 = por %p416, %p417
      %p419 = scmp.ne.s32.totalorder %s408, %s409
      %p420 = scmp.eq.s32.totalorder %s38, 0
      %p421 = por %p419, %p420
      %p422 = scmp.ne.s32.totalorder %s408, %s409
      %p423 = scmp.eq.s32.totalorder %s39, 1
      %p424 = por %p422, %p423
      %p426 = scmp.ne.s32.totalorder %s409, %s425
      %p427 = scmp.eq.s32.totalorder %s39, 0
      %p428 = por %p426, %p427
      %p429 = scmp.le.s32.totalorder 1, %s33
      %p430 = scmp.lt.s32.totalorder %s33, 3
      %p431 = pnand %p429, %p430
      %p432 = pneg %p431
      // Predicated region
      $region9: #{tpu_custom_call.1} parent=5 // pred_check
        _
      $region10: #{tpu_custom_call.1} parent=5 // pred_check_branch
        %434 = sbr.rel (%p431) target = $region12
      $region11: #{tpu_custom_call.1} parent=5 // pred_region
        %s435 = ssub.s32 %s33, 1
        // Predicated region
        $region13: #{tpu_custom_call.1} parent=11 // pred_check
          %p436 = pneg %p80
        $region14: #{tpu_custom_call.1} parent=11 // pred_check_branch
          %438 = sbr.rel (%p436) target = $region16
        $region15: #{tpu_custom_call.1} parent=11 // pred_region
          %s440 = ssub.s32 1536, 1536
          %441 = vsyncadd [#allocation6], %s440
          %s442 = sshll.u32 [#allocation5], 4
          %s443 = int_to_ptr.vmem [resolvable:$true] %s442
          %448 = dma.hbm_to_vmem [thread:$0]  %s1, 1536, %s443, [#allocation6], 384, 384, 24
        $region16: #{tpu_custom_call.1} parent=11 // pred_fallthru
          _
        // Predicated region
        $region17: #{tpu_custom_call.1} parent=11 // pred_check
          %p449 = pneg %p101
        $region18: #{tpu_custom_call.1} parent=11 // pred_check_branch
          %451 = sbr.rel (%p449) target = $region20
        $region19: #{tpu_custom_call.1} parent=11 // pred_region
          _
        $region20: #{tpu_custom_call.1} parent=11 // pred_fallthru
          _
        // Predicated region
        $region21: #{tpu_custom_call.1} parent=11 // pred_check
          %p452 = pneg %p122
        $region22: #{tpu_custom_call.1} parent=11 // pred_check_branch
          %454 = sbr.rel (%p452) target = $region24
        $region23: #{tpu_custom_call.1} parent=11 // pred_region
          %s456 = ssub.s32 10240, 10240
          %457 = vsyncadd [#allocation6], %s456
          %s458 = sshll.u32 [#allocation7], 4
          %s459 = int_to_ptr.vmem [resolvable:$true] %s458
          %464 = dma.hbm_to_vmem [thread:$0]  %s3, 10240, %s459, [#allocation6], 128, 128, 8
        $region24: #{tpu_custom_call.1} parent=11 // pred_fallthru
          _
        // Predicated region
        $region25: #{tpu_custom_call.1} parent=11 // pred_check
          %p465 = pneg %p143
        $region26: #{tpu_custom_call.1} parent=11 // pred_check_branch
          %467 = sbr.rel (%p465) target = $region28
        $region27: #{tpu_custom_call.1} parent=11 // pred_region
          _
        $region28: #{tpu_custom_call.1} parent=11 // pred_fallthru
          _
        // Predicated region
        $region29: #{tpu_custom_call.1} parent=11 // pred_check
          %p468 = pneg %p164
        $region30: #{tpu_custom_call.1} parent=11 // pred_check_branch
          %470 = sbr.rel (%p468) target = $region32
        $region31: #{tpu_custom_call.1} parent=11 // pred_region
          %s472 = ssub.s32 2048, 2048
          %473 = vsyncadd [#allocation9], %s472
          %s474 = sshll.u32 [#allocation8], 4
          %s475 = int_to_ptr.vmem [resolvable:$true] %s474
          %480 = dma.hbm_to_vmem [thread:$0]  %s5, 2048, %s475, [#allocation9], 64, 64, 4
        $region32: #{tpu_custom_call.1} parent=11 // pred_fallthru
          _
        // Predicated region
        $region33: #{tpu_custom_call.1} parent=11 // pred_check
          %p481 = pneg %p185
        $region34: #{tpu_custom_call.1} parent=11 // pred_check_branch
          %483 = sbr.rel (%p481) target = $region36
        $region35: #{tpu_custom_call.1} parent=11 // pred_region
          _
        $region36: #{tpu_custom_call.1} parent=11 // pred_fallthru
          _
        // Predicated region
        $region37: #{tpu_custom_call.1} parent=11 // pred_check
          %p484 = pneg %p206
        $region38: #{tpu_custom_call.1} parent=11 // pred_check_branch
          %486 = sbr.rel (%p484) target = $region40
        $region39: #{tpu_custom_call.1} parent=11 // pred_region
          %s488 = ssub.s32 1024, 1024
          %489 = vsyncadd [#allocation9], %s488
          %s490 = sshll.u32 [#allocation10], 4
          %s491 = int_to_ptr.vmem [resolvable:$true] %s490
          %496 = dma.hbm_to_vmem [thread:$0]  %s7, 1024, %s491, [#allocation9], 64, 64, 4
        $region40: #{tpu_custom_call.1} parent=11 // pred_fallthru
          _
        // Predicated region
        $region41: #{tpu_custom_call.1} parent=11 // pred_check
          %p497 = pneg %p227
        $region42: #{tpu_custom_call.1} parent=11 // pred_check_branch
          %499 = sbr.rel (%p497) target = $region44
        $region43: #{tpu_custom_call.1} parent=11 // pred_region
          _
        $region44: #{tpu_custom_call.1} parent=11 // pred_fallthru
          _
        // Predicated region
        $region45: #{tpu_custom_call.1} parent=11 // pred_check
          %p500 = pneg %p248
        $region46: #{tpu_custom_call.1} parent=11 // pred_check_branch
          %502 = sbr.rel (%p500) target = $region48
        $region47: #{tpu_custom_call.1} parent=11 // pred_region
          %s504 = ssub.s32 1024, 1024
          %505 = vsyncadd [#allocation12], %s504
          %s506 = sshll.u32 [#allocation11], 4
          %s507 = int_to_ptr.vmem [resolvable:$true] %s506
          %512 = dma.hbm_to_vmem [thread:$0]  %s9, 1024, %s507, [#allocation12], 64, 64, 4
        $region48: #{tpu_custom_call.1} parent=11 // pred_fallthru
          _
        // Predicated region
        $region49: #{tpu_custom_call.1} parent=11 // pred_check
          %p513 = pneg %p269
        $region50: #{tpu_custom_call.1} parent=11 // pred_check_branch
          %515 = sbr.rel (%p513) target = $region52
        $region51: #{tpu_custom_call.1} parent=11 // pred_region
          _
        $region52: #{tpu_custom_call.1} parent=11 // pred_fallthru
          _
        // Predicated region
        $region53: #{tpu_custom_call.1} parent=11 // pred_check
          %p516 = pneg %p290
        $region54: #{tpu_custom_call.1} parent=11 // pred_check_branch
          %518 = sbr.rel (%p516) target = $region56
        $region55: #{tpu_custom_call.1} parent=11 // pred_region
          %s520 = ssub.s32 2048, 2048
          %521 = vsyncadd [#allocation12], %s520
          %s522 = sshll.u32 [#allocation13], 4
          %s523 = int_to_ptr.vmem [resolvable:$true] %s522
          %528 = dma.hbm_to_vmem [thread:$0]  %s11, 2048, %s523, [#allocation12], 128, 128, 8
        $region56: #{tpu_custom_call.1} parent=11 // pred_fallthru
          _
        // Predicated region
        $region57: #{tpu_custom_call.1} parent=11 // pred_check
          %p529 = pneg %p311
        $region58: #{tpu_custom_call.1} parent=11 // pred_check_branch
          %531 = sbr.rel (%p529) target = $region60
        $region59: #{tpu_custom_call.1} parent=11 // pred_region
          _
        $region60: #{tpu_custom_call.1} parent=11 // pred_fallthru
          _
        // Predicated region
        $region61: #{tpu_custom_call.1} parent=11 // pred_check
          %p532 = pneg %p332
        $region62: #{tpu_custom_call.1} parent=11 // pred_check_branch
          %534 = sbr.rel (%p532) target = $region64
        $region63: #{tpu_custom_call.1} parent=11 // pred_region
          %s536 = ssub.s32 10240, 10240
          %537 = vsyncadd [#allocation15], %s536
          %s538 = sshll.u32 [#allocation14], 4
          %s539 = int_to_ptr.vmem [resolvable:$true] %s538
          %544 = dma.hbm_to_vmem [thread:$0]  %s13, 10240, %s539, [#allocation15], 320, 320, 20
        $region64: #{tpu_custom_call.1} parent=11 // pred_fallthru
          _
        // Predicated region
        $region65: #{tpu_custom_call.1} parent=11 // pred_check
          %p545 = pneg %p353
        $region66: #{tpu_custom_call.1} parent=11 // pred_check_branch
          %547 = sbr.rel (%p545) target = $region68
        $region67: #{tpu_custom_call.1} parent=11 // pred_region
          _
        $region68: #{tpu_custom_call.1} parent=11 // pred_fallthru
          _
        // Predicated region
        $region69: #{tpu_custom_call.1} parent=11 // pred_check
          %p548 = pneg %p374
        $region70: #{tpu_custom_call.1} parent=11 // pred_check_branch
          %550 = sbr.rel (%p548) target = $region72
        $region71: #{tpu_custom_call.1} parent=11 // pred_region
          %s552 = ssub.s32 5120, 5120
          %553 = vsyncadd [#allocation15], %s552
          %s554 = sshll.u32 [#allocation16], 4
          %s555 = int_to_ptr.vmem [resolvable:$true] %s554
          %560 = dma.hbm_to_vmem [thread:$0]  %s15, 5120, %s555, [#allocation15], 64, 64, 4
        $region72: #{tpu_custom_call.1} parent=11 // pred_fallthru
          _
        // Predicated region
        $region73: #{tpu_custom_call.1} parent=11 // pred_check
          %p561 = pneg %p395
        $region74: #{tpu_custom_call.1} parent=11 // pred_check_branch
          %563 = sbr.rel (%p561) target = $region76
        $region75: #{tpu_custom_call.1} parent=11 // pred_region
          _
        $region76: #{tpu_custom_call.1} parent=11 // pred_fallthru
          _
      $region12: #{tpu_custom_call.1} parent=5 // pred_fallthru
        _
      %p564 = scmp.lt.s32.totalorder %s33, 2
      // Predicated region
      $region77: #{tpu_custom_call.1} parent=5 // pred_check
        %p565 = pneg %p564
      $region78: #{tpu_custom_call.1} parent=5 // pred_check_branch
        %567 = sbr.rel (%p565) target = $region80
      $region79: #{tpu_custom_call.1} parent=5 // pred_region
        // Predicated region
        $region81: #{tpu_custom_call.1} parent=79 // pred_check
          %p568 = pneg %p53
        $region82: #{tpu_custom_call.1} parent=79 // pred_check_branch
          %570 = sbr.rel (%p568) target = $region84
        $region83: #{tpu_custom_call.1} parent=79 // pred_region
          %s571 = sand.u32 %s43, 1
          %s572 = scalar_lea.sflag [#allocation3], %s571
          %s573 = sand.u32 %s43, 1
          %s574 = smul.addr %s573, 8
          %s575 = scalar_lea.vmem [#allocation2], %s574
          %s576 = smul.u32 2, %s33
          %s578 = ssub.s32 128, 128
          %579 = vsyncadd %s572, %s578
          %s580 = smul.addr %s576, 64
          %s581 = scalar_lea.hbm %s0, %s580
          %s582 = sshll.u32 %s575, 4
          %s583 = int_to_ptr.vmem [resolvable:$true] %s582
          %588 = dma.hbm_to_vmem [thread:$0]  %s581, 128, %s583, %s572, 64, 64, 4
        $region84: #{tpu_custom_call.1} parent=79 // pred_fallthru
          _
      $region80: #{tpu_custom_call.1} parent=5 // pred_fallthru
        _
      %p589 = scmp.le.s32.totalorder 1, %s33
      %p590 = scmp.lt.s32.totalorder %s33, 3
      %p591 = pnand %p589, %p590
      %p592 = pneg %p591
      // Predicated region
      $region85: #{tpu_custom_call.1} parent=5 // pred_check
        _
      $region86: #{tpu_custom_call.1} parent=5 // pred_check_branch
        %594 = sbr.rel (%p591) target = $region88
      $region87: #{tpu_custom_call.1} parent=5 // pred_region
        %s595 = ssub.s32 %s33, 1
        %s596 = sand.u32 %s46, 1
        %s597 = scalar_lea.sflag [#allocation3], %s596
        %s598 = sand.u32 %s46, 1
        %s599 = smul.addr %s598, 8
        %s600 = scalar_lea.vmem [#allocation2], %s599
        // Predicated region
        $region89: #{tpu_custom_call.1} parent=87 // pred_check
          %p601 = pneg %p59
        $region90: #{tpu_custom_call.1} parent=87 // pred_check_branch
          %603 = sbr.rel (%p601) target = $region92
        $region91: #{tpu_custom_call.1} parent=87 // pred_region
          %604 = dma.done %s597, 128
        $region92: #{tpu_custom_call.1} parent=87 // pred_fallthru
          _
        // Predicated region
        $region93: #{tpu_custom_call.1} parent=87 // pred_check
          %p605 = pneg %p80
        $region94: #{tpu_custom_call.1} parent=87 // pred_check_branch
          %607 = sbr.rel (%p605) target = $region96
        $region95: #{tpu_custom_call.1} parent=87 // pred_region
          %608 = dma.done [#allocation6], 1536
        $region96: #{tpu_custom_call.1} parent=87 // pred_fallthru
          _
        // Predicated region
        $region97: #{tpu_custom_call.1} parent=87 // pred_check
          %p609 = pneg %p122
        $region98: #{tpu_custom_call.1} parent=87 // pred_check_branch
          %611 = sbr.rel (%p609) target = $region100
        $region99: #{tpu_custom_call.1} parent=87 // pred_region
          %612 = dma.done [#allocation6], 10240
        $region100: #{tpu_custom_call.1} parent=87 // pred_fallthru
          _
        // Predicated region
        $region101: #{tpu_custom_call.1} parent=87 // pred_check
          %p613 = pneg %p164
        $region102: #{tpu_custom_call.1} parent=87 // pred_check_branch
          %615 = sbr.rel (%p613) target = $region104
        $region103: #{tpu_custom_call.1} parent=87 // pred_region
          %616 = dma.done [#allocation9], 2048
        $region104: #{tpu_custom_call.1} parent=87 // pred_fallthru
          _
        // Predicated region
        $region105: #{tpu_custom_call.1} parent=87 // pred_check
          %p617 = pneg %p206
        $region106: #{tpu_custom_call.1} parent=87 // pred_check_branch
          %619 = sbr.rel (%p617) target = $region108
        $region107: #{tpu_custom_call.1} parent=87 // pred_region
          %620 = dma.done [#allocation9], 1024
        $region108: #{tpu_custom_call.1} parent=87 // pred_fallthru
          _
        // Predicated region
        $region109: #{tpu_custom_call.1} parent=87 // pred_check
          %p621 = pneg %p248
        $region110: #{tpu_custom_call.1} parent=87 // pred_check_branch
          %623 = sbr.rel (%p621) target = $region112
        $region111: #{tpu_custom_call.1} parent=87 // pred_region
          %624 = dma.done [#allocation12], 1024
        $region112: #{tpu_custom_call.1} parent=87 // pred_fallthru
          _
        // Predicated region
        $region113: #{tpu_custom_call.1} parent=87 // pred_check
          %p625 = pneg %p290
        $region114: #{tpu_custom_call.1} parent=87 // pred_check_branch
          %627 = sbr.rel (%p625) target = $region116
        $region115: #{tpu_custom_call.1} parent=87 // pred_region
          %628 = dma.done [#allocation12], 2048
        $region116: #{tpu_custom_call.1} parent=87 // pred_fallthru
          _
        // Predicated region
        $region117: #{tpu_custom_call.1} parent=87 // pred_check
          %p629 = pneg %p332
        $region118: #{tpu_custom_call.1} parent=87 // pred_check_branch
          %631 = sbr.rel (%p629) target = $region120
        $region119: #{tpu_custom_call.1} parent=87 // pred_region
          %632 = dma.done [#allocation15], 10240
        $region120: #{tpu_custom_call.1} parent=87 // pred_fallthru
          _
        // Predicated region
        $region121: #{tpu_custom_call.1} parent=87 // pred_check
          %p633 = pneg %p374
        $region122: #{tpu_custom_call.1} parent=87 // pred_check_branch
          %635 = sbr.rel (%p633) target = $region124
        $region123: #{tpu_custom_call.1} parent=87 // pred_region
          %636 = dma.done [#allocation15], 5120
        $region124: #{tpu_custom_call.1} parent=87 // pred_fallthru
          _
        %s637 = sand.u32 %s46, 1
        %s638 = scalar_lea.sflag [#allocation3], %s637
        %s639 = sand.u32 %s46, 1
        %s640 = smul.addr %s639, 8
        %s641 = scalar_lea.vmem [#allocation2], %s640
        %p642 = pneg %p59
        %p643 = pneg %p56
        %p644 = pneg %p80
        %p645 = pneg %p77
        %p646 = pneg %p101
        %p647 = pneg %p98
        %p648 = pneg %p122
        %p649 = pneg %p119
        %p650 = pneg %p143
        %p651 = pneg %p140
        %p652 = pneg %p164
        %p653 = pneg %p161
        %p654 = pneg %p185
        %p655 = pneg %p182
        %p656 = pneg %p206
        %p657 = pneg %p203
        %p658 = pneg %p227
        %p659 = pneg %p224
        %p660 = pneg %p248
        %p661 = pneg %p245
        %p662 = pneg %p269
        %p663 = pneg %p266
        %p664 = pneg %p290
        %p665 = pneg %p287
        %p666 = pneg %p311
        %p667 = pneg %p308
        %p668 = pneg %p332
        %p669 = pneg %p329
        %p670 = pneg %p353
        %p671 = pneg %p350
        %p672 = pneg %p374
        %p673 = pneg %p371
        %p674 = pneg %p395
        %p675 = pneg %p392
        %p676 = pneg %p421
        %p677 = pneg %p418
        %s678 = sand.u32 %s408, 1
        %s679 = scalar_lea.sflag [#allocation4], %s678
        %s680 = sand.u32 %s408, 1
        %s681 = smul.addr %s680, 16
        %s682 = scalar_lea.vmem [#allocation17], %s681
        %s683 = smul.u32 2, %s38
        %s684 = smul.u32 2, %s38
        %v686 = vld [vmem:[%s600] sm:$0xf]
        %v687 = vld [vmem:[%s600 + $0x4] sm:$0xf]
        %v688 = vld [vmem:[#allocation5] sm:$0xff]
        %v689 = vld [vmem:[#allocation5 + $0x8] sm:$0xff]
        %v690 = vld [vmem:[#allocation5 + $0x10] sm:$0xff]
        %v691 = vld [vmem:[#allocation5 + $0x18] sm:$0xff]
        %v692 = vld [vmem:[#allocation5 + $0x20] sm:$0xff]
        %v693 = vld [vmem:[#allocation5 + $0x28] sm:$0xff]
        %v694 = vld [vmem:[#allocation5 + $0x30] sm:$0xff]
        %v695 = vld [vmem:[#allocation5 + $0x38] sm:$0xff]
        %v696 = vld [vmem:[#allocation5 + $0x40] sm:$0xff]
        %v697 = vld [vmem:[#allocation5 + $0x48] sm:$0xff]
        %v698 = vld [vmem:[#allocation5 + $0x50] sm:$0xff]
        %v699 = vld [vmem:[#allocation5 + $0x58] sm:$0xff]
        %v700 = vld [vmem:[%s2] sm:$0x3f]
        %v702 = vlaneseq
        %v703 = vshrl.u32 %v702, 7
        %v704 = vsub.s32 0, %v703
        %v705 = vrot.slane %v700, %v704
        %v706 = vlaneseq
        %v707 = vshrl.u32 %v706, 7
        %v708 = vsub.s32 1, %v707
        %v709 = vrot.slane %v700, %v708
        %v710 = vlaneseq
        %v711 = vshrl.u32 %v710, 7
        %v712 = vsub.s32 2, %v711
        %v713 = vrot.slane %v700, %v712
        %v714 = vlaneseq
        %v715 = vshrl.u32 %v714, 7
        %v716 = vsub.s32 3, %v715
        %v717 = vrot.slane %v700, %v716
        %v718 = vlaneseq
        %v719 = vshrl.u32 %v718, 7
        %v720 = vsub.s32 4, %v719
        %v721 = vrot.slane %v700, %v720
        %v722 = vlaneseq
        %v723 = vshrl.u32 %v722, 7
        %v724 = vsub.s32 5, %v723
        %v725 = vrot.slane %v700, %v724
        %v734 = vunpack.c.l.b16 %v686
        %v735 = vunpack.c.l.b16 %v687
        %v736 = vpack.c.b16 %v735, %v734
        %v749 = vunpack.c.l.b16 %v688
        %v750 = vunpack.c.h.b16 %v688
        %v751 = vunpack.c.l.b16 %v689
        %v752 = vunpack.c.h.b16 %v689
        %v753 = vunpack.c.l.b16 %v690
        %v754 = vunpack.c.h.b16 %v690
        %v755 = vunpack.c.l.b16 %v691
        %v756 = vunpack.c.h.b16 %v691
        %v757 = vunpack.c.l.b16 %v692
        %v758 = vunpack.c.h.b16 %v692
        %v759 = vunpack.c.l.b16 %v693
        %v760 = vunpack.c.h.b16 %v693
        %v761 = vunpack.c.l.b16 %v694
        %v762 = vunpack.c.h.b16 %v694
        %v763 = vunpack.c.l.b16 %v695
        %v764 = vunpack.c.h.b16 %v695
        %v765 = vunpack.c.l.b16 %v696
        %v766 = vunpack.c.h.b16 %v696
        %v767 = vunpack.c.l.b16 %v697
        %v768 = vunpack.c.h.b16 %v697
        %v769 = vunpack.c.l.b16 %v698
        %v770 = vunpack.c.h.b16 %v698
        %v771 = vunpack.c.l.b16 %v699
        %v772 = vunpack.c.h.b16 %v699
        %v773 = vpack.c.b16 %v755, %v749
        %v774 = vpack.c.b16 %v756, %v750
        %v775 = vpack.c.b16 %v757, %v751
        %v776 = vpack.c.b16 %v758, %v752
        %v777 = vpack.c.b16 %v759, %v753
        %v778 = vpack.c.b16 %v760, %v754
        %v779 = vpack.c.b16 %v767, %v761
        %v780 = vpack.c.b16 %v768, %v762
        %v781 = vpack.c.b16 %v769, %v763
        %v782 = vpack.c.b16 %v770, %v764
        %v783 = vpack.c.b16 %v771, %v765
        %v784 = vpack.c.b16 %v772, %v766
        %vm797 = vcmask 261120
        %v799 = vsel %vm797, %v736, 0
        %801 = vmatprep.subr.bf16.mxu0 %v774
        %802 = vmatpush1.bf16.msra.mxu0 %v773
        %803 = vmatprep.subr.bf16.mxu0 %v780
        %804 = vmatpush1.bf16.msra.mxu0 %v779
        %805 = vmatprep.subr.bf16.mxu0 0
        %806 = vmatpush1.bf16.msra.mxu0 0
        %807 = vmatprep.subr.bf16.mxu0 0
        %808 = vmatpush1.bf16.msra.mxu0 0
        %809 = vmatprep.subr.bf16.mxu0 0
        %810 = vmatpush1.bf16.msra.mxu0 0
        %811 = vmatprep.subr.bf16.mxu0 0
        %812 = vmatpush1.bf16.msra.mxu0 0
        %813 = vmatprep.subr.bf16.mxu0 0
        %814 = vmatpush1.bf16.msra.mxu0 0
        %815 = vmatprep.subr.bf16.mxu0 0
        %816 = vmatpush1.bf16.msra.mxu0 0
        %817 = vmatprep.subr.bf16.mxu0 0
        %818 = vmatpush1.bf16.msra.mxu0 0
        %819 = vmatprep.subr.bf16.mxu0 0
        %820 = vmatpush1.bf16.msra.mxu0 0
        %821 = vmatprep.subr.bf16.mxu0 0
        %822 = vmatpush1.bf16.msra.mxu0 0
        %823 = vmatprep.subr.bf16.mxu0 0
        %824 = vmatpush1.bf16.msra.mxu0 0
        %825 = vmatprep.subr.bf16.mxu0 0
        %826 = vmatpush1.bf16.msra.mxu0 0
        %827 = vmatprep.subr.bf16.mxu0 0
        %828 = vmatpush1.bf16.msra.mxu0 0
        %829 = vmatprep.subr.bf16.mxu0 0
        %830 = vmatpush1.bf16.msra.mxu0 0
        %831 = vmatprep.subr.bf16.mxu0 0
        %832 = vmatpush1.bf16.msra.mxu0 0
        %833 = vmatprep.mubr.bf16.mxu0 0
        %834 = vmatmul.mubr.bf16.gmra.mrb[0].mxu0 %v799
        %v835 = vpop.f32.mrb[0].mxu0
        %v836 = vadd.f32 %v705, %v835
        %v837 = vpop.f32.mrb[0].mxu0
        %v838 = vadd.f32 %v709, %v837
        %v839 = vpop.f32.mrb[0].mxu0
        %v840 = vadd.f32 %v705, %v839
        %v841 = vpop.f32.mrb[0].mxu0
        %v842 = vadd.f32 %v709, %v841
        %843 = vdwg.mxu0
        %844 = vmatprep.subr.bf16.mxu0 %v776
        %845 = vmatpush1.bf16.msra.mxu0 %v775
        %846 = vmatprep.subr.bf16.mxu0 %v782
        %847 = vmatpush1.bf16.msra.mxu0 %v781
        %848 = vmatprep.subr.bf16.mxu0 0
        %849 = vmatpush1.bf16.msra.mxu0 0
        %850 = vmatprep.subr.bf16.mxu0 0
        %851 = vmatpush1.bf16.msra.mxu0 0
        %852 = vmatprep.subr.bf16.mxu0 0
        %853 = vmatpush1.bf16.msra.mxu0 0
        %854 = vmatprep.subr.bf16.mxu0 0
        %855 = vmatpush1.bf16.msra.mxu0 0
        %856 = vmatprep.subr.bf16.mxu0 0
        %857 = vmatpush1.bf16.msra.mxu0 0
        %858 = vmatprep.subr.bf16.mxu0 0
        %859 = vmatpush1.bf16.msra.mxu0 0
        %860 = vmatprep.subr.bf16.mxu0 0
        %861 = vmatpush1.bf16.msra.mxu0 0
        %862 = vmatprep.subr.bf16.mxu0 0
        %863 = vmatpush1.bf16.msra.mxu0 0
        %864 = vmatprep.subr.bf16.mxu0 0
        %865 = vmatpush1.bf16.msra.mxu0 0
        %866 = vmatprep.subr.bf16.mxu0 0
        %867 = vmatpush1.bf16.msra.mxu0 0
        %868 = vmatprep.subr.bf16.mxu0 0
        %869 = vmatpush1.bf16.msra.mxu0 0
        %870 = vmatprep.subr.bf16.mxu0 0
        %871 = vmatpush1.bf16.msra.mxu0 0
        %872 = vmatprep.subr.bf16.mxu0 0
        %873 = vmatpush1.bf16.msra.mxu0 0
        %874 = vmatprep.subr.bf16.mxu0 0
        %875 = vmatpush1.bf16.msra.mxu0 0
        %876 = vmatprep.mubr.bf16.mxu0 0
        %877 = vmatmul.mubr.bf16.gmra.mrb[0].mxu0 %v799
        %v878 = vpop.f32.mrb[0].mxu0
        %v879 = vadd.f32 %v713, %v878
        %v880 = vpop.f32.mrb[0].mxu0
        %v881 = vadd.f32 %v717, %v880
        %v882 = vpop.f32.mrb[0].mxu0
        %v883 = vadd.f32 %v713, %v882
        %v884 = vpop.f32.mrb[0].mxu0
        %v885 = vadd.f32 %v717, %v884
        %886 = vdwg.mxu0
        %887 = vmatprep.subr.bf16.mxu0 %v778
        %888 = vmatpush1.bf16.msra.mxu0 %v777
        %889 = vmatprep.subr.bf16.mxu0 %v784
        %890 = vmatpush1.bf16.msra.mxu0 %v783
        %891 = vmatprep.subr.bf16.mxu0 0
        %892 = vmatpush1.bf16.msra.mxu0 0
        %893 = vmatprep.subr.bf16.mxu0 0
        %894 = vmatpush1.bf16.msra.mxu0 0
        %895 = vmatprep.subr.bf16.mxu0 0
        %896 = vmatpush1.bf16.msra.mxu0 0
        %897 = vmatprep.subr.bf16.mxu0 0
        %898 = vmatpush1.bf16.msra.mxu0 0
        %899 = vmatprep.subr.bf16.mxu0 0
        %900 = vmatpush1.bf16.msra.mxu0 0
        %901 = vmatprep.subr.bf16.mxu0 0
        %902 = vmatpush1.bf16.msra.mxu0 0
        %903 = vmatprep.subr.bf16.mxu0 0
        %904 = vmatpush1.bf16.msra.mxu0 0
        %905 = vmatprep.subr.bf16.mxu0 0
        %906 = vmatpush1.bf16.msra.mxu0 0
        %907 = vmatprep.subr.bf16.mxu0 0
        %908 = vmatpush1.bf16.msra.mxu0 0
        %909 = vmatprep.subr.bf16.mxu0 0
        %910 = vmatpush1.bf16.msra.mxu0 0
        %911 = vmatprep.subr.bf16.mxu0 0
        %912 = vmatpush1.bf16.msra.mxu0 0
        %913 = vmatprep.subr.bf16.mxu0 0
        %914 = vmatpush1.bf16.msra.mxu0 0
        %915 = vmatprep.subr.bf16.mxu0 0
        %916 = vmatpush1.bf16.msra.mxu0 0
        %917 = vmatprep.subr.bf16.mxu0 0
        %918 = vmatpush1.bf16.msra.mxu0 0
        %919 = vmatprep.mubr.bf16.mxu0 0
        %920 = vmatmul.mubr.bf16.gmra.mrb[0].mxu0 %v799
        %v921 = vpop.f32.mrb[0].mxu0
        %v922 = vadd.f32 %v721, %v921
        %v923 = vpop.f32.mrb[0].mxu0
        %v924 = vadd.f32 %v725, %v923
        %v925 = vpop.f32.mrb[0].mxu0
        %v926 = vadd.f32 %v721, %v925
        %v927 = vpop.f32.mrb[0].mxu0
        %v928 = vadd.f32 %v725, %v927
        %929 = vdwg.mxu0
        %v930 = vtanh.pop %v836
        %v931 = vtanh.pop %v838
        %v932 = vtanh.pop %v879
        %v933 = vtanh.pop %v881
        %v934 = vtanh.pop %v922
        %v935 = vtanh.pop %v840
        %v936 = vtanh.pop %v842
        %v937 = vtanh.pop %v883
        %v938 = vtanh.pop %v885
        %v939 = vtanh.pop %v926
        %v940 = vpack.c.bf16 %v935, %v930
        %v941 = vpack.c.bf16 %v936, %v931
        %v942 = vpack.c.bf16 %v937, %v932
        %v943 = vpack.c.bf16 %v938, %v933
        %v944 = vpack.c.bf16 %v939, %v934
        %v945 = vld [vmem:[#allocation7] sm:$0xff]
        %v946 = vld [vmem:[#allocation7 + $0x8] sm:$0xff]
        %v947 = vld [vmem:[#allocation7 + $0x10] sm:$0xff]
        %v948 = vld [vmem:[#allocation7 + $0x18] sm:$0xff]
        %v949 = vld [vmem:[#allocation7 + $0x20] sm:$0xff]
        %v950 = vld [vmem:[#allocation7 + $0x28] sm:$0xff]
        %v951 = vld [vmem:[#allocation7 + $0x30] sm:$0xff]
        %v952 = vld [vmem:[#allocation7 + $0x38] sm:$0xff]
        %v953 = vld [vmem:[#allocation7 + $0x40] sm:$0xff]
        %v954 = vld [vmem:[#allocation7 + $0x48] sm:$0xff]
        %v955 = vld [vmem:[#allocation7 + $0x50] sm:$0xff]
        %v956 = vld [vmem:[#allocation7 + $0x58] sm:$0xff]
        %v957 = vld [vmem:[#allocation7 + $0x60] sm:$0xff]
        %v958 = vld [vmem:[#allocation7 + $0x68] sm:$0xff]
        %v959 = vld [vmem:[#allocation7 + $0x70] sm:$0xff]
        %v960 = vld [vmem:[#allocation7 + $0x78] sm:$0xff]
        %v961 = vld [vmem:[#allocation7 + $0x80] sm:$0xff]
        %v962 = vld [vmem:[#allocation7 + $0x88] sm:$0xff]
        %v963 = vld [vmem:[#allocation7 + $0x90] sm:$0xff]
        %v964 = vld [vmem:[#allocation7 + $0x98] sm:$0xff]
        %v965 = vld [vmem:[#allocation7 + $0xa0] sm:$0xff]
        %v966 = vld [vmem:[#allocation7 + $0xa8] sm:$0xff]
        %v967 = vld [vmem:[#allocation7 + $0xb0] sm:$0xff]
        %v968 = vld [vmem:[#allocation7 + $0xb8] sm:$0xff]
        %v969 = vld [vmem:[#allocation7 + $0xc0] sm:$0xff]
        %v970 = vld [vmem:[#allocation7 + $0xc8] sm:$0xff]
        %v971 = vld [vmem:[#allocation7 + $0xd0] sm:$0xff]
        %v972 = vld [vmem:[#allocation7 + $0xd8] sm:$0xff]
        %v973 = vld [vmem:[#allocation7 + $0xe0] sm:$0xff]
        %v974 = vld [vmem:[#allocation7 + $0xe8] sm:$0xff]
        %v975 = vld [vmem:[#allocation7 + $0xf0] sm:$0xff]
        %v976 = vld [vmem:[#allocation7 + $0xf8] sm:$0xff]
        %v977 = vld [vmem:[#allocation7 + $0x100] sm:$0xff]
        %v978 = vld [vmem:[#allocation7 + $0x108] sm:$0xff]
        %v979 = vld [vmem:[#allocation7 + $0x110] sm:$0xff]
        %v980 = vld [vmem:[#allocation7 + $0x118] sm:$0xff]
        %v981 = vld [vmem:[#allocation7 + $0x120] sm:$0xff]
        %v982 = vld [vmem:[#allocation7 + $0x128] sm:$0xff]
        %v983 = vld [vmem:[#allocation7 + $0x130] sm:$0xff]
        %v984 = vld [vmem:[#allocation7 + $0x138] sm:$0xff]
        %v985 = vld [vmem:[#allocation7 + $0x140] sm:$0xff]
        %v986 = vld [vmem:[#allocation7 + $0x148] sm:$0xff]
        %v987 = vld [vmem:[#allocation7 + $0x150] sm:$0xff]
        %v988 = vld [vmem:[#allocation7 + $0x158] sm:$0xff]
        %v989 = vld [vmem:[#allocation7 + $0x160] sm:$0xff]
        %v990 = vld [vmem:[#allocation7 + $0x168] sm:$0xff]
        %v991 = vld [vmem:[#allocation7 + $0x170] sm:$0xff]
        %v992 = vld [vmem:[#allocation7 + $0x178] sm:$0xff]
        %v993 = vld [vmem:[#allocation7 + $0x180] sm:$0xff]
        %v994 = vld [vmem:[#allocation7 + $0x188] sm:$0xff]
        %v995 = vld [vmem:[#allocation7 + $0x190] sm:$0xff]
        %v996 = vld [vmem:[#allocation7 + $0x198] sm:$0xff]
        %v997 = vld [vmem:[#allocation7 + $0x1a0] sm:$0xff]
        %v998 = vld [vmem:[#allocation7 + $0x1a8] sm:$0xff]
        %v999 = vld [vmem:[#allocation7 + $0x1b0] sm:$0xff]
        %v1000 = vld [vmem:[#allocation7 + $0x1b8] sm:$0xff]
        %v1001 = vld [vmem:[#allocation7 + $0x1c0] sm:$0xff]
        %v1002 = vld [vmem:[#allocation7 + $0x1c8] sm:$0xff]
        %v1003 = vld [vmem:[#allocation7 + $0x1d0] sm:$0xff]
        %v1004 = vld [vmem:[#allocation7 + $0x1d8] sm:$0xff]
        %v1005 = vld [vmem:[#allocation7 + $0x1e0] sm:$0xff]
        %v1006 = vld [vmem:[#allocation7 + $0x1e8] sm:$0xff]
        %v1007 = vld [vmem:[#allocation7 + $0x1f0] sm:$0xff]
        %v1008 = vld [vmem:[#allocation7 + $0x1f8] sm:$0xff]
        %v1009 = vld [vmem:[#allocation7 + $0x200] sm:$0xff]
        %v1010 = vld [vmem:[#allocation7 + $0x208] sm:$0xff]
        %v1011 = vld [vmem:[#allocation7 + $0x210] sm:$0xff]
        %v1012 = vld [vmem:[#allocation7 + $0x218] sm:$0xff]
        %v1013 = vld [vmem:[#allocation7 + $0x220] sm:$0xff]
        %v1014 = vld [vmem:[#allocation7 + $0x228] sm:$0xff]
        %v1015 = vld [vmem:[#allocation7 + $0x230] sm:$0xff]
        %v1016 = vld [vmem:[#allocation7 + $0x238] sm:$0xff]
        %v1017 = vld [vmem:[#allocation7 + $0x240] sm:$0xff]
        %v1018 = vld [vmem:[#allocation7 + $0x248] sm:$0xff]
        %v1019 = vld [vmem:[#allocation7 + $0x250] sm:$0xff]
        %v1020 = vld [vmem:[#allocation7 + $0x258] sm:$0xff]
        %v1021 = vld [vmem:[#allocation7 + $0x260] sm:$0xff]
        %v1022 = vld [vmem:[#allocation7 + $0x268] sm:$0xff]
        %v1023 = vld [vmem:[#allocation7 + $0x270] sm:$0xff]
        %v1024 = vld [vmem:[#allocation7 + $0x278] sm:$0xff]
        %v1025 = vld [vmem:[%s4] sm:$0x3]
        %v1027 = vlaneseq
        %v1028 = vshrl.u32 %v1027, 7
        %v1029 = vsub.s32 0, %v1028
        %v1030 = vrot.slane %v1025, %v1029
        %v1031 = vlaneseq
        %v1032 = vshrl.u32 %v1031, 7
        %v1033 = vsub.s32 1, %v1032
        %v1034 = vrot.slane %v1025, %v1033
        %v1117 = vunpack.c.l.b16 %v945
        %v1118 = vunpack.c.h.b16 %v945
        %v1119 = vunpack.c.l.b16 %v946
        %v1120 = vunpack.c.h.b16 %v946
        %v1121 = vunpack.c.l.b16 %v947
        %v1122 = vunpack.c.h.b16 %v947
        %v1123 = vunpack.c.l.b16 %v948
        %v1124 = vunpack.c.h.b16 %v948
        %v1125 = vunpack.c.l.b16 %v949
        %v1126 = vunpack.c.h.b16 %v949
        %v1127 = vunpack.c.l.b16 %v950
        %v1128 = vunpack.c.h.b16 %v950
        %v1129 = vunpack.c.l.b16 %v951
        %v1130 = vunpack.c.h.b16 %v951
        %v1131 = vunpack.c.l.b16 %v952
        %v1132 = vunpack.c.h.b16 %v952
        %v1133 = vunpack.c.l.b16 %v953
        %v1134 = vunpack.c.h.b16 %v953
        %v1135 = vunpack.c.l.b16 %v954
        %v1136 = vunpack.c.h.b16 %v954
        %v1137 = vunpack.c.l.b16 %v955
        %v1138 = vunpack.c.h.b16 %v955
        %v1139 = vunpack.c.l.b16 %v956
        %v1140 = vunpack.c.h.b16 %v956
        %v1141 = vunpack.c.l.b16 %v957
        %v1142 = vunpack.c.h.b16 %v957
        %v1143 = vunpack.c.l.b16 %v958
        %v1144 = vunpack.c.h.b16 %v958
        %v1145 = vunpack.c.l.b16 %v959
        %v1146 = vunpack.c.h.b16 %v959
        %v1147 = vunpack.c.l.b16 %v960
        %v1148 = vunpack.c.h.b16 %v960
        %v1149 = vunpack.c.l.b16 %v961
        %v1150 = vunpack.c.h.b16 %v961
        %v1151 = vunpack.c.l.b16 %v962
        %v1152 = vunpack.c.h.b16 %v962
        %v1153 = vunpack.c.l.b16 %v963
        %v1154 = vunpack.c.h.b16 %v963
        %v1155 = vunpack.c.l.b16 %v964
        %v1156 = vunpack.c.h.b16 %v964
        %v1157 = vunpack.c.l.b16 %v965
        %v1158 = vunpack.c.h.b16 %v965
        %v1159 = vunpack.c.l.b16 %v966
        %v1160 = vunpack.c.h.b16 %v966
        %v1161 = vunpack.c.l.b16 %v967
        %v1162 = vunpack.c.h.b16 %v967
        %v1163 = vunpack.c.l.b16 %v968
        %v1164 = vunpack.c.h.b16 %v968
        %v1165 = vunpack.c.l.b16 %v969
        %v1166 = vunpack.c.h.b16 %v969
        %v1167 = vunpack.c.l.b16 %v970
        %v1168 = vunpack.c.h.b16 %v970
        %v1169 = vunpack.c.l.b16 %v971
        %v1170 = vunpack.c.h.b16 %v971
        %v1171 = vunpack.c.l.b16 %v972
        %v1172 = vunpack.c.h.b16 %v972
        %v1173 = vunpack.c.l.b16 %v973
        %v1174 = vunpack.c.h.b16 %v973
        %v1175 = vunpack.c.l.b16 %v974
        %v1176 = vunpack.c.h.b16 %v974
        %v1177 = vunpack.c.l.b16 %v975
        %v1178 = vunpack.c.h.b16 %v975
        %v1179 = vunpack.c.l.b16 %v976
        %v1180 = vunpack.c.h.b16 %v976
        %v1181 = vunpack.c.l.b16 %v977
        %v1182 = vunpack.c.h.b16 %v977
        %v1183 = vunpack.c.l.b16 %v978
        %v1184 = vunpack.c.h.b16 %v978
        %v1185 = vunpack.c.l.b16 %v979
        %v1186 = vunpack.c.h.b16 %v979
        %v1187 = vunpack.c.l.b16 %v980
        %v1188 = vunpack.c.h.b16 %v980
        %v1189 = vunpack.c.l.b16 %v981
        %v1190 = vunpack.c.h.b16 %v981
        %v1191 = vunpack.c.l.b16 %v982
        %v1192 = vunpack.c.h.b16 %v982
        %v1193 = vunpack.c.l.b16 %v983
        %v1194 = vunpack.c.h.b16 %v983
        %v1195 = vunpack.c.l.b16 %v984
        %v1196 = vunpack.c.h.b16 %v984
        %v1197 = vunpack.c.l.b16 %v985
        %v1198 = vunpack.c.h.b16 %v985
        %v1199 = vunpack.c.l.b16 %v986
        %v1200 = vunpack.c.h.b16 %v986
        %v1201 = vunpack.c.l.b16 %v987
        %v1202 = vunpack.c.h.b16 %v987
        %v1203 = vunpack.c.l.b16 %v988
        %v1204 = vunpack.c.h.b16 %v988
        %v1205 = vunpack.c.l.b16 %v989
        %v1206 = vunpack.c.h.b16 %v989
        %v1207 = vunpack.c.l.b16 %v990
        %v1208 = vunpack.c.h.b16 %v990
        %v1209 = vunpack.c.l.b16 %v991
        %v1210 = vunpack.c.h.b16 %v991
        %v1211 = vunpack.c.l.b16 %v992
        %v1212 = vunpack.c.h.b16 %v992
        %v1213 = vunpack.c.l.b16 %v993
        %v1214 = vunpack.c.h.b16 %v993
        %v1215 = vunpack.c.l.b16 %v994
        %v1216 = vunpack.c.h.b16 %v994
        %v1217 = vunpack.c.l.b16 %v995
        %v1218 = vunpack.c.h.b16 %v995
        %v1219 = vunpack.c.l.b16 %v996
        %v1220 = vunpack.c.h.b16 %v996
        %v1221 = vunpack.c.l.b16 %v997
        %v1222 = vunpack.c.h.b16 %v997
        %v1223 = vunpack.c.l.b16 %v998
        %v1224 = vunpack.c.h.b16 %v998
        %v1225 = vunpack.c.l.b16 %v999
        %v1226 = vunpack.c.h.b16 %v999
        %v1227 = vunpack.c.l.b16 %v1000
        %v1228 = vunpack.c.h.b16 %v1000
        %v1229 = vunpack.c.l.b16 %v1001
        %v1230 = vunpack.c.h.b16 %v1001
        %v1231 = vunpack.c.l.b16 %v1002
        %v1232 = vunpack.c.h.b16 %v1002
        %v1233 = vunpack.c.l.b16 %v1003
        %v1234 = vunpack.c.h.b16 %v1003
        %v1235 = vunpack.c.l.b16 %v1004
        %v1236 = vunpack.c.h.b16 %v1004
        %v1237 = vunpack.c.l.b16 %v1005
        %v1238 = vunpack.c.h.b16 %v1005
        %v1239 = vunpack.c.l.b16 %v1006
        %v1240 = vunpack.c.h.b16 %v1006
        %v1241 = vunpack.c.l.b16 %v1007
        %v1242 = vunpack.c.h.b16 %v1007
        %v1243 = vunpack.c.l.b16 %v1008
        %v1244 = vunpack.c.h.b16 %v1008
        %v1245 = vunpack.c.l.b16 %v1009
        %v1246 = vunpack.c.h.b16 %v1009
        %v1247 = vunpack.c.l.b16 %v1010
        %v1248 = vunpack.c.h.b16 %v1010
        %v1249 = vunpack.c.l.b16 %v1011
        %v1250 = vunpack.c.h.b16 %v1011
        %v1251 = vunpack.c.l.b16 %v1012
        %v1252 = vunpack.c.h.b16 %v1012
        %v1253 = vunpack.c.l.b16 %v1013
        %v1254 = vunpack.c.h.b16 %v1013
        %v1255 = vunpack.c.l.b16 %v1014
        %v1256 = vunpack.c.h.b16 %v1014
        %v1257 = vunpack.c.l.b16 %v1015
        %v1258 = vunpack.c.h.b16 %v1015
        %v1259 = vunpack.c.l.b16 %v1016
        %v1260 = vunpack.c.h.b16 %v1016
        %v1261 = vunpack.c.l.b16 %v1017
        %v1262 = vunpack.c.h.b16 %v1017
        %v1263 = vunpack.c.l.b16 %v1018
        %v1264 = vunpack.c.h.b16 %v1018
        %v1265 = vunpack.c.l.b16 %v1019
        %v1266 = vunpack.c.h.b16 %v1019
        %v1267 = vunpack.c.l.b16 %v1020
        %v1268 = vunpack.c.h.b16 %v1020
        %v1269 = vunpack.c.l.b16 %v1021
        %v1270 = vunpack.c.h.b16 %v1021
        %v1271 = vunpack.c.l.b16 %v1022
        %v1272 = vunpack.c.h.b16 %v1022
        %v1273 = vunpack.c.l.b16 %v1023
        %v1274 = vunpack.c.h.b16 %v1023
        %v1275 = vunpack.c.l.b16 %v1024
        %v1276 = vunpack.c.h.b16 %v1024
        %v1277 = vpack.c.b16 %v1119, %v1117
        %v1278 = vpack.c.b16 %v1120, %v1118
        %v1279 = vpack.c.b16 %v1123, %v1121
        %v1280 = vpack.c.b16 %v1124, %v1122
        %v1281 = vpack.c.b16 %v1127, %v1125
        %v1282 = vpack.c.b16 %v1128, %v1126
        %v1283 = vpack.c.b16 %v1131, %v1129
        %v1284 = vpack.c.b16 %v1132, %v1130
        %v1285 = vpack.c.b16 %v1135, %v1133
        %v1286 = vpack.c.b16 %v1136, %v1134
        %v1287 = vpack.c.b16 %v1139, %v1137
        %v1288 = vpack.c.b16 %v1140, %v1138
        %v1289 = vpack.c.b16 %v1143, %v1141
        %v1290 = vpack.c.b16 %v1144, %v1142
        %v1291 = vpack.c.b16 %v1147, %v1145
        %v1292 = vpack.c.b16 %v1148, %v1146
        %v1293 = vpack.c.b16 %v1151, %v1149
        %v1294 = vpack.c.b16 %v1152, %v1150
        %v1295 = vpack.c.b16 %v1155, %v1153
        %v1296 = vpack.c.b16 %v1156, %v1154
        %v1297 = vpack.c.b16 %v1159, %v1157
        %v1298 = vpack.c.b16 %v1160, %v1158
        %v1299 = vpack.c.b16 %v1163, %v1161
        %v1300 = vpack.c.b16 %v1164, %v1162
        %v1301 = vpack.c.b16 %v1167, %v1165
        %v1302 = vpack.c.b16 %v1168, %v1166
        %v1303 = vpack.c.b16 %v1171, %v1169
        %v1304 = vpack.c.b16 %v1172, %v1170
        %v1305 = vpack.c.b16 %v1175, %v1173
        %v1306 = vpack.c.b16 %v1176, %v1174
        %v1307 = vpack.c.b16 %v1179, %v1177
        %v1308 = vpack.c.b16 %v1180, %v1178
        %v1309 = vpack.c.b16 %v1183, %v1181
        %v1310 = vpack.c.b16 %v1184, %v1182
        %v1311 = vpack.c.b16 %v1187, %v1185
        %v1312 = vpack.c.b16 %v1188, %v1186
        %v1313 = vpack.c.b16 %v1191, %v1189
        %v1314 = vpack.c.b16 %v1192, %v1190
        %v1315 = vpack.c.b16 %v1195, %v1193
        %v1316 = vpack.c.b16 %v1196, %v1194
        %v1317 = vpack.c.b16 %v1199, %v1197
        %v1318 = vpack.c.b16 %v1200, %v1198
        %v1319 = vpack.c.b16 %v1203, %v1201
        %v1320 = vpack.c.b16 %v1204, %v1202
        %v1321 = vpack.c.b16 %v1207, %v1205
        %v1322 = vpack.c.b16 %v1208, %v1206
        %v1323 = vpack.c.b16 %v1211, %v1209
        %v1324 = vpack.c.b16 %v1212, %v1210
        %v1325 = vpack.c.b16 %v1215, %v1213
        %v1326 = vpack.c.b16 %v1216, %v1214
        %v1327 = vpack.c.b16 %v1219, %v1217
        %v1328 = vpack.c.b16 %v1220, %v1218
        %v1329 = vpack.c.b16 %v1223, %v1221
        %v1330 = vpack.c.b16 %v1224, %v1222
        %v1331 = vpack.c.b16 %v1227, %v1225
        %v1332 = vpack.c.b16 %v1228, %v1226
        %v1333 = vpack.c.b16 %v1231, %v1229
        %v1334 = vpack.c.b16 %v1232, %v1230
        %v1335 = vpack.c.b16 %v1235, %v1233
        %v1336 = vpack.c.b16 %v1236, %v1234
        %v1337 = vpack.c.b16 %v1239, %v1237
        %v1338 = vpack.c.b16 %v1240, %v1238
        %v1339 = vpack.c.b16 %v1243, %v1241
        %v1340 = vpack.c.b16 %v1244, %v1242
        %v1341 = vpack.c.b16 %v1247, %v1245
        %v1342 = vpack.c.b16 %v1248, %v1246
        %v1343 = vpack.c.b16 %v1251, %v1249
        %v1344 = vpack.c.b16 %v1252, %v1250
        %v1345 = vpack.c.b16 %v1255, %v1253
        %v1346 = vpack.c.b16 %v1256, %v1254
        %v1347 = vpack.c.b16 %v1259, %v1257
        %v1348 = vpack.c.b16 %v1260, %v1258
        %v1349 = vpack.c.b16 %v1263, %v1261
        %v1350 = vpack.c.b16 %v1264, %v1262
        %v1351 = vpack.c.b16 %v1267, %v1265
        %v1352 = vpack.c.b16 %v1268, %v1266
        %v1353 = vpack.c.b16 %v1271, %v1269
        %v1354 = vpack.c.b16 %v1272, %v1270
        %v1355 = vpack.c.b16 %v1275, %v1273
        %v1356 = vpack.c.b16 %v1276, %v1274
        %1437 = vmatprep.subr.bf16.mxu0 %v1278
        %1438 = vmatpush1.bf16.msra.mxu0 %v1277
        %1439 = vmatprep.subr.bf16.mxu0 %v1280
        %1440 = vmatpush1.bf16.msra.mxu0 %v1279
        %1441 = vmatprep.subr.bf16.mxu0 %v1282
        %1442 = vmatpush1.bf16.msra.mxu0 %v1281
        %1443 = vmatprep.subr.bf16.mxu0 %v1284
        %1444 = vmatpush1.bf16.msra.mxu0 %v1283
        %1445 = vmatprep.subr.bf16.mxu0 %v1286
        %1446 = vmatpush1.bf16.msra.mxu0 %v1285
        %1447 = vmatprep.subr.bf16.mxu0 %v1288
        %1448 = vmatpush1.bf16.msra.mxu0 %v1287
        %1449 = vmatprep.subr.bf16.mxu0 %v1290
        %1450 = vmatpush1.bf16.msra.mxu0 %v1289
        %1451 = vmatprep.subr.bf16.mxu0 %v1292
        %1452 = vmatpush1.bf16.msra.mxu0 %v1291
        %1453 = vmatprep.subr.bf16.mxu0 %v1294
        %1454 = vmatpush1.bf16.msra.mxu0 %v1293
        %1455 = vmatprep.subr.bf16.mxu0 %v1296
        %1456 = vmatpush1.bf16.msra.mxu0 %v1295
        %1457 = vmatprep.subr.bf16.mxu0 %v1298
        %1458 = vmatpush1.bf16.msra.mxu0 %v1297
        %1459 = vmatprep.subr.bf16.mxu0 %v1300
        %1460 = vmatpush1.bf16.msra.mxu0 %v1299
        %1461 = vmatprep.subr.bf16.mxu0 %v1302
        %1462 = vmatpush1.bf16.msra.mxu0 %v1301
        %1463 = vmatprep.subr.bf16.mxu0 %v1304
        %1464 = vmatpush1.bf16.msra.mxu0 %v1303
        %1465 = vmatprep.subr.bf16.mxu0 %v1306
        %1466 = vmatpush1.bf16.msra.mxu0 %v1305
        %1467 = vmatprep.subr.bf16.mxu0 %v1308
        %1468 = vmatpush1.bf16.msra.mxu0 %v1307
        %1469 = vmatprep.mubr.bf16.mxu0 %v941
        %1470 = vmatmul.mubr.bf16.gmra.mrb[0].mxu0 %v940
        %v1471 = vpop.f32.mrb[0].mxu0
        %v1472 = vadd.f32 %v1030, %v1471
        %v1473 = vpop.f32.mrb[0].mxu0
        %v1474 = vadd.f32 %v1034, %v1473
        %v1475 = vpop.f32.mrb[0].mxu0
        %v1476 = vadd.f32 %v1030, %v1475
        %v1477 = vpop.f32.mrb[0].mxu0
        %v1478 = vadd.f32 %v1034, %v1477
        %1479 = vdwg.mxu0
        %1480 = vmatprep.subr.bf16.mxu0 %v1310
        %1481 = vmatpush1.bf16.msra.mxu0 %v1309
        %1482 = vmatprep.subr.bf16.mxu0 %v1312
        %1483 = vmatpush1.bf16.msra.mxu0 %v1311
        %1484 = vmatprep.subr.bf16.mxu0 %v1314
        %1485 = vmatpush1.bf16.msra.mxu0 %v1313
        %1486 = vmatprep.subr.bf16.mxu0 %v1316
        %1487 = vmatpush1.bf16.msra.mxu0 %v1315
        %1488 = vmatprep.subr.bf16.mxu0 %v1318
        %1489 = vmatpush1.bf16.msra.mxu0 %v1317
        %1490 = vmatprep.subr.bf16.mxu0 %v1320
        %1491 = vmatpush1.bf16.msra.mxu0 %v1319
        %1492 = vmatprep.subr.bf16.mxu0 %v1322
        %1493 = vmatpush1.bf16.msra.mxu0 %v1321
        %1494 = vmatprep.subr.bf16.mxu0 %v1324
        %1495 = vmatpush1.bf16.msra.mxu0 %v1323
        %1496 = vmatprep.subr.bf16.mxu0 %v1326
        %1497 = vmatpush1.bf16.msra.mxu0 %v1325
        %1498 = vmatprep.subr.bf16.mxu0 %v1328
        %1499 = vmatpush1.bf16.msra.mxu0 %v1327
        %1500 = vmatprep.subr.bf16.mxu0 %v1330
        %1501 = vmatpush1.bf16.msra.mxu0 %v1329
        %1502 = vmatprep.subr.bf16.mxu0 %v1332
        %1503 = vmatpush1.bf16.msra.mxu0 %v1331
        %1504 = vmatprep.subr.bf16.mxu0 %v1334
        %1505 = vmatpush1.bf16.msra.mxu0 %v1333
        %1506 = vmatprep.subr.bf16.mxu0 %v1336
        %1507 = vmatpush1.bf16.msra.mxu0 %v1335
        %1508 = vmatprep.subr.bf16.mxu0 %v1338
        %1509 = vmatpush1.bf16.msra.mxu0 %v1337
        %1510 = vmatprep.subr.bf16.mxu0 %v1340
        %1511 = vmatpush1.bf16.msra.mxu0 %v1339
        %1512 = vmatprep.mubr.bf16.mxu0 %v943
        %1513 = vmatmul.mubr.bf16.gmra.mrb[0].mxu0 %v942
        %v1514 = vpop.f32.mrb[0].mxu0
        %v1515 = vadd.f32 %v1472, %v1514
        %v1516 = vpop.f32.mrb[0].mxu0
        %v1517 = vadd.f32 %v1474, %v1516
        %v1518 = vpop.f32.mrb[0].mxu0
        %v1519 = vadd.f32 %v1476, %v1518
        %v1520 = vpop.f32.mrb[0].mxu0
        %v1521 = vadd.f32 %v1478, %v1520
        %1522 = vdwg.mxu0
        %1523 = vmatprep.subr.bf16.mxu0 %v1342
        %1524 = vmatpush1.bf16.msra.mxu0 %v1341
        %1525 = vmatprep.subr.bf16.mxu0 %v1344
        %1526 = vmatpush1.bf16.msra.mxu0 %v1343
        %1527 = vmatprep.subr.bf16.mxu0 %v1346
        %1528 = vmatpush1.bf16.msra.mxu0 %v1345
        %1529 = vmatprep.subr.bf16.mxu0 %v1348
        %1530 = vmatpush1.bf16.msra.mxu0 %v1347
        %1531 = vmatprep.subr.bf16.mxu0 %v1350
        %1532 = vmatpush1.bf16.msra.mxu0 %v1349
        %1533 = vmatprep.subr.bf16.mxu0 %v1352
        %1534 = vmatpush1.bf16.msra.mxu0 %v1351
        %1535 = vmatprep.subr.bf16.mxu0 %v1354
        %1536 = vmatpush1.bf16.msra.mxu0 %v1353
        %1537 = vmatprep.subr.bf16.mxu0 %v1356
        %1538 = vmatpush1.bf16.msra.mxu0 %v1355
        %1539 = vmatprep.subr.bf16.mxu0 0
        %1540 = vmatpush1.bf16.msra.mxu0 0
        %1541 = vmatprep.subr.bf16.mxu0 0
        %1542 = vmatpush1.bf16.msra.mxu0 0
        %1543 = vmatprep.subr.bf16.mxu0 0
        %1544 = vmatpush1.bf16.msra.mxu0 0
        %1545 = vmatprep.subr.bf16.mxu0 0
        %1546 = vmatpush1.bf16.msra.mxu0 0
        %1547 = vmatprep.subr.bf16.mxu0 0
        %1548 = vmatpush1.bf16.msra.mxu0 0
        %1549 = vmatprep.subr.bf16.mxu0 0
        %1550 = vmatpush1.bf16.msra.mxu0 0
        %1551 = vmatprep.subr.bf16.mxu0 0
        %1552 = vmatpush1.bf16.msra.mxu0 0
        %1553 = vmatprep.subr.bf16.mxu0 0
        %1554 = vmatpush1.bf16.msra.mxu0 0
        %1555 = vmatprep.mubr.bf16.mxu0 0
        %1556 = vmatmul.mubr.bf16.gmra.mrb[0].mxu0 %v944
        %v1557 = vpop.f32.mrb[0].mxu0
        %v1558 = vadd.f32 %v1515, %v1557
        %v1559 = vpop.f32.mrb[0].mxu0
        %v1560 = vadd.f32 %v1517, %v1559
        %v1561 = vpop.f32.mrb[0].mxu0
        %v1562 = vadd.f32 %v1519, %v1561
        %v1563 = vpop.f32.mrb[0].mxu0
        %v1564 = vadd.f32 %v1521, %v1563
        %1565 = vdwg.mxu0
        %v1566 = vtanh.pop %v1558
        %v1567 = vtanh.pop %v1560
        %v1568 = vtanh.pop %v1562
        %v1569 = vtanh.pop %v1564
        %v1570 = vpack.c.bf16 %v1568, %v1566
        %v1571 = vpack.c.bf16 %v1569, %v1567
        %v1572 = vld [vmem:[#allocation8] sm:$0xf]
        %v1573 = vld [vmem:[#allocation8 + $0x4] sm:$0xf]
        %v1574 = vld [vmem:[#allocation8 + $0x8] sm:$0xf]
        %v1575 = vld [vmem:[#allocation8 + $0xc] sm:$0xf]
        %v1576 = vld [vmem:[#allocation8 + $0x10] sm:$0xf]
        %v1577 = vld [vmem:[#allocation8 + $0x14] sm:$0xf]
        %v1578 = vld [vmem:[#allocation8 + $0x18] sm:$0xf]
        %v1579 = vld [vmem:[#allocation8 + $0x1c] sm:$0xf]
        %v1580 = vld [vmem:[#allocation8 + $0x20] sm:$0xf]
        %v1581 = vld [vmem:[#allocation8 + $0x24] sm:$0xf]
        %v1582 = vld [vmem:[#allocation8 + $0x28] sm:$0xf]
        %v1583 = vld [vmem:[#allocation8 + $0x2c] sm:$0xf]
        %v1584 = vld [vmem:[#allocation8 + $0x30] sm:$0xf]
        %v1585 = vld [vmem:[#allocation8 + $0x34] sm:$0xf]
        %v1586 = vld [vmem:[#allocation8 + $0x38] sm:$0xf]
        %v1587 = vld [vmem:[#allocation8 + $0x3c] sm:$0xf]
        %v1588 = vld [vmem:[#allocation8 + $0x40] sm:$0xf]
        %v1589 = vld [vmem:[#allocation8 + $0x44] sm:$0xf]
        %v1590 = vld [vmem:[#allocation8 + $0x48] sm:$0xf]
        %v1591 = vld [vmem:[#allocation8 + $0x4c] sm:$0xf]
        %v1592 = vld [vmem:[#allocation8 + $0x50] sm:$0xf]
        %v1593 = vld [vmem:[#allocation8 + $0x54] sm:$0xf]
        %v1594 = vld [vmem:[#allocation8 + $0x58] sm:$0xf]
        %v1595 = vld [vmem:[#allocation8 + $0x5c] sm:$0xf]
        %v1596 = vld [vmem:[#allocation8 + $0x60] sm:$0xf]
        %v1597 = vld [vmem:[#allocation8 + $0x64] sm:$0xf]
        %v1598 = vld [vmem:[#allocation8 + $0x68] sm:$0xf]
        %v1599 = vld [vmem:[#allocation8 + $0x6c] sm:$0xf]
        %v1600 = vld [vmem:[#allocation8 + $0x70] sm:$0xf]
        %v1601 = vld [vmem:[#allocation8 + $0x74] sm:$0xf]
        %v1602 = vld [vmem:[#allocation8 + $0x78] sm:$0xf]
        %v1603 = vld [vmem:[#allocation8 + $0x7c] sm:$0xf]
        %v1604 = vld [vmem:[%s6] sm:$0x1]
        %v1606 = vlaneseq
        %v1607 = vshrl.u32 %v1606, 7
        %v1608 = vsub.s32 0, %v1607
        %v1609 = vrot.slane %v1604, %v1608
        %v1643 = vunpack.c.l.b16 %v1572
        %v1644 = vunpack.c.l.b16 %v1573
        %v1645 = vunpack.c.l.b16 %v1574
        %v1646 = vunpack.c.l.b16 %v1575
        %v1647 = vunpack.c.l.b16 %v1576
        %v1648 = vunpack.c.l.b16 %v1577
        %v1649 = vunpack.c.l.b16 %v1578
        %v1650 = vunpack.c.l.b16 %v1579
        %v1651 = vunpack.c.l.b16 %v1580
        %v1652 = vunpack.c.l.b16 %v1581
        %v1653 = vunpack.c.l.b16 %v1582
        %v1654 = vunpack.c.l.b16 %v1583
        %v1655 = vunpack.c.l.b16 %v1584
        %v1656 = vunpack.c.l.b16 %v1585
        %v1657 = vunpack.c.l.b16 %v1586
        %v1658 = vunpack.c.l.b16 %v1587
        %v1659 = vunpack.c.l.b16 %v1588
        %v1660 = vunpack.c.l.b16 %v1589
        %v1661 = vunpack.c.l.b16 %v1590
        %v1662 = vunpack.c.l.b16 %v1591
        %v1663 = vunpack.c.l.b16 %v1592
        %v1664 = vunpack.c.l.b16 %v1593
        %v1665 = vunpack.c.l.b16 %v1594
        %v1666 = vunpack.c.l.b16 %v1595
        %v1667 = vunpack.c.l.b16 %v1596
        %v1668 = vunpack.c.l.b16 %v1597
        %v1669 = vunpack.c.l.b16 %v1598
        %v1670 = vunpack.c.l.b16 %v1599
        %v1671 = vunpack.c.l.b16 %v1600
        %v1672 = vunpack.c.l.b16 %v1601
        %v1673 = vunpack.c.l.b16 %v1602
        %v1674 = vunpack.c.l.b16 %v1603
        %v1675 = vpack.c.b16 %v1644, %v1643
        %v1676 = vpack.c.b16 %v1646, %v1645
        %v1677 = vpack.c.b16 %v1648, %v1647
        %v1678 = vpack.c.b16 %v1650, %v1649
        %v1679 = vpack.c.b16 %v1652, %v1651
        %v1680 = vpack.c.b16 %v1654, %v1653
        %v1681 = vpack.c.b16 %v1656, %v1655
        %v1682 = vpack.c.b16 %v1658, %v1657
        %v1683 = vpack.c.b16 %v1660, %v1659
        %v1684 = vpack.c.b16 %v1662, %v1661
        %v1685 = vpack.c.b16 %v1664, %v1663
        %v1686 = vpack.c.b16 %v1666, %v1665
        %v1687 = vpack.c.b16 %v1668, %v1667
        %v1688 = vpack.c.b16 %v1670, %v1669
        %v1689 = vpack.c.b16 %v1672, %v1671
        %v1690 = vpack.c.b16 %v1674, %v1673
        %1707 = vmatprep.subr.bf16.mxu0 0
        %1708 = vmatpush1.bf16.msra.mxu0 %v1675
        %1709 = vmatprep.subr.bf16.mxu0 0
        %1710 = vmatpush1.bf16.msra.mxu0 %v1676
        %1711 = vmatprep.subr.bf16.mxu0 0
        %1712 = vmatpush1.bf16.msra.mxu0 %v1677
        %1713 = vmatprep.subr.bf16.mxu0 0
        %1714 = vmatpush1.bf16.msra.mxu0 %v1678
        %1715 = vmatprep.subr.bf16.mxu0 0
        %1716 = vmatpush1.bf16.msra.mxu0 %v1679
        %1717 = vmatprep.subr.bf16.mxu0 0
        %1718 = vmatpush1.bf16.msra.mxu0 %v1680
        %1719 = vmatprep.subr.bf16.mxu0 0
        %1720 = vmatpush1.bf16.msra.mxu0 %v1681
        %1721 = vmatprep.subr.bf16.mxu0 0
        %1722 = vmatpush1.bf16.msra.mxu0 %v1682
        %1723 = vmatprep.subr.bf16.mxu0 0
        %1724 = vmatpush1.bf16.msra.mxu0 %v1683
        %1725 = vmatprep.subr.bf16.mxu0 0
        %1726 = vmatpush1.bf16.msra.mxu0 %v1684
        %1727 = vmatprep.subr.bf16.mxu0 0
        %1728 = vmatpush1.bf16.msra.mxu0 %v1685
        %1729 = vmatprep.subr.bf16.mxu0 0
        %1730 = vmatpush1.bf16.msra.mxu0 %v1686
        %1731 = vmatprep.subr.bf16.mxu0 0
        %1732 = vmatpush1.bf16.msra.mxu0 %v1687
        %1733 = vmatprep.subr.bf16.mxu0 0
        %1734 = vmatpush1.bf16.msra.mxu0 %v1688
        %1735 = vmatprep.subr.bf16.mxu0 0
        %1736 = vmatpush1.bf16.msra.mxu0 %v1689
        %1737 = vmatprep.subr.bf16.mxu0 0
        %1738 = vmatpush1.bf16.msra.mxu0 %v1690
        %1739 = vmatprep.mubr.bf16.mxu0 %v1571
        %1740 = vmatmul.mubr.bf16.gmra.mrb[0].mxu0 %v1570
        %v1741 = vpop.f32.mrb[0].mxu0
        %v1742 = vadd.f32 %v1609, %v1741
        %v1743 = vpop.f32.mrb[0].mxu0
        %v1744 = vpop.f32.mrb[0].mxu0
        %v1745 = vadd.f32 %v1609, %v1744
        %v1746 = vpop.f32.mrb[0].mxu0
        %1747 = vdwg.mxu0
        %v1748 = vtanh.pop %v1742
        %v1749 = vtanh.pop %v1745
        %v1750 = vpack.c.bf16 %v1749, %v1748
        %v1751 = vld [vmem:[#allocation10] sm:$0xf]
        %v1752 = vld [vmem:[#allocation10 + $0x4] sm:$0xf]
        %v1753 = vld [vmem:[#allocation10 + $0x8] sm:$0xf]
        %v1754 = vld [vmem:[#allocation10 + $0xc] sm:$0xf]
        %v1755 = vld [vmem:[#allocation10 + $0x10] sm:$0xf]
        %v1756 = vld [vmem:[#allocation10 + $0x14] sm:$0xf]
        %v1757 = vld [vmem:[#allocation10 + $0x18] sm:$0xf]
        %v1758 = vld [vmem:[#allocation10 + $0x1c] sm:$0xf]
        %v1759 = vld [vmem:[#allocation10 + $0x20] sm:$0xf]
        %v1760 = vld [vmem:[#allocation10 + $0x24] sm:$0xf]
        %v1761 = vld [vmem:[#allocation10 + $0x28] sm:$0xf]
        %v1762 = vld [vmem:[#allocation10 + $0x2c] sm:$0xf]
        %v1763 = vld [vmem:[#allocation10 + $0x30] sm:$0xf]
        %v1764 = vld [vmem:[#allocation10 + $0x34] sm:$0xf]
        %v1765 = vld [vmem:[#allocation10 + $0x38] sm:$0xf]
        %v1766 = vld [vmem:[#allocation10 + $0x3c] sm:$0xf]
        %v1767 = vld [vmem:[%s8] sm:$0x1]
        %v1769 = vlaneseq
        %v1770 = vshrl.u32 %v1769, 7
        %v1771 = vsub.s32 0, %v1770
        %v1772 = vrot.slane %v1767, %v1771
        %v1790 = vunpack.c.l.b16 %v1751
        %v1791 = vunpack.c.l.b16 %v1752
        %v1792 = vunpack.c.l.b16 %v1753
        %v1793 = vunpack.c.l.b16 %v1754
        %v1794 = vunpack.c.l.b16 %v1755
        %v1795 = vunpack.c.l.b16 %v1756
        %v1796 = vunpack.c.l.b16 %v1757
        %v1797 = vunpack.c.l.b16 %v1758
        %v1798 = vunpack.c.l.b16 %v1759
        %v1799 = vunpack.c.l.b16 %v1760
        %v1800 = vunpack.c.l.b16 %v1761
        %v1801 = vunpack.c.l.b16 %v1762
        %v1802 = vunpack.c.l.b16 %v1763
        %v1803 = vunpack.c.l.b16 %v1764
        %v1804 = vunpack.c.l.b16 %v1765
        %v1805 = vunpack.c.l.b16 %v1766
        %v1806 = vpack.c.b16 %v1791, %v1790
        %v1807 = vpack.c.b16 %v1793, %v1792
        %v1808 = vpack.c.b16 %v1795, %v1794
        %v1809 = vpack.c.b16 %v1797, %v1796
        %v1810 = vpack.c.b16 %v1799, %v1798
        %v1811 = vpack.c.b16 %v1801, %v1800
        %v1812 = vpack.c.b16 %v1803, %v1802
        %v1813 = vpack.c.b16 %v1805, %v1804
        %1822 = vmatprep.subr.bf16.mxu0 0
        %1823 = vmatpush1.bf16.msra.mxu0 %v1806
        %1824 = vmatprep.subr.bf16.mxu0 0
        %1825 = vmatpush1.bf16.msra.mxu0 %v1807
        %1826 = vmatprep.subr.bf16.mxu0 0
        %1827 = vmatpush1.bf16.msra.mxu0 %v1808
        %1828 = vmatprep.subr.bf16.mxu0 0
        %1829 = vmatpush1.bf16.msra.mxu0 %v1809
        %1830 = vmatprep.subr.bf16.mxu0 0
        %1831 = vmatpush1.bf16.msra.mxu0 %v1810
        %1832 = vmatprep.subr.bf16.mxu0 0
        %1833 = vmatpush1.bf16.msra.mxu0 %v1811
        %1834 = vmatprep.subr.bf16.mxu0 0
        %1835 = vmatpush1.bf16.msra.mxu0 %v1812
        %1836 = vmatprep.subr.bf16.mxu0 0
        %1837 = vmatpush1.bf16.msra.mxu0 %v1813
        %1838 = vmatprep.subr.bf16.mxu0 0
        %1839 = vmatpush1.bf16.msra.mxu0 0
        %1840 = vmatprep.subr.bf16.mxu0 0
        %1841 = vmatpush1.bf16.msra.mxu0 0
        %1842 = vmatprep.subr.bf16.mxu0 0
        %1843 = vmatpush1.bf16.msra.mxu0 0
        %1844 = vmatprep.subr.bf16.mxu0 0
        %1845 = vmatpush1.bf16.msra.mxu0 0
        %1846 = vmatprep.subr.bf16.mxu0 0
        %1847 = vmatpush1.bf16.msra.mxu0 0
        %1848 = vmatprep.subr.bf16.mxu0 0
        %1849 = vmatpush1.bf16.msra.mxu0 0
        %1850 = vmatprep.subr.bf16.mxu0 0
        %1851 = vmatpush1.bf16.msra.mxu0 0
        %1852 = vmatprep.subr.bf16.mxu0 0
        %1853 = vmatpush1.bf16.msra.mxu0 0
        %1854 = vmatprep.mubr.bf16.mxu0 0
        %1855 = vmatmul.mubr.bf16.gmra.mrb[0].mxu0 %v1750
        %v1856 = vpop.f32.mrb[0].mxu0
        %v1857 = vadd.f32 %v1772, %v1856
        %v1858 = vpop.f32.mrb[0].mxu0
        %v1859 = vpop.f32.mrb[0].mxu0
        %v1860 = vadd.f32 %v1772, %v1859
        %v1861 = vpop.f32.mrb[0].mxu0
        %1862 = vdwg.mxu0
        %v1863 = vtanh.pop %v1857
        %v1864 = vtanh.pop %v1860
        %v1865 = vadd.f32 %v1863, %v924
        %v1866 = vadd.f32 %v1864, %v928
        %v1867 = vpack.c.bf16 %v1866, %v1865
        %v1868 = vld [vmem:[#allocation11] sm:$0xf]
        %v1869 = vld [vmem:[#allocation11 + $0x4] sm:$0xf]
        %v1870 = vld [vmem:[#allocation11 + $0x8] sm:$0xf]
        %v1871 = vld [vmem:[#allocation11 + $0xc] sm:$0xf]
        %v1872 = vld [vmem:[#allocation11 + $0x10] sm:$0xf]
        %v1873 = vld [vmem:[#allocation11 + $0x14] sm:$0xf]
        %v1874 = vld [vmem:[#allocation11 + $0x18] sm:$0xf]
        %v1875 = vld [vmem:[#allocation11 + $0x1c] sm:$0xf]
        %v1876 = vld [vmem:[#allocation11 + $0x20] sm:$0xf]
        %v1877 = vld [vmem:[#allocation11 + $0x24] sm:$0xf]
        %v1878 = vld [vmem:[#allocation11 + $0x28] sm:$0xf]
        %v1879 = vld [vmem:[#allocation11 + $0x2c] sm:$0xf]
        %v1880 = vld [vmem:[#allocation11 + $0x30] sm:$0xf]
        %v1881 = vld [vmem:[#allocation11 + $0x34] sm:$0xf]
        %v1882 = vld [vmem:[#allocation11 + $0x38] sm:$0xf]
        %v1883 = vld [vmem:[#allocation11 + $0x3c] sm:$0xf]
        %v1884 = vld [vmem:[%s10] sm:$0x1]
        %v1886 = vlaneseq
        %v1887 = vshrl.u32 %v1886, 7
        %v1888 = vsub.s32 0, %v1887
        %v1889 = vrot.slane %v1884, %v1888
        %v1907 = vunpack.c.l.b16 %v1868
        %v1908 = vunpack.c.l.b16 %v1869
        %v1909 = vunpack.c.l.b16 %v1870
        %v1910 = vunpack.c.l.b16 %v1871
        %v1911 = vunpack.c.l.b16 %v1872
        %v1912 = vunpack.c.l.b16 %v1873
        %v1913 = vunpack.c.l.b16 %v1874
        %v1914 = vunpack.c.l.b16 %v1875
        %v1915 = vunpack.c.l.b16 %v1876
        %v1916 = vunpack.c.l.b16 %v1877
        %v1917 = vunpack.c.l.b16 %v1878
        %v1918 = vunpack.c.l.b16 %v1879
        %v1919 = vunpack.c.l.b16 %v1880
        %v1920 = vunpack.c.l.b16 %v1881
        %v1921 = vunpack.c.l.b16 %v1882
        %v1922 = vunpack.c.l.b16 %v1883
        %v1923 = vpack.c.b16 %v1908, %v1907
        %v1924 = vpack.c.b16 %v1910, %v1909
        %v1925 = vpack.c.b16 %v1912, %v1911
        %v1926 = vpack.c.b16 %v1914, %v1913
        %v1927 = vpack.c.b16 %v1916, %v1915
        %v1928 = vpack.c.b16 %v1918, %v1917
        %v1929 = vpack.c.b16 %v1920, %v1919
        %v1930 = vpack.c.b16 %v1922, %v1921
        %1939 = vmatprep.subr.bf16.mxu0 0
        %1940 = vmatpush1.bf16.msra.mxu0 %v1923
        %1941 = vmatprep.subr.bf16.mxu0 0
        %1942 = vmatpush1.bf16.msra.mxu0 %v1924
        %1943 = vmatprep.subr.bf16.mxu0 0
        %1944 = vmatpush1.bf16.msra.mxu0 %v1925
        %1945 = vmatprep.subr.bf16.mxu0 0
        %1946 = vmatpush1.bf16.msra.mxu0 %v1926
        %1947 = vmatprep.subr.bf16.mxu0 0
        %1948 = vmatpush1.bf16.msra.mxu0 %v1927
        %1949 = vmatprep.subr.bf16.mxu0 0
        %1950 = vmatpush1.bf16.msra.mxu0 %v1928
        %1951 = vmatprep.subr.bf16.mxu0 0
        %1952 = vmatpush1.bf16.msra.mxu0 %v1929
        %1953 = vmatprep.subr.bf16.mxu0 0
        %1954 = vmatpush1.bf16.msra.mxu0 %v1930
        %1955 = vmatprep.subr.bf16.mxu0 0
        %1956 = vmatpush1.bf16.msra.mxu0 0
        %1957 = vmatprep.subr.bf16.mxu0 0
        %1958 = vmatpush1.bf16.msra.mxu0 0
        %1959 = vmatprep.subr.bf16.mxu0 0
        %1960 = vmatpush1.bf16.msra.mxu0 0
        %1961 = vmatprep.subr.bf16.mxu0 0
        %1962 = vmatpush1.bf16.msra.mxu0 0
        %1963 = vmatprep.subr.bf16.mxu0 0
        %1964 = vmatpush1.bf16.msra.mxu0 0
        %1965 = vmatprep.subr.bf16.mxu0 0
        %1966 = vmatpush1.bf16.msra.mxu0 0
        %1967 = vmatprep.subr.bf16.mxu0 0
        %1968 = vmatpush1.bf16.msra.mxu0 0
        %1969 = vmatprep.subr.bf16.mxu0 0
        %1970 = vmatpush1.bf16.msra.mxu0 0
        %1971 = vmatprep.mubr.bf16.mxu0 0
        %1972 = vmatmul.mubr.bf16.gmra.mrb[0].mxu0 %v1867
        %v1973 = vpop.f32.mrb[0].mxu0
        %v1974 = vadd.f32 %v1889, %v1973
        %v1975 = vpop.f32.mrb[0].mxu0
        %v1976 = vpop.f32.mrb[0].mxu0
        %v1977 = vadd.f32 %v1889, %v1976
        %v1978 = vpop.f32.mrb[0].mxu0
        %1979 = vdwg.mxu0
        %v1980 = vtanh.pop %v1974
        %v1981 = vtanh.pop %v1977
        %v1982 = vpack.c.bf16 %v1981, %v1980
        %v1983 = vld [vmem:[#allocation13] sm:$0xff]
        %v1984 = vld [vmem:[#allocation13 + $0x8] sm:$0xff]
        %v1985 = vld [vmem:[#allocation13 + $0x10] sm:$0xff]
        %v1986 = vld [vmem:[#allocation13 + $0x18] sm:$0xff]
        %v1987 = vld [vmem:[#allocation13 + $0x20] sm:$0xff]
        %v1988 = vld [vmem:[#allocation13 + $0x28] sm:$0xff]
        %v1989 = vld [vmem:[#allocation13 + $0x30] sm:$0xff]
        %v1990 = vld [vmem:[#allocation13 + $0x38] sm:$0xff]
        %v1991 = vld [vmem:[#allocation13 + $0x40] sm:$0xff]
        %v1992 = vld [vmem:[#allocation13 + $0x48] sm:$0xff]
        %v1993 = vld [vmem:[#allocation13 + $0x50] sm:$0xff]
        %v1994 = vld [vmem:[#allocation13 + $0x58] sm:$0xff]
        %v1995 = vld [vmem:[#allocation13 + $0x60] sm:$0xff]
        %v1996 = vld [vmem:[#allocation13 + $0x68] sm:$0xff]
        %v1997 = vld [vmem:[#allocation13 + $0x70] sm:$0xff]
        %v1998 = vld [vmem:[#allocation13 + $0x78] sm:$0xff]
        %v1999 = vld [vmem:[%s12] sm:$0x3]
        %v2001 = vlaneseq
        %v2002 = vshrl.u32 %v2001, 7
        %v2003 = vsub.s32 0, %v2002
        %v2004 = vrot.slane %v1999, %v2003
        %v2005 = vlaneseq
        %v2006 = vshrl.u32 %v2005, 7
        %v2007 = vsub.s32 1, %v2006
        %v2008 = vrot.slane %v1999, %v2007
        %v2027 = vunpack.c.l.b16 %v1983
        %v2028 = vunpack.c.h.b16 %v1983
        %v2029 = vunpack.c.l.b16 %v1984
        %v2030 = vunpack.c.h.b16 %v1984
        %v2031 = vunpack.c.l.b16 %v1985
        %v2032 = vunpack.c.h.b16 %v1985
        %v2033 = vunpack.c.l.b16 %v1986
        %v2034 = vunpack.c.h.b16 %v1986
        %v2035 = vunpack.c.l.b16 %v1987
        %v2036 = vunpack.c.h.b16 %v1987
        %v2037 = vunpack.c.l.b16 %v1988
        %v2038 = vunpack.c.h.b16 %v1988
        %v2039 = vunpack.c.l.b16 %v1989
        %v2040 = vunpack.c.h.b16 %v1989
        %v2041 = vunpack.c.l.b16 %v1990
        %v2042 = vunpack.c.h.b16 %v1990
        %v2043 = vunpack.c.l.b16 %v1991
        %v2044 = vunpack.c.h.b16 %v1991
        %v2045 = vunpack.c.l.b16 %v1992
        %v2046 = vunpack.c.h.b16 %v1992
        %v2047 = vunpack.c.l.b16 %v1993
        %v2048 = vunpack.c.h.b16 %v1993
        %v2049 = vunpack.c.l.b16 %v1994
        %v2050 = vunpack.c.h.b16 %v1994
        %v2051 = vunpack.c.l.b16 %v1995
        %v2052 = vunpack.c.h.b16 %v1995
        %v2053 = vunpack.c.l.b16 %v1996
        %v2054 = vunpack.c.h.b16 %v1996
        %v2055 = vunpack.c.l.b16 %v1997
        %v2056 = vunpack.c.h.b16 %v1997
        %v2057 = vunpack.c.l.b16 %v1998
        %v2058 = vunpack.c.h.b16 %v1998
        %v2059 = vpack.c.b16 %v2029, %v2027
        %v2060 = vpack.c.b16 %v2030, %v2028
        %v2061 = vpack.c.b16 %v2033, %v2031
        %v2062 = vpack.c.b16 %v2034, %v2032
        %v2063 = vpack.c.b16 %v2037, %v2035
        %v2064 = vpack.c.b16 %v2038, %v2036
        %v2065 = vpack.c.b16 %v2041, %v2039
        %v2066 = vpack.c.b16 %v2042, %v2040
        %v2067 = vpack.c.b16 %v2045, %v2043
        %v2068 = vpack.c.b16 %v2046, %v2044
        %v2069 = vpack.c.b16 %v2049, %v2047
        %v2070 = vpack.c.b16 %v2050, %v2048
        %v2071 = vpack.c.b16 %v2053, %v2051
        %v2072 = vpack.c.b16 %v2054, %v2052
        %v2073 = vpack.c.b16 %v2057, %v2055
        %v2074 = vpack.c.b16 %v2058, %v2056
        %2091 = vmatprep.subr.bf16.mxu0 %v2060
        %2092 = vmatpush1.bf16.msra.mxu0 %v2059
        %2093 = vmatprep.subr.bf16.mxu0 %v2062
        %2094 = vmatpush1.bf16.msra.mxu0 %v2061
        %2095 = vmatprep.subr.bf16.mxu0 %v2064
        %2096 = vmatpush1.bf16.msra.mxu0 %v2063
        %2097 = vmatprep.subr.bf16.mxu0 %v2066
        %2098 = vmatpush1.bf16.msra.mxu0 %v2065
        %2099 = vmatprep.subr.bf16.mxu0 %v2068
        %2100 = vmatpush1.bf16.msra.mxu0 %v2067
        %2101 = vmatprep.subr.bf16.mxu0 %v2070
        %2102 = vmatpush1.bf16.msra.mxu0 %v2069
        %2103 = vmatprep.subr.bf16.mxu0 %v2072
        %2104 = vmatpush1.bf16.msra.mxu0 %v2071
        %2105 = vmatprep.subr.bf16.mxu0 %v2074
        %2106 = vmatpush1.bf16.msra.mxu0 %v2073
        %2107 = vmatprep.subr.bf16.mxu0 0
        %2108 = vmatpush1.bf16.msra.mxu0 0
        %2109 = vmatprep.subr.bf16.mxu0 0
        %2110 = vmatpush1.bf16.msra.mxu0 0
        %2111 = vmatprep.subr.bf16.mxu0 0
        %2112 = vmatpush1.bf16.msra.mxu0 0
        %2113 = vmatprep.subr.bf16.mxu0 0
        %2114 = vmatpush1.bf16.msra.mxu0 0
        %2115 = vmatprep.subr.bf16.mxu0 0
        %2116 = vmatpush1.bf16.msra.mxu0 0
        %2117 = vmatprep.subr.bf16.mxu0 0
        %2118 = vmatpush1.bf16.msra.mxu0 0
        %2119 = vmatprep.subr.bf16.mxu0 0
        %2120 = vmatpush1.bf16.msra.mxu0 0
        %2121 = vmatprep.subr.bf16.mxu0 0
        %2122 = vmatpush1.bf16.msra.mxu0 0
        %2123 = vmatprep.mubr.bf16.mxu0 0
        %2124 = vmatmul.mubr.bf16.gmra.mrb[0].mxu0 %v1982
        %v2125 = vpop.f32.mrb[0].mxu0
        %v2126 = vadd.f32 %v2004, %v2125
        %v2127 = vpop.f32.mrb[0].mxu0
        %v2128 = vadd.f32 %v2008, %v2127
        %v2129 = vpop.f32.mrb[0].mxu0
        %v2130 = vadd.f32 %v2004, %v2129
        %v2131 = vpop.f32.mrb[0].mxu0
        %v2132 = vadd.f32 %v2008, %v2131
        %2133 = vdwg.mxu0
        %v2134 = vtanh.pop %v2126
        %v2135 = vtanh.pop %v2128
        %v2136 = vtanh.pop %v2130
        %v2137 = vtanh.pop %v2132
        %v2138 = vpack.c.bf16 %v2136, %v2134
        %v2139 = vpack.c.bf16 %v2137, %v2135
        %v2140 = vld [vmem:[#allocation14] sm:$0xff]
        %v2141 = vld [vmem:[#allocation14 + $0x8] sm:$0xff]
        %v2142 = vld [vmem:[#allocation14 + $0x10] sm:$0xf]
        %v2143 = vld [vmem:[#allocation14 + $0x14] sm:$0xff]
        %v2144 = vld [vmem:[#allocation14 + $0x1c] sm:$0xff]
        %v2145 = vld [vmem:[#allocation14 + $0x24] sm:$0xf]
        %v2146 = vld [vmem:[#allocation14 + $0x28] sm:$0xff]
        %v2147 = vld [vmem:[#allocation14 + $0x30] sm:$0xff]
        %v2148 = vld [vmem:[#allocation14 + $0x38] sm:$0xf]
        %v2149 = vld [vmem:[#allocation14 + $0x3c] sm:$0xff]
        %v2150 = vld [vmem:[#allocation14 + $0x44] sm:$0xff]
        %v2151 = vld [vmem:[#allocation14 + $0x4c] sm:$0xf]
        %v2152 = vld [vmem:[#allocation14 + $0x50] sm:$0xff]
        %v2153 = vld [vmem:[#allocation14 + $0x58] sm:$0xff]
        %v2154 = vld [vmem:[#allocation14 + $0x60] sm:$0xf]
        %v2155 = vld [vmem:[#allocation14 + $0x64] sm:$0xff]
        %v2156 = vld [vmem:[#allocation14 + $0x6c] sm:$0xff]
        %v2157 = vld [vmem:[#allocation14 + $0x74] sm:$0xf]
        %v2158 = vld [vmem:[#allocation14 + $0x78] sm:$0xff]
        %v2159 = vld [vmem:[#allocation14 + $0x80] sm:$0xff]
        %v2160 = vld [vmem:[#allocation14 + $0x88] sm:$0xf]
        %v2161 = vld [vmem:[#allocation14 + $0x8c] sm:$0xff]
        %v2162 = vld [vmem:[#allocation14 + $0x94] sm:$0xff]
        %v2163 = vld [vmem:[#allocation14 + $0x9c] sm:$0xf]
        %v2164 = vld [vmem:[#allocation14 + $0xa0] sm:$0xff]
        %v2165 = vld [vmem:[#allocation14 + $0xa8] sm:$0xff]
        %v2166 = vld [vmem:[#allocation14 + $0xb0] sm:$0xf]
        %v2167 = vld [vmem:[#allocation14 + $0xb4] sm:$0xff]
        %v2168 = vld [vmem:[#allocation14 + $0xbc] sm:$0xff]
        %v2169 = vld [vmem:[#allocation14 + $0xc4] sm:$0xf]
        %v2170 = vld [vmem:[#allocation14 + $0xc8] sm:$0xff]
        %v2171 = vld [vmem:[#allocation14 + $0xd0] sm:$0xff]
        %v2172 = vld [vmem:[#allocation14 + $0xd8] sm:$0xf]
        %v2173 = vld [vmem:[#allocation14 + $0xdc] sm:$0xff]
        %v2174 = vld [vmem:[#allocation14 + $0xe4] sm:$0xff]
        %v2175 = vld [vmem:[#allocation14 + $0xec] sm:$0xf]
        %v2176 = vld [vmem:[#allocation14 + $0xf0] sm:$0xff]
        %v2177 = vld [vmem:[#allocation14 + $0xf8] sm:$0xff]
        %v2178 = vld [vmem:[#allocation14 + $0x100] sm:$0xf]
        %v2179 = vld [vmem:[#allocation14 + $0x104] sm:$0xff]
        %v2180 = vld [vmem:[#allocation14 + $0x10c] sm:$0xff]
        %v2181 = vld [vmem:[#allocation14 + $0x114] sm:$0xf]
        %v2182 = vld [vmem:[#allocation14 + $0x118] sm:$0xff]
        %v2183 = vld [vmem:[#allocation14 + $0x120] sm:$0xff]
        %v2184 = vld [vmem:[#allocation14 + $0x128] sm:$0xf]
        %v2185 = vld [vmem:[#allocation14 + $0x12c] sm:$0xff]
        %v2186 = vld [vmem:[#allocation14 + $0x134] sm:$0xff]
        %v2187 = vld [vmem:[#allocation14 + $0x13c] sm:$0xf]
        %v2188 = vld [vmem:[#allocation14 + $0x140] sm:$0xff]
        %v2189 = vld [vmem:[#allocation14 + $0x148] sm:$0xff]
        %v2190 = vld [vmem:[#allocation14 + $0x150] sm:$0xf]
        %v2191 = vld [vmem:[#allocation14 + $0x154] sm:$0xff]
        %v2192 = vld [vmem:[#allocation14 + $0x15c] sm:$0xff]
        %v2193 = vld [vmem:[#allocation14 + $0x164] sm:$0xf]
        %v2194 = vld [vmem:[#allocation14 + $0x168] sm:$0xff]
        %v2195 = vld [vmem:[#allocation14 + $0x170] sm:$0xff]
        %v2196 = vld [vmem:[#allocation14 + $0x178] sm:$0xf]
        %v2197 = vld [vmem:[#allocation14 + $0x17c] sm:$0xff]
        %v2198 = vld [vmem:[#allocation14 + $0x184] sm:$0xff]
        %v2199 = vld [vmem:[#allocation14 + $0x18c] sm:$0xf]
        %v2200 = vld [vmem:[#allocation14 + $0x190] sm:$0xff]
        %v2201 = vld [vmem:[#allocation14 + $0x198] sm:$0xff]
        %v2202 = vld [vmem:[#allocation14 + $0x1a0] sm:$0xf]
        %v2203 = vld [vmem:[#allocation14 + $0x1a4] sm:$0xff]
        %v2204 = vld [vmem:[#allocation14 + $0x1ac] sm:$0xff]
        %v2205 = vld [vmem:[#allocation14 + $0x1b4] sm:$0xf]
        %v2206 = vld [vmem:[#allocation14 + $0x1b8] sm:$0xff]
        %v2207 = vld [vmem:[#allocation14 + $0x1c0] sm:$0xff]
        %v2208 = vld [vmem:[#allocation14 + $0x1c8] sm:$0xf]
        %v2209 = vld [vmem:[#allocation14 + $0x1cc] sm:$0xff]
        %v2210 = vld [vmem:[#allocation14 + $0x1d4] sm:$0xff]
        %v2211 = vld [vmem:[#allocation14 + $0x1dc] sm:$0xf]
        %v2212 = vld [vmem:[#allocation14 + $0x1e0] sm:$0xff]
        %v2213 = vld [vmem:[#allocation14 + $0x1e8] sm:$0xff]
        %v2214 = vld [vmem:[#allocation14 + $0x1f0] sm:$0xf]
        %v2215 = vld [vmem:[#allocation14 + $0x1f4] sm:$0xff]
        %v2216 = vld [vmem:[#allocation14 + $0x1fc] sm:$0xff]
        %v2217 = vld [vmem:[#allocation14 + $0x204] sm:$0xf]
        %v2218 = vld [vmem:[#allocation14 + $0x208] sm:$0xff]
        %v2219 = vld [vmem:[#allocation14 + $0x210] sm:$0xff]
        %v2220 = vld [vmem:[#allocation14 + $0x218] sm:$0xf]
        %v2221 = vld [vmem:[#allocation14 + $0x21c] sm:$0xff]
        %v2222 = vld [vmem:[#allocation14 + $0x224] sm:$0xff]
        %v2223 = vld [vmem:[#allocation14 + $0x22c] sm:$0xf]
        %v2224 = vld [vmem:[#allocation14 + $0x230] sm:$0xff]
        %v2225 = vld [vmem:[#allocation14 + $0x238] sm:$0xff]
        %v2226 = vld [vmem:[#allocation14 + $0x240] sm:$0xf]
        %v2227 = vld [vmem:[#allocation14 + $0x244] sm:$0xff]
        %v2228 = vld [vmem:[#allocation14 + $0x24c] sm:$0xff]
        %v2229 = vld [vmem:[#allocation14 + $0x254] sm:$0xf]
        %v2230 = vld [vmem:[#allocation14 + $0x258] sm:$0xff]
        %v2231 = vld [vmem:[#allocation14 + $0x260] sm:$0xff]
        %v2232 = vld [vmem:[#allocation14 + $0x268] sm:$0xf]
        %v2233 = vld [vmem:[#allocation14 + $0x26c] sm:$0xff]
        %v2234 = vld [vmem:[#allocation14 + $0x274] sm:$0xff]
        %v2235 = vld [vmem:[#allocation14 + $0x27c] sm:$0xf]
        %v2236 = vld [vmem:[%s14] sm:$0x1f]
        %v2238 = vlaneseq
        %v2239 = vshrl.u32 %v2238, 7
        %v2240 = vsub.s32 0, %v2239
        %v2241 = vrot.slane %v2236, %v2240
        %v2242 = vlaneseq
        %v2243 = vshrl.u32 %v2242, 7
        %v2244 = vsub.s32 1, %v2243
        %v2245 = vrot.slane %v2236, %v2244
        %v2246 = vlaneseq
        %v2247 = vshrl.u32 %v2246, 7
        %v2248 = vsub.s32 2, %v2247
        %v2249 = vrot.slane %v2236, %v2248
        %v2250 = vlaneseq
        %v2251 = vshrl.u32 %v2250, 7
        %v2252 = vsub.s32 3, %v2251
        %v2253 = vrot.slane %v2236, %v2252
        %v2254 = vlaneseq
        %v2255 = vshrl.u32 %v2254, 7
        %v2256 = vsub.s32 4, %v2255
        %v2257 = vrot.slane %v2236, %v2256
        %v2359 = vunpack.c.l.b16 %v2140
        %v2360 = vunpack.c.h.b16 %v2140
        %v2361 = vunpack.c.l.b16 %v2141
        %v2362 = vunpack.c.h.b16 %v2141
        %v2363 = vunpack.c.l.b16 %v2142
        %v2364 = vunpack.c.l.b16 %v2143
        %v2365 = vunpack.c.h.b16 %v2143
        %v2366 = vunpack.c.l.b16 %v2144
        %v2367 = vunpack.c.h.b16 %v2144
        %v2368 = vunpack.c.l.b16 %v2145
        %v2369 = vunpack.c.l.b16 %v2146
        %v2370 = vunpack.c.h.b16 %v2146
        %v2371 = vunpack.c.l.b16 %v2147
        %v2372 = vunpack.c.h.b16 %v2147
        %v2373 = vunpack.c.l.b16 %v2148
        %v2374 = vunpack.c.l.b16 %v2149
        %v2375 = vunpack.c.h.b16 %v2149
        %v2376 = vunpack.c.l.b16 %v2150
        %v2377 = vunpack.c.h.b16 %v2150
        %v2378 = vunpack.c.l.b16 %v2151
        %v2379 = vunpack.c.l.b16 %v2152
        %v2380 = vunpack.c.h.b16 %v2152
        %v2381 = vunpack.c.l.b16 %v2153
        %v2382 = vunpack.c.h.b16 %v2153
        %v2383 = vunpack.c.l.b16 %v2154
        %v2384 = vunpack.c.l.b16 %v2155
        %v2385 = vunpack.c.h.b16 %v2155
        %v2386 = vunpack.c.l.b16 %v2156
        %v2387 = vunpack.c.h.b16 %v2156
        %v2388 = vunpack.c.l.b16 %v2157
        %v2389 = vunpack.c.l.b16 %v2158
        %v2390 = vunpack.c.h.b16 %v2158
        %v2391 = vunpack.c.l.b16 %v2159
        %v2392 = vunpack.c.h.b16 %v2159
        %v2393 = vunpack.c.l.b16 %v2160
        %v2394 = vunpack.c.l.b16 %v2161
        %v2395 = vunpack.c.h.b16 %v2161
        %v2396 = vunpack.c.l.b16 %v2162
        %v2397 = vunpack.c.h.b16 %v2162
        %v2398 = vunpack.c.l.b16 %v2163
        %v2399 = vunpack.c.l.b16 %v2164
        %v2400 = vunpack.c.h.b16 %v2164
        %v2401 = vunpack.c.l.b16 %v2165
        %v2402 = vunpack.c.h.b16 %v2165
        %v2403 = vunpack.c.l.b16 %v2166
        %v2404 = vunpack.c.l.b16 %v2167
        %v2405 = vunpack.c.h.b16 %v2167
        %v2406 = vunpack.c.l.b16 %v2168
        %v2407 = vunpack.c.h.b16 %v2168
        %v2408 = vunpack.c.l.b16 %v2169
        %v2409 = vunpack.c.l.b16 %v2170
        %v2410 = vunpack.c.h.b16 %v2170
        %v2411 = vunpack.c.l.b16 %v2171
        %v2412 = vunpack.c.h.b16 %v2171
        %v2413 = vunpack.c.l.b16 %v2172
        %v2414 = vunpack.c.l.b16 %v2173
        %v2415 = vunpack.c.h.b16 %v2173
        %v2416 = vunpack.c.l.b16 %v2174
        %v2417 = vunpack.c.h.b16 %v2174
        %v2418 = vunpack.c.l.b16 %v2175
        %v2419 = vunpack.c.l.b16 %v2176
        %v2420 = vunpack.c.h.b16 %v2176
        %v2421 = vunpack.c.l.b16 %v2177
        %v2422 = vunpack.c.h.b16 %v2177
        %v2423 = vunpack.c.l.b16 %v2178
        %v2424 = vunpack.c.l.b16 %v2179
        %v2425 = vunpack.c.h.b16 %v2179
        %v2426 = vunpack.c.l.b16 %v2180
        %v2427 = vunpack.c.h.b16 %v2180
        %v2428 = vunpack.c.l.b16 %v2181
        %v2429 = vunpack.c.l.b16 %v2182
        %v2430 = vunpack.c.h.b16 %v2182
        %v2431 = vunpack.c.l.b16 %v2183
        %v2432 = vunpack.c.h.b16 %v2183
        %v2433 = vunpack.c.l.b16 %v2184
        %v2434 = vunpack.c.l.b16 %v2185
        %v2435 = vunpack.c.h.b16 %v2185
        %v2436 = vunpack.c.l.b16 %v2186
        %v2437 = vunpack.c.h.b16 %v2186
        %v2438 = vunpack.c.l.b16 %v2187
        %v2439 = vunpack.c.l.b16 %v2188
        %v2440 = vunpack.c.h.b16 %v2188
        %v2441 = vunpack.c.l.b16 %v2189
        %v2442 = vunpack.c.h.b16 %v2189
        %v2443 = vunpack.c.l.b16 %v2190
        %v2444 = vunpack.c.l.b16 %v2191
        %v2445 = vunpack.c.h.b16 %v2191
        %v2446 = vunpack.c.l.b16 %v2192
        %v2447 = vunpack.c.h.b16 %v2192
        %v2448 = vunpack.c.l.b16 %v2193
        %v2449 = vunpack.c.l.b16 %v2194
        %v2450 = vunpack.c.h.b16 %v2194
        %v2451 = vunpack.c.l.b16 %v2195
        %v2452 = vunpack.c.h.b16 %v2195
        %v2453 = vunpack.c.l.b16 %v2196
        %v2454 = vunpack.c.l.b16 %v2197
        %v2455 = vunpack.c.h.b16 %v2197
        %v2456 = vunpack.c.l.b16 %v2198
        %v2457 = vunpack.c.h.b16 %v2198
        %v2458 = vunpack.c.l.b16 %v2199
        %v2459 = vunpack.c.l.b16 %v2200
        %v2460 = vunpack.c.h.b16 %v2200
        %v2461 = vunpack.c.l.b16 %v2201
        %v2462 = vunpack.c.h.b16 %v2201
        %v2463 = vunpack.c.l.b16 %v2202
        %v2464 = vunpack.c.l.b16 %v2203
        %v2465 = vunpack.c.h.b16 %v2203
        %v2466 = vunpack.c.l.b16 %v2204
        %v2467 = vunpack.c.h.b16 %v2204
        %v2468 = vunpack.c.l.b16 %v2205
        %v2469 = vunpack.c.l.b16 %v2206
        %v2470 = vunpack.c.h.b16 %v2206
        %v2471 = vunpack.c.l.b16 %v2207
        %v2472 = vunpack.c.h.b16 %v2207
        %v2473 = vunpack.c.l.b16 %v2208
        %v2474 = vunpack.c.l.b16 %v2209
        %v2475 = vunpack.c.h.b16 %v2209
        %v2476 = vunpack.c.l.b16 %v2210
        %v2477 = vunpack.c.h.b16 %v2210
        %v2478 = vunpack.c.l.b16 %v2211
        %v2479 = vunpack.c.l.b16 %v2212
        %v2480 = vunpack.c.h.b16 %v2212
        %v2481 = vunpack.c.l.b16 %v2213
        %v2482 = vunpack.c.h.b16 %v2213
        %v2483 = vunpack.c.l.b16 %v2214
        %v2484 = vunpack.c.l.b16 %v2215
        %v2485 = vunpack.c.h.b16 %v2215
        %v2486 = vunpack.c.l.b16 %v2216
        %v2487 = vunpack.c.h.b16 %v2216
        %v2488 = vunpack.c.l.b16 %v2217
        %v2489 = vunpack.c.l.b16 %v2218
        %v2490 = vunpack.c.h.b16 %v2218
        %v2491 = vunpack.c.l.b16 %v2219
        %v2492 = vunpack.c.h.b16 %v2219
        %v2493 = vunpack.c.l.b16 %v2220
        %v2494 = vunpack.c.l.b16 %v2221
        %v2495 = vunpack.c.h.b16 %v2221
        %v2496 = vunpack.c.l.b16 %v2222
        %v2497 = vunpack.c.h.b16 %v2222
        %v2498 = vunpack.c.l.b16 %v2223
        %v2499 = vunpack.c.l.b16 %v2224
        %v2500 = vunpack.c.h.b16 %v2224
        %v2501 = vunpack.c.l.b16 %v2225
        %v2502 = vunpack.c.h.b16 %v2225
        %v2503 = vunpack.c.l.b16 %v2226
        %v2504 = vunpack.c.l.b16 %v2227
        %v2505 = vunpack.c.h.b16 %v2227
        %v2506 = vunpack.c.l.b16 %v2228
        %v2507 = vunpack.c.h.b16 %v2228
        %v2508 = vunpack.c.l.b16 %v2229
        %v2509 = vunpack.c.l.b16 %v2230
        %v2510 = vunpack.c.h.b16 %v2230
        %v2511 = vunpack.c.l.b16 %v2231
        %v2512 = vunpack.c.h.b16 %v2231
        %v2513 = vunpack.c.l.b16 %v2232
        %v2514 = vunpack.c.l.b16 %v2233
        %v2515 = vunpack.c.h.b16 %v2233
        %v2516 = vunpack.c.l.b16 %v2234
        %v2517 = vunpack.c.h.b16 %v2234
        %v2518 = vunpack.c.l.b16 %v2235
        %v2519 = vpack.c.b16 %v2364, %v2359
        %v2520 = vpack.c.b16 %v2365, %v2360
        %v2521 = vpack.c.b16 %v2366, %v2361
        %v2522 = vpack.c.b16 %v2367, %v2362
        %v2523 = vpack.c.b16 %v2368, %v2363
        %v2524 = vpack.c.b16 %v2374, %v2369
        %v2525 = vpack.c.b16 %v2375, %v2370
        %v2526 = vpack.c.b16 %v2376, %v2371
        %v2527 = vpack.c.b16 %v2377, %v2372
        %v2528 = vpack.c.b16 %v2378, %v2373
        %v2529 = vpack.c.b16 %v2384, %v2379
        %v2530 = vpack.c.b16 %v2385, %v2380
        %v2531 = vpack.c.b16 %v2386, %v2381
        %v2532 = vpack.c.b16 %v2387, %v2382
        %v2533 = vpack.c.b16 %v2388, %v2383
        %v2534 = vpack.c.b16 %v2394, %v2389
        %v2535 = vpack.c.b16 %v2395, %v2390
        %v2536 = vpack.c.b16 %v2396, %v2391
        %v2537 = vpack.c.b16 %v2397, %v2392
        %v2538 = vpack.c.b16 %v2398, %v2393
        %v2539 = vpack.c.b16 %v2404, %v2399
        %v2540 = vpack.c.b16 %v2405, %v2400
        %v2541 = vpack.c.b16 %v2406, %v2401
        %v2542 = vpack.c.b16 %v2407, %v2402
        %v2543 = vpack.c.b16 %v2408, %v2403
        %v2544 = vpack.c.b16 %v2414, %v2409
        %v2545 = vpack.c.b16 %v2415, %v2410
        %v2546 = vpack.c.b16 %v2416, %v2411
        %v2547 = vpack.c.b16 %v2417, %v2412
        %v2548 = vpack.c.b16 %v2418, %v2413
        %v2549 = vpack.c.b16 %v2424, %v2419
        %v2550 = vpack.c.b16 %v2425, %v2420
        %v2551 = vpack.c.b16 %v2426, %v2421
        %v2552 = vpack.c.b16 %v2427, %v2422
        %v2553 = vpack.c.b16 %v2428, %v2423
        %v2554 = vpack.c.b16 %v2434, %v2429
        %v2555 = vpack.c.b16 %v2435, %v2430
        %v2556 = vpack.c.b16 %v2436, %v2431
        %v2557 = vpack.c.b16 %v2437, %v2432
        %v2558 = vpack.c.b16 %v2438, %v2433
        %v2559 = vpack.c.b16 %v2444, %v2439
        %v2560 = vpack.c.b16 %v2445, %v2440
        %v2561 = vpack.c.b16 %v2446, %v2441
        %v2562 = vpack.c.b16 %v2447, %v2442
        %v2563 = vpack.c.b16 %v2448, %v2443
        %v2564 = vpack.c.b16 %v2454, %v2449
        %v2565 = vpack.c.b16 %v2455, %v2450
        %v2566 = vpack.c.b16 %v2456, %v2451
        %v2567 = vpack.c.b16 %v2457, %v2452
        %v2568 = vpack.c.b16 %v2458, %v2453
        %v2569 = vpack.c.b16 %v2464, %v2459
        %v2570 = vpack.c.b16 %v2465, %v2460
        %v2571 = vpack.c.b16 %v2466, %v2461
        %v2572 = vpack.c.b16 %v2467, %v2462
        %v2573 = vpack.c.b16 %v2468, %v2463
        %v2574 = vpack.c.b16 %v2474, %v2469
        %v2575 = vpack.c.b16 %v2475, %v2470
        %v2576 = vpack.c.b16 %v2476, %v2471
        %v2577 = vpack.c.b16 %v2477, %v2472
        %v2578 = vpack.c.b16 %v2478, %v2473
        %v2579 = vpack.c.b16 %v2484, %v2479
        %v2580 = vpack.c.b16 %v2485, %v2480
        %v2581 = vpack.c.b16 %v2486, %v2481
        %v2582 = vpack.c.b16 %v2487, %v2482
        %v2583 = vpack.c.b16 %v2488, %v2483
        %v2584 = vpack.c.b16 %v2494, %v2489
        %v2585 = vpack.c.b16 %v2495, %v2490
        %v2586 = vpack.c.b16 %v2496, %v2491
        %v2587 = vpack.c.b16 %v2497, %v2492
        %v2588 = vpack.c.b16 %v2498, %v2493
        %v2589 = vpack.c.b16 %v2504, %v2499
        %v2590 = vpack.c.b16 %v2505, %v2500
        %v2591 = vpack.c.b16 %v2506, %v2501
        %v2592 = vpack.c.b16 %v2507, %v2502
        %v2593 = vpack.c.b16 %v2508, %v2503
        %v2594 = vpack.c.b16 %v2514, %v2509
        %v2595 = vpack.c.b16 %v2515, %v2510
        %v2596 = vpack.c.b16 %v2516, %v2511
        %v2597 = vpack.c.b16 %v2517, %v2512
        %v2598 = vpack.c.b16 %v2518, %v2513
        %2679 = vmatprep.subr.bf16.mxu0 %v2520
        %2680 = vmatpush1.bf16.msra.mxu0 %v2519
        %2681 = vmatprep.subr.bf16.mxu0 %v2525
        %2682 = vmatpush1.bf16.msra.mxu0 %v2524
        %2683 = vmatprep.subr.bf16.mxu0 %v2530
        %2684 = vmatpush1.bf16.msra.mxu0 %v2529
        %2685 = vmatprep.subr.bf16.mxu0 %v2535
        %2686 = vmatpush1.bf16.msra.mxu0 %v2534
        %2687 = vmatprep.subr.bf16.mxu0 %v2540
        %2688 = vmatpush1.bf16.msra.mxu0 %v2539
        %2689 = vmatprep.subr.bf16.mxu0 %v2545
        %2690 = vmatpush1.bf16.msra.mxu0 %v2544
        %2691 = vmatprep.subr.bf16.mxu0 %v2550
        %2692 = vmatpush1.bf16.msra.mxu0 %v2549
        %2693 = vmatprep.subr.bf16.mxu0 %v2555
        %2694 = vmatpush1.bf16.msra.mxu0 %v2554
        %2695 = vmatprep.subr.bf16.mxu0 %v2560
        %2696 = vmatpush1.bf16.msra.mxu0 %v2559
        %2697 = vmatprep.subr.bf16.mxu0 %v2565
        %2698 = vmatpush1.bf16.msra.mxu0 %v2564
        %2699 = vmatprep.subr.bf16.mxu0 %v2570
        %2700 = vmatpush1.bf16.msra.mxu0 %v2569
        %2701 = vmatprep.subr.bf16.mxu0 %v2575
        %2702 = vmatpush1.bf16.msra.mxu0 %v2574
        %2703 = vmatprep.subr.bf16.mxu0 %v2580
        %2704 = vmatpush1.bf16.msra.mxu0 %v2579
        %2705 = vmatprep.subr.bf16.mxu0 %v2585
        %2706 = vmatpush1.bf16.msra.mxu0 %v2584
        %2707 = vmatprep.subr.bf16.mxu0 %v2590
        %2708 = vmatpush1.bf16.msra.mxu0 %v2589
        %2709 = vmatprep.subr.bf16.mxu0 %v2595
        %2710 = vmatpush1.bf16.msra.mxu0 %v2594
        %2711 = vmatprep.mubr.bf16.mxu0 %v2139
        %2712 = vmatmul.mubr.bf16.gmra.mrb[0].mxu0 %v2138
        %v2713 = vpop.f32.mrb[0].mxu0
        %v2714 = vadd.f32 %v2241, %v2713
        %v2715 = vpop.f32.mrb[0].mxu0
        %v2716 = vadd.f32 %v2245, %v2715
        %v2717 = vpop.f32.mrb[0].mxu0
        %v2718 = vadd.f32 %v2241, %v2717
        %v2719 = vpop.f32.mrb[0].mxu0
        %v2720 = vadd.f32 %v2245, %v2719
        %2721 = vdwg.mxu0
        %2722 = vmatprep.subr.bf16.mxu0 %v2522
        %2723 = vmatpush1.bf16.msra.mxu0 %v2521
        %2724 = vmatprep.subr.bf16.mxu0 %v2527
        %2725 = vmatpush1.bf16.msra.mxu0 %v2526
        %2726 = vmatprep.subr.bf16.mxu0 %v2532
        %2727 = vmatpush1.bf16.msra.mxu0 %v2531
        %2728 = vmatprep.subr.bf16.mxu0 %v2537
        %2729 = vmatpush1.bf16.msra.mxu0 %v2536
        %2730 = vmatprep.subr.bf16.mxu0 %v2542
        %2731 = vmatpush1.bf16.msra.mxu0 %v2541
        %2732 = vmatprep.subr.bf16.mxu0 %v2547
        %2733 = vmatpush1.bf16.msra.mxu0 %v2546
        %2734 = vmatprep.subr.bf16.mxu0 %v2552
        %2735 = vmatpush1.bf16.msra.mxu0 %v2551
        %2736 = vmatprep.subr.bf16.mxu0 %v2557
        %2737 = vmatpush1.bf16.msra.mxu0 %v2556
        %2738 = vmatprep.subr.bf16.mxu0 %v2562
        %2739 = vmatpush1.bf16.msra.mxu0 %v2561
        %2740 = vmatprep.subr.bf16.mxu0 %v2567
        %2741 = vmatpush1.bf16.msra.mxu0 %v2566
        %2742 = vmatprep.subr.bf16.mxu0 %v2572
        %2743 = vmatpush1.bf16.msra.mxu0 %v2571
        %2744 = vmatprep.subr.bf16.mxu0 %v2577
        %2745 = vmatpush1.bf16.msra.mxu0 %v2576
        %2746 = vmatprep.subr.bf16.mxu0 %v2582
        %2747 = vmatpush1.bf16.msra.mxu0 %v2581
        %2748 = vmatprep.subr.bf16.mxu0 %v2587
        %2749 = vmatpush1.bf16.msra.mxu0 %v2586
        %2750 = vmatprep.subr.bf16.mxu0 %v2592
        %2751 = vmatpush1.bf16.msra.mxu0 %v2591
        %2752 = vmatprep.subr.bf16.mxu0 %v2597
        %2753 = vmatpush1.bf16.msra.mxu0 %v2596
        %2754 = vmatprep.mubr.bf16.mxu0 %v2139
        %2755 = vmatmul.mubr.bf16.gmra.mrb[0].mxu0 %v2138
        %v2756 = vpop.f32.mrb[0].mxu0
        %v2757 = vadd.f32 %v2249, %v2756
        %v2758 = vpop.f32.mrb[0].mxu0
        %v2759 = vadd.f32 %v2253, %v2758
        %v2760 = vpop.f32.mrb[0].mxu0
        %v2761 = vadd.f32 %v2249, %v2760
        %v2762 = vpop.f32.mrb[0].mxu0
        %v2763 = vadd.f32 %v2253, %v2762
        %2764 = vdwg.mxu0
        %2765 = vmatprep.subr.bf16.mxu0 0
        %2766 = vmatpush1.bf16.msra.mxu0 %v2523
        %2767 = vmatprep.subr.bf16.mxu0 0
        %2768 = vmatpush1.bf16.msra.mxu0 %v2528
        %2769 = vmatprep.subr.bf16.mxu0 0
        %2770 = vmatpush1.bf16.msra.mxu0 %v2533
        %2771 = vmatprep.subr.bf16.mxu0 0
        %2772 = vmatpush1.bf16.msra.mxu0 %v2538
        %2773 = vmatprep.subr.bf16.mxu0 0
        %2774 = vmatpush1.bf16.msra.mxu0 %v2543
        %2775 = vmatprep.subr.bf16.mxu0 0
        %2776 = vmatpush1.bf16.msra.mxu0 %v2548
        %2777 = vmatprep.subr.bf16.mxu0 0
        %2778 = vmatpush1.bf16.msra.mxu0 %v2553
        %2779 = vmatprep.subr.bf16.mxu0 0
        %2780 = vmatpush1.bf16.msra.mxu0 %v2558
        %2781 = vmatprep.subr.bf16.mxu0 0
        %2782 = vmatpush1.bf16.msra.mxu0 %v2563
        %2783 = vmatprep.subr.bf16.mxu0 0
        %2784 = vmatpush1.bf16.msra.mxu0 %v2568
        %2785 = vmatprep.subr.bf16.mxu0 0
        %2786 = vmatpush1.bf16.msra.mxu0 %v2573
        %2787 = vmatprep.subr.bf16.mxu0 0
        %2788 = vmatpush1.bf16.msra.mxu0 %v2578
        %2789 = vmatprep.subr.bf16.mxu0 0
        %2790 = vmatpush1.bf16.msra.mxu0 %v2583
        %2791 = vmatprep.subr.bf16.mxu0 0
        %2792 = vmatpush1.bf16.msra.mxu0 %v2588
        %2793 = vmatprep.subr.bf16.mxu0 0
        %2794 = vmatpush1.bf16.msra.mxu0 %v2593
        %2795 = vmatprep.subr.bf16.mxu0 0
        %2796 = vmatpush1.bf16.msra.mxu0 %v2598
        %2797 = vmatprep.mubr.bf16.mxu0 %v2139
        %2798 = vmatmul.mubr.bf16.gmra.mrb[0].mxu0 %v2138
        %v2799 = vpop.f32.mrb[0].mxu0
        %v2800 = vadd.f32 %v2257, %v2799
        %v2801 = vpop.f32.mrb[0].mxu0
        %v2802 = vpop.f32.mrb[0].mxu0
        %v2803 = vadd.f32 %v2257, %v2802
        %v2804 = vpop.f32.mrb[0].mxu0
        %2805 = vdwg.mxu0
        %v2806 = vtanh.pop %v2714
        %v2807 = vtanh.pop %v2716
        %v2808 = vtanh.pop %v2757
        %v2809 = vtanh.pop %v2759
        %v2810 = vtanh.pop %v2800
        %v2811 = vtanh.pop %v2718
        %v2812 = vtanh.pop %v2720
        %v2813 = vtanh.pop %v2761
        %v2814 = vtanh.pop %v2763
        %v2815 = vtanh.pop %v2803
        %v2816 = vpack.c.bf16 %v2811, %v2806
        %v2817 = vpack.c.bf16 %v2812, %v2807
        %v2818 = vpack.c.bf16 %v2813, %v2808
        %v2819 = vpack.c.bf16 %v2814, %v2809
        %v2820 = vpack.c.bf16 %v2815, %v2810
        %v2821 = vld [vmem:[#allocation16] sm:$0xf]
        %v2822 = vld [vmem:[#allocation16 + $0x4] sm:$0xf]
        %v2823 = vld [vmem:[#allocation16 + $0x8] sm:$0xf]
        %v2824 = vld [vmem:[#allocation16 + $0xc] sm:$0xf]
        %v2825 = vld [vmem:[#allocation16 + $0x10] sm:$0xf]
        %v2826 = vld [vmem:[#allocation16 + $0x14] sm:$0xf]
        %v2827 = vld [vmem:[#allocation16 + $0x18] sm:$0xf]
        %v2828 = vld [vmem:[#allocation16 + $0x1c] sm:$0xf]
        %v2829 = vld [vmem:[#allocation16 + $0x20] sm:$0xf]
        %v2830 = vld [vmem:[#allocation16 + $0x24] sm:$0xf]
        %v2831 = vld [vmem:[#allocation16 + $0x28] sm:$0xf]
        %v2832 = vld [vmem:[#allocation16 + $0x2c] sm:$0xf]
        %v2833 = vld [vmem:[#allocation16 + $0x30] sm:$0xf]
        %v2834 = vld [vmem:[#allocation16 + $0x34] sm:$0xf]
        %v2835 = vld [vmem:[#allocation16 + $0x38] sm:$0xf]
        %v2836 = vld [vmem:[#allocation16 + $0x3c] sm:$0xf]
        %v2837 = vld [vmem:[#allocation16 + $0x40] sm:$0xf]
        %v2838 = vld [vmem:[#allocation16 + $0x44] sm:$0xf]
        %v2839 = vld [vmem:[#allocation16 + $0x48] sm:$0xf]
        %v2840 = vld [vmem:[#allocation16 + $0x4c] sm:$0xf]
        %v2841 = vld [vmem:[#allocation16 + $0x50] sm:$0xf]
        %v2842 = vld [vmem:[#allocation16 + $0x54] sm:$0xf]
        %v2843 = vld [vmem:[#allocation16 + $0x58] sm:$0xf]
        %v2844 = vld [vmem:[#allocation16 + $0x5c] sm:$0xf]
        %v2845 = vld [vmem:[#allocation16 + $0x60] sm:$0xf]
        %v2846 = vld [vmem:[#allocation16 + $0x64] sm:$0xf]
        %v2847 = vld [vmem:[#allocation16 + $0x68] sm:$0xf]
        %v2848 = vld [vmem:[#allocation16 + $0x6c] sm:$0xf]
        %v2849 = vld [vmem:[#allocation16 + $0x70] sm:$0xf]
        %v2850 = vld [vmem:[#allocation16 + $0x74] sm:$0xf]
        %v2851 = vld [vmem:[#allocation16 + $0x78] sm:$0xf]
        %v2852 = vld [vmem:[#allocation16 + $0x7c] sm:$0xf]
        %v2853 = vld [vmem:[#allocation16 + $0x80] sm:$0xf]
        %v2854 = vld [vmem:[#allocation16 + $0x84] sm:$0xf]
        %v2855 = vld [vmem:[#allocation16 + $0x88] sm:$0xf]
        %v2856 = vld [vmem:[#allocation16 + $0x8c] sm:$0xf]
        %v2857 = vld [vmem:[#allocation16 + $0x90] sm:$0xf]
        %v2858 = vld [vmem:[#allocation16 + $0x94] sm:$0xf]
        %v2859 = vld [vmem:[#allocation16 + $0x98] sm:$0xf]
        %v2860 = vld [vmem:[#allocation16 + $0x9c] sm:$0xf]
        %v2861 = vld [vmem:[#allocation16 + $0xa0] sm:$0xf]
        %v2862 = vld [vmem:[#allocation16 + $0xa4] sm:$0xf]
        %v2863 = vld [vmem:[#allocation16 + $0xa8] sm:$0xf]
        %v2864 = vld [vmem:[#allocation16 + $0xac] sm:$0xf]
        %v2865 = vld [vmem:[#allocation16 + $0xb0] sm:$0xf]
        %v2866 = vld [vmem:[#allocation16 + $0xb4] sm:$0xf]
        %v2867 = vld [vmem:[#allocation16 + $0xb8] sm:$0xf]
        %v2868 = vld [vmem:[#allocation16 + $0xbc] sm:$0xf]
        %v2869 = vld [vmem:[#allocation16 + $0xc0] sm:$0xf]
        %v2870 = vld [vmem:[#allocation16 + $0xc4] sm:$0xf]
        %v2871 = vld [vmem:[#allocation16 + $0xc8] sm:$0xf]
        %v2872 = vld [vmem:[#allocation16 + $0xcc] sm:$0xf]
        %v2873 = vld [vmem:[#allocation16 + $0xd0] sm:$0xf]
        %v2874 = vld [vmem:[#allocation16 + $0xd4] sm:$0xf]
        %v2875 = vld [vmem:[#allocation16 + $0xd8] sm:$0xf]
        %v2876 = vld [vmem:[#allocation16 + $0xdc] sm:$0xf]
        %v2877 = vld [vmem:[#allocation16 + $0xe0] sm:$0xf]
        %v2878 = vld [vmem:[#allocation16 + $0xe4] sm:$0xf]
        %v2879 = vld [vmem:[#allocation16 + $0xe8] sm:$0xf]
        %v2880 = vld [vmem:[#allocation16 + $0xec] sm:$0xf]
        %v2881 = vld [vmem:[#allocation16 + $0xf0] sm:$0xf]
        %v2882 = vld [vmem:[#allocation16 + $0xf4] sm:$0xf]
        %v2883 = vld [vmem:[#allocation16 + $0xf8] sm:$0xf]
        %v2884 = vld [vmem:[#allocation16 + $0xfc] sm:$0xf]
        %v2885 = vld [vmem:[#allocation16 + $0x100] sm:$0xf]
        %v2886 = vld [vmem:[#allocation16 + $0x104] sm:$0xf]
        %v2887 = vld [vmem:[#allocation16 + $0x108] sm:$0xf]
        %v2888 = vld [vmem:[#allocation16 + $0x10c] sm:$0xf]
        %v2889 = vld [vmem:[#allocation16 + $0x110] sm:$0xf]
        %v2890 = vld [vmem:[#allocation16 + $0x114] sm:$0xf]
        %v2891 = vld [vmem:[#allocation16 + $0x118] sm:$0xf]
        %v2892 = vld [vmem:[#allocation16 + $0x11c] sm:$0xf]
        %v2893 = vld [vmem:[#allocation16 + $0x120] sm:$0xf]
        %v2894 = vld [vmem:[#allocation16 + $0x124] sm:$0xf]
        %v2895 = vld [vmem:[#allocation16 + $0x128] sm:$0xf]
        %v2896 = vld [vmem:[#allocation16 + $0x12c] sm:$0xf]
        %v2897 = vld [vmem:[#allocation16 + $0x130] sm:$0xf]
        %v2898 = vld [vmem:[#allocation16 + $0x134] sm:$0xf]
        %v2899 = vld [vmem:[#allocation16 + $0x138] sm:$0xf]
        %v2900 = vld [vmem:[#allocation16 + $0x13c] sm:$0xf]
        %v2901 = vld [vmem:[%s16] sm:$0x1]
        %v2903 = vlaneseq
        %v2904 = vshrl.u32 %v2903, 7
        %v2905 = vsub.s32 0, %v2904
        %v2906 = vrot.slane %v2901, %v2905
        %v2988 = vunpack.c.l.b16 %v2821
        %v2989 = vunpack.c.l.b16 %v2822
        %v2990 = vunpack.c.l.b16 %v2823
        %v2991 = vunpack.c.l.b16 %v2824
        %v2992 = vunpack.c.l.b16 %v2825
        %v2993 = vunpack.c.l.b16 %v2826
        %v2994 = vunpack.c.l.b16 %v2827
        %v2995 = vunpack.c.l.b16 %v2828
        %v2996 = vunpack.c.l.b16 %v2829
        %v2997 = vunpack.c.l.b16 %v2830
        %v2998 = vunpack.c.l.b16 %v2831
        %v2999 = vunpack.c.l.b16 %v2832
        %v3000 = vunpack.c.l.b16 %v2833
        %v3001 = vunpack.c.l.b16 %v2834
        %v3002 = vunpack.c.l.b16 %v2835
        %v3003 = vunpack.c.l.b16 %v2836
        %v3004 = vunpack.c.l.b16 %v2837
        %v3005 = vunpack.c.l.b16 %v2838
        %v3006 = vunpack.c.l.b16 %v2839
        %v3007 = vunpack.c.l.b16 %v2840
        %v3008 = vunpack.c.l.b16 %v2841
        %v3009 = vunpack.c.l.b16 %v2842
        %v3010 = vunpack.c.l.b16 %v2843
        %v3011 = vunpack.c.l.b16 %v2844
        %v3012 = vunpack.c.l.b16 %v2845
        %v3013 = vunpack.c.l.b16 %v2846
        %v3014 = vunpack.c.l.b16 %v2847
        %v3015 = vunpack.c.l.b16 %v2848
        %v3016 = vunpack.c.l.b16 %v2849
        %v3017 = vunpack.c.l.b16 %v2850
        %v3018 = vunpack.c.l.b16 %v2851
        %v3019 = vunpack.c.l.b16 %v2852
        %v3020 = vunpack.c.l.b16 %v2853
        %v3021 = vunpack.c.l.b16 %v2854
        %v3022 = vunpack.c.l.b16 %v2855
        %v3023 = vunpack.c.l.b16 %v2856
        %v3024 = vunpack.c.l.b16 %v2857
        %v3025 = vunpack.c.l.b16 %v2858
        %v3026 = vunpack.c.l.b16 %v2859
        %v3027 = vunpack.c.l.b16 %v2860
        %v3028 = vunpack.c.l.b16 %v2861
        %v3029 = vunpack.c.l.b16 %v2862
        %v3030 = vunpack.c.l.b16 %v2863
        %v3031 = vunpack.c.l.b16 %v2864
        %v3032 = vunpack.c.l.b16 %v2865
        %v3033 = vunpack.c.l.b16 %v2866
        %v3034 = vunpack.c.l.b16 %v2867
        %v3035 = vunpack.c.l.b16 %v2868
        %v3036 = vunpack.c.l.b16 %v2869
        %v3037 = vunpack.c.l.b16 %v2870
        %v3038 = vunpack.c.l.b16 %v2871
        %v3039 = vunpack.c.l.b16 %v2872
        %v3040 = vunpack.c.l.b16 %v2873
        %v3041 = vunpack.c.l.b16 %v2874
        %v3042 = vunpack.c.l.b16 %v2875
        %v3043 = vunpack.c.l.b16 %v2876
        %v3044 = vunpack.c.l.b16 %v2877
        %v3045 = vunpack.c.l.b16 %v2878
        %v3046 = vunpack.c.l.b16 %v2879
        %v3047 = vunpack.c.l.b16 %v2880
        %v3048 = vunpack.c.l.b16 %v2881
        %v3049 = vunpack.c.l.b16 %v2882
        %v3050 = vunpack.c.l.b16 %v2883
        %v3051 = vunpack.c.l.b16 %v2884
        %v3052 = vunpack.c.l.b16 %v2885
        %v3053 = vunpack.c.l.b16 %v2886
        %v3054 = vunpack.c.l.b16 %v2887
        %v3055 = vunpack.c.l.b16 %v2888
        %v3056 = vunpack.c.l.b16 %v2889
        %v3057 = vunpack.c.l.b16 %v2890
        %v3058 = vunpack.c.l.b16 %v2891
        %v3059 = vunpack.c.l.b16 %v2892
        %v3060 = vunpack.c.l.b16 %v2893
        %v3061 = vunpack.c.l.b16 %v2894
        %v3062 = vunpack.c.l.b16 %v2895
        %v3063 = vunpack.c.l.b16 %v2896
        %v3064 = vunpack.c.l.b16 %v2897
        %v3065 = vunpack.c.l.b16 %v2898
        %v3066 = vunpack.c.l.b16 %v2899
        %v3067 = vunpack.c.l.b16 %v2900
        %v3068 = vpack.c.b16 %v2989, %v2988
        %v3069 = vpack.c.b16 %v2991, %v2990
        %v3070 = vpack.c.b16 %v2993, %v2992
        %v3071 = vpack.c.b16 %v2995, %v2994
        %v3072 = vpack.c.b16 %v2997, %v2996
        %v3073 = vpack.c.b16 %v2999, %v2998
        %v3074 = vpack.c.b16 %v3001, %v3000
        %v3075 = vpack.c.b16 %v3003, %v3002
        %v3076 = vpack.c.b16 %v3005, %v3004
        %v3077 = vpack.c.b16 %v3007, %v3006
        %v3078 = vpack.c.b16 %v3009, %v3008
        %v3079 = vpack.c.b16 %v3011, %v3010
        %v3080 = vpack.c.b16 %v3013, %v3012
        %v3081 = vpack.c.b16 %v3015, %v3014
        %v3082 = vpack.c.b16 %v3017, %v3016
        %v3083 = vpack.c.b16 %v3019, %v3018
        %v3084 = vpack.c.b16 %v3021, %v3020
        %v3085 = vpack.c.b16 %v3023, %v3022
        %v3086 = vpack.c.b16 %v3025, %v3024
        %v3087 = vpack.c.b16 %v3027, %v3026
        %v3088 = vpack.c.b16 %v3029, %v3028
        %v3089 = vpack.c.b16 %v3031, %v3030
        %v3090 = vpack.c.b16 %v3033, %v3032
        %v3091 = vpack.c.b16 %v3035, %v3034
        %v3092 = vpack.c.b16 %v3037, %v3036
        %v3093 = vpack.c.b16 %v3039, %v3038
        %v3094 = vpack.c.b16 %v3041, %v3040
        %v3095 = vpack.c.b16 %v3043, %v3042
        %v3096 = vpack.c.b16 %v3045, %v3044
        %v3097 = vpack.c.b16 %v3047, %v3046
        %v3098 = vpack.c.b16 %v3049, %v3048
        %v3099 = vpack.c.b16 %v3051, %v3050
        %v3100 = vpack.c.b16 %v3053, %v3052
        %v3101 = vpack.c.b16 %v3055, %v3054
        %v3102 = vpack.c.b16 %v3057, %v3056
        %v3103 = vpack.c.b16 %v3059, %v3058
        %v3104 = vpack.c.b16 %v3061, %v3060
        %v3105 = vpack.c.b16 %v3063, %v3062
        %v3106 = vpack.c.b16 %v3065, %v3064
        %v3107 = vpack.c.b16 %v3067, %v3066
        %3148 = vmatprep.subr.bf16.mxu0 0
        %3149 = vmatpush1.bf16.msra.mxu0 %v3068
        %3150 = vmatprep.subr.bf16.mxu0 0
        %3151 = vmatpush1.bf16.msra.mxu0 %v3069
        %3152 = vmatprep.subr.bf16.mxu0 0
        %3153 = vmatpush1.bf16.msra.mxu0 %v3070
        %3154 = vmatprep.subr.bf16.mxu0 0
        %3155 = vmatpush1.bf16.msra.mxu0 %v3071
        %3156 = vmatprep.subr.bf16.mxu0 0
        %3157 = vmatpush1.bf16.msra.mxu0 %v3072
        %3158 = vmatprep.subr.bf16.mxu0 0
        %3159 = vmatpush1.bf16.msra.mxu0 %v3073
        %3160 = vmatprep.subr.bf16.mxu0 0
        %3161 = vmatpush1.bf16.msra.mxu0 %v3074
        %3162 = vmatprep.subr.bf16.mxu0 0
        %3163 = vmatpush1.bf16.msra.mxu0 %v3075
        %3164 = vmatprep.subr.bf16.mxu0 0
        %3165 = vmatpush1.bf16.msra.mxu0 %v3076
        %3166 = vmatprep.subr.bf16.mxu0 0
        %3167 = vmatpush1.bf16.msra.mxu0 %v3077
        %3168 = vmatprep.subr.bf16.mxu0 0
        %3169 = vmatpush1.bf16.msra.mxu0 %v3078
        %3170 = vmatprep.subr.bf16.mxu0 0
        %3171 = vmatpush1.bf16.msra.mxu0 %v3079
        %3172 = vmatprep.subr.bf16.mxu0 0
        %3173 = vmatpush1.bf16.msra.mxu0 %v3080
        %3174 = vmatprep.subr.bf16.mxu0 0
        %3175 = vmatpush1.bf16.msra.mxu0 %v3081
        %3176 = vmatprep.subr.bf16.mxu0 0
        %3177 = vmatpush1.bf16.msra.mxu0 %v3082
        %3178 = vmatprep.subr.bf16.mxu0 0
        %3179 = vmatpush1.bf16.msra.mxu0 %v3083
        %3180 = vmatprep.mubr.bf16.mxu0 %v2817
        %3181 = vmatmul.mubr.bf16.gmra.mrb[0].mxu0 %v2816
        %v3182 = vpop.f32.mrb[0].mxu0
        %v3183 = vadd.f32 %v2906, %v3182
        %v3184 = vpop.f32.mrb[0].mxu0
        %v3185 = vpop.f32.mrb[0].mxu0
        %v3186 = vadd.f32 %v2906, %v3185
        %v3187 = vpop.f32.mrb[0].mxu0
        %3188 = vdwg.mxu0
        %3189 = vmatprep.subr.bf16.mxu0 0
        %3190 = vmatpush1.bf16.msra.mxu0 %v3084
        %3191 = vmatprep.subr.bf16.mxu0 0
        %3192 = vmatpush1.bf16.msra.mxu0 %v3085
        %3193 = vmatprep.subr.bf16.mxu0 0
        %3194 = vmatpush1.bf16.msra.mxu0 %v3086
        %3195 = vmatprep.subr.bf16.mxu0 0
        %3196 = vmatpush1.bf16.msra.mxu0 %v3087
        %3197 = vmatprep.subr.bf16.mxu0 0
        %3198 = vmatpush1.bf16.msra.mxu0 %v3088
        %3199 = vmatprep.subr.bf16.mxu0 0
        %3200 = vmatpush1.bf16.msra.mxu0 %v3089
        %3201 = vmatprep.subr.bf16.mxu0 0
        %3202 = vmatpush1.bf16.msra.mxu0 %v3090
        %3203 = vmatprep.subr.bf16.mxu0 0
        %3204 = vmatpush1.bf16.msra.mxu0 %v3091
        %3205 = vmatprep.subr.bf16.mxu0 0
        %3206 = vmatpush1.bf16.msra.mxu0 %v3092
        %3207 = vmatprep.subr.bf16.mxu0 0
        %3208 = vmatpush1.bf16.msra.mxu0 %v3093
        %3209 = vmatprep.subr.bf16.mxu0 0
        %3210 = vmatpush1.bf16.msra.mxu0 %v3094
        %3211 = vmatprep.subr.bf16.mxu0 0
        %3212 = vmatpush1.bf16.msra.mxu0 %v3095
        %3213 = vmatprep.subr.bf16.mxu0 0
        %3214 = vmatpush1.bf16.msra.mxu0 %v3096
        %3215 = vmatprep.subr.bf16.mxu0 0
        %3216 = vmatpush1.bf16.msra.mxu0 %v3097
        %3217 = vmatprep.subr.bf16.mxu0 0
        %3218 = vmatpush1.bf16.msra.mxu0 %v3098
        %3219 = vmatprep.subr.bf16.mxu0 0
        %3220 = vmatpush1.bf16.msra.mxu0 %v3099
        %3221 = vmatprep.mubr.bf16.mxu0 %v2819
        %3222 = vmatmul.mubr.bf16.gmra.mrb[0].mxu0 %v2818
        %v3223 = vpop.f32.mrb[0].mxu0
        %v3224 = vadd.f32 %v3183, %v3223
        %v3225 = vpop.f32.mrb[0].mxu0
        %v3226 = vpop.f32.mrb[0].mxu0
        %v3227 = vadd.f32 %v3186, %v3226
        %v3228 = vpop.f32.mrb[0].mxu0
        %3229 = vdwg.mxu0
        %3230 = vmatprep.subr.bf16.mxu0 0
        %3231 = vmatpush1.bf16.msra.mxu0 %v3100
        %3232 = vmatprep.subr.bf16.mxu0 0
        %3233 = vmatpush1.bf16.msra.mxu0 %v3101
        %3234 = vmatprep.subr.bf16.mxu0 0
        %3235 = vmatpush1.bf16.msra.mxu0 %v3102
        %3236 = vmatprep.subr.bf16.mxu0 0
        %3237 = vmatpush1.bf16.msra.mxu0 %v3103
        %3238 = vmatprep.subr.bf16.mxu0 0
        %3239 = vmatpush1.bf16.msra.mxu0 %v3104
        %3240 = vmatprep.subr.bf16.mxu0 0
        %3241 = vmatpush1.bf16.msra.mxu0 %v3105
        %3242 = vmatprep.subr.bf16.mxu0 0
        %3243 = vmatpush1.bf16.msra.mxu0 %v3106
        %3244 = vmatprep.subr.bf16.mxu0 0
        %3245 = vmatpush1.bf16.msra.mxu0 %v3107
        %3246 = vmatprep.subr.bf16.mxu0 0
        %3247 = vmatpush1.bf16.msra.mxu0 0
        %3248 = vmatprep.subr.bf16.mxu0 0
        %3249 = vmatpush1.bf16.msra.mxu0 0
        %3250 = vmatprep.subr.bf16.mxu0 0
        %3251 = vmatpush1.bf16.msra.mxu0 0
        %3252 = vmatprep.subr.bf16.mxu0 0
        %3253 = vmatpush1.bf16.msra.mxu0 0
        %3254 = vmatprep.subr.bf16.mxu0 0
        %3255 = vmatpush1.bf16.msra.mxu0 0
        %3256 = vmatprep.subr.bf16.mxu0 0
        %3257 = vmatpush1.bf16.msra.mxu0 0
        %3258 = vmatprep.subr.bf16.mxu0 0
        %3259 = vmatpush1.bf16.msra.mxu0 0
        %3260 = vmatprep.subr.bf16.mxu0 0
        %3261 = vmatpush1.bf16.msra.mxu0 0
        %3262 = vmatprep.mubr.bf16.mxu0 0
        %3263 = vmatmul.mubr.bf16.gmra.mrb[0].mxu0 %v2820
        %v3264 = vpop.f32.mrb[0].mxu0
        %v3265 = vadd.f32 %v3224, %v3264
        %v3266 = vpop.f32.mrb[0].mxu0
        %v3267 = vpop.f32.mrb[0].mxu0
        %v3268 = vadd.f32 %v3227, %v3267
        %v3269 = vpop.f32.mrb[0].mxu0
        %3270 = vdwg.mxu0
        %3271 = vst [vmem:[%s682] sm:$0xff] %v3265
        %3272 = vst [vmem:[%s682 + $0x8] sm:$0xff] %v3268
        %s3273 = sand.u32 %s408, 1
        %s3274 = scalar_lea.sflag [#allocation4], %s3273
        %s3275 = sand.u32 %s408, 1
        %s3276 = smul.addr %s3275, 16
        %s3277 = scalar_lea.vmem [#allocation17], %s3276
        // Predicated region
        $region125: #{tpu_custom_call.1} parent=87 // pred_check
          %p3278 = pneg %p418
        $region126: #{tpu_custom_call.1} parent=87 // pred_check_branch
          %3280 = sbr.rel (%p3278) target = $region128
        $region127: #{tpu_custom_call.1} parent=87 // pred_region
          %s3281 = smul.u32 2, %s38
          %s3283 = ssub.s32 256, 256
          %3284 = vsyncadd %s3274, %s3283
          %s3285 = smul.addr %s3281, 128
          %s3286 = scalar_lea.hbm %s17, %s3285
          %s3287 = sshll.u32 %s3277, 4
          %s3288 = int_to_ptr.vmem [resolvable:$true] %s3287
          %3293 = dma.vmem_to_hbm [thread:$0]  %s3288, 256, %s3286, %s3274, 128, 128, 8
        $region128: #{tpu_custom_call.1} parent=87 // pred_fallthru
          _
      $region88: #{tpu_custom_call.1} parent=5 // pred_fallthru
        _
      %p3294 = scmp.le.s32.totalorder 2, %s33
      // Predicated region
      $region129: #{tpu_custom_call.1} parent=5 // pred_check
        %p3295 = pneg %p3294
      $region130: #{tpu_custom_call.1} parent=5 // pred_check_branch
        %3297 = sbr.rel (%p3295) target = $region132
      $region131: #{tpu_custom_call.1} parent=5 // pred_region
        %s3298 = ssub.s32 %s33, 2
        // Predicated region
        $region133: #{tpu_custom_call.1} parent=131 // pred_check
          %p3299 = pneg %p424
        $region134: #{tpu_custom_call.1} parent=131 // pred_check_branch
          %3301 = sbr.rel (%p3299) target = $region136
        $region135: #{tpu_custom_call.1} parent=131 // pred_region
          %s3302 = sand.u32 %s409, 1
          %s3303 = scalar_lea.sflag [#allocation4], %s3302
          %s3304 = sand.u32 %s409, 1
          %s3305 = smul.addr %s3304, 16
          %s3306 = scalar_lea.vmem [#allocation17], %s3305
          %3307 = dma.done %s3303, 256
        $region136: #{tpu_custom_call.1} parent=131 // pred_fallthru
          _
      $region132: #{tpu_custom_call.1} parent=5 // pred_fallthru
        _
    $region6: #{tpu_custom_call.1} parent=1 // loop_footer
      %s37 = sadd.s32 1, %s33
    $region7: #{tpu_custom_call.1} parent=1 // loop_footer_branch
      %32 = sbr.rel target = $region3
    $region8: #{tpu_custom_call.1} parent=1 // loop_exit
      _
    %3308 = vsyncpa [#allocation3], 1
    %s3309 = scalar_lea.sflag [#allocation3], 1
    %3310 = vsyncpa %s3309, 1
    %3311 = vsyncpa [#allocation6], 1
    %3312 = vsyncpa [#allocation9], 1
    %3313 = vsyncpa [#allocation12], 1
    %3314 = vsyncpa [#allocation15], 1
    %3315 = vsyncpa [#allocation4], 1
    %s3316 = scalar_lea.sflag [#allocation4], 1
    %3317 = vsyncpa %s3316, 1

// kernel: tpu_custom_call.1
$region0: #{tpu_custom_call.1}
  #allocation0 [shape = 'u32[]', space=smem, size = 0x4, offset = 0x4, fixed_abs, tag = 'smem constant byte address 0x4 - core index']
  #allocation1 [shape = 'u32[144,128]{1,0:T(1,128)}', space=vmem, size = 0x12000, scoped, tag = 'internal scratch']
  %s0 = inlined_call_operand.hbm [shape: bf16[32,32], index: 0, kind: input, shape index: {}]
  %s1 = inlined_call_operand.hbm [shape: bf16[32,768], index: 1, kind: input, shape index: {}]
  %s2 = inlined_call_operand.vmem [shape: f32[1,768], index: 2, kind: input, shape index: {}]
  %s3 = inlined_call_operand.hbm [shape: bf16[640,256], index: 3, kind: input, shape index: {}]
  %s4 = inlined_call_operand.vmem [shape: f32[1,256], index: 4, kind: input, shape index: {}]
  %s5 = inlined_call_operand.hbm [shape: bf16[256,128], index: 5, kind: input, shape index: {}]
  %s6 = inlined_call_operand.vmem [shape: f32[1,128], index: 6, kind: input, shape index: {}]
  %s7 = inlined_call_operand.hbm [shape: bf16[128,128], index: 7, kind: input, shape index: {}]
  %s8 = inlined_call_operand.vmem [shape: f32[1,128], index: 8, kind: input, shape index: {}]
  %s9 = inlined_call_operand.hbm [shape: bf16[128,128], index: 9, kind: input, shape index: {}]
  %s10 = inlined_call_operand.vmem [shape: f32[1,128], index: 10, kind: input, shape index: {}]
  %s11 = inlined_call_operand.hbm [shape: bf16[128,256], index: 11, kind: input, shape index: {}]
  %s12 = inlined_call_operand.vmem [shape: f32[1,256], index: 12, kind: input, shape index: {}]
  %s13 = inlined_call_operand.hbm [shape: bf16[256,640], index: 13, kind: input, shape index: {}]
  %s14 = inlined_call_operand.vmem [shape: f32[1,640], index: 14, kind: input, shape index: {}]
  %s15 = inlined_call_operand.hbm [shape: bf16[640,128], index: 15, kind: input, shape index: {}]
  %s16 = inlined_call_operand.vmem [shape: f32[1,128], index: 16, kind: input, shape index: {}]
  %s17 = inlined_call_operand.hbm [shape: f32[32,128], index: 17, kind: output, shape index: {}]
  %s18 = sld [smem:[#allocation0]]
  $region137: #{tpu_custom_call.1} parent=0
    _
  %s20 = ssub.s32 1, %s18
  %s21 = scalar_select 0, %s20, %s18
  $region1: #{tpu_custom_call.1} parent=0
    #allocation2 [shape = 'u8[8192]{0}', space=vmem, size = 0x2000, scoped, tag = 'input window, operand 0']
    #allocation3 [shape = 's32[2]{0}', space=sflag, size = 0x8, scoped, tag = 'scoped memory for tpu_custom_call.1']
    #allocation4 [shape = 's32[2]{0}', space=sflag, size = 0x8, scoped, tag = 'scoped memory for tpu_custom_call.1']
    #allocation5 [shape = 'u8[49152]{0}', space=vmem, size = 0xc000, scoped, tag = 'input window, operand 1, single buffered']
    #allocation6 [shape = 's32[1]{0}', space=sflag, size = 0x4, scoped, tag = 'scoped memory for tpu_custom_call.1']
    #allocation7 [shape = 'u8[327680]{0}', space=vmem, size = 0x50000, scoped, tag = 'input window, operand 3, single buffered']
    #allocation8 [shape = 'u8[65536]{0}', space=vmem, size = 0x10000, scoped, tag = 'input window, operand 5, single buffered']
    #allocation9 [shape = 's32[1]{0}', space=sflag, size = 0x4, scoped, tag = 'scoped memory for tpu_custom_call.1']
    #allocation10 [shape = 'u8[32768]{0}', space=vmem, size = 0x8000, scoped, tag = 'input window, operand 7, single buffered']
    #allocation11 [shape = 'u8[32768]{0}', space=vmem, size = 0x8000, scoped, tag = 'input window, operand 9, single buffered']
    #allocation12 [shape = 's32[1]{0}', space=sflag, size = 0x4, scoped, tag = 'scoped memory for tpu_custom_call.1']
    #allocation13 [shape = 'u8[65536]{0}', space=vmem, size = 0x10000, scoped, tag = 'input window, operand 11, single buffered']
    #allocation14 [shape = 'u8[327680]{0}', space=vmem, size = 0x50000, scoped, tag = 'input window, operand 13, single buffered']
    #allocation15 [shape = 's32[1]{0}', space=sflag, size = 0x4, scoped, tag = 'scoped memory for tpu_custom_call.1']
    #allocation16 [shape = 'u8[163840]{0}', space=vmem, size = 0x28000, scoped, tag = 'input window, operand 15, single buffered']
    #allocation17 [shape = 'u8[16384]{0}', space=vmem, size = 0x4000, scoped, tag = 'output window, operand 0']
    %22 = vsyncpa [#allocation3], 0
    %s23 = scalar_lea.sflag [#allocation3], 1
    %24 = vsyncpa %s23, 0
    %25 = vsyncpa [#allocation6], 0
    %26 = vsyncpa [#allocation9], 0
    %27 = vsyncpa [#allocation12], 0
    %28 = vsyncpa [#allocation15], 0
    %29 = vsyncpa [#allocation4], 0
    %s30 = scalar_lea.sflag [#allocation4], 1
    %31 = vsyncpa %s30, 0
    loop: start=0, step=1, limit=4
    $region2: #{tpu_custom_call.1} parent=1 // loop_pre_header
      _
    $region3: #{tpu_custom_call.1} parent=1 // loop_header
      %s33 = sphi 0, %s37
      %p34 = scmp.ge.s32.totalorder %s33, 4
      %s43 = sphi 0, %s45
      %s46 = sphi 0, %s43
      %s47 = sphi 0, %s46
      %s63 = sphi 0, %s47
      %s67 = sphi 0, %s67
      %s69 = sphi 0, %s67
      %s70 = sphi 0, %s69
      %s84 = sphi 0, %s70
      %s88 = sphi 0, %s88
      %s90 = sphi 0, %s88
      %s91 = sphi 0, %s90
      %s105 = sphi 0, %s91
      %s109 = sphi 0, %s109
      %s111 = sphi 0, %s109
      %s112 = sphi 0, %s111
      %s126 = sphi 0, %s112
      %s130 = sphi 0, %s130
      %s132 = sphi 0, %s130
      %s133 = sphi 0, %s132
      %s147 = sphi 0, %s133
      %s151 = sphi 0, %s151
      %s153 = sphi 0, %s151
      %s154 = sphi 0, %s153
      %s168 = sphi 0, %s154
      %s172 = sphi 0, %s172
      %s174 = sphi 0, %s172
      %s175 = sphi 0, %s174
      %s189 = sphi 0, %s175
      %s193 = sphi 0, %s193
      %s195 = sphi 0, %s193
      %s196 = sphi 0, %s195
      %s210 = sphi 0, %s196
      %s214 = sphi 0, %s214
      %s216 = sphi 0, %s214
      %s217 = sphi 0, %s216
      %s231 = sphi 0, %s217
      %s235 = sphi 0, %s235
      %s237 = sphi 0, %s235
      %s238 = sphi 0, %s237
      %s252 = sphi 0, %s238
      %s256 = sphi 0, %s256
      %s258 = sphi 0, %s256
      %s259 = sphi 0, %s258
      %s273 = sphi 0, %s259
      %s277 = sphi 0, %s277
      %s279 = sphi 0, %s277
      %s280 = sphi 0, %s279
      %s294 = sphi 0, %s280
      %s298 = sphi 0, %s298
      %s300 = sphi 0, %s298
      %s301 = sphi 0, %s300
      %s315 = sphi 0, %s301
      %s319 = sphi 0, %s319
      %s321 = sphi 0, %s319
      %s322 = sphi 0, %s321
      %s336 = sphi 0, %s322
      %s340 = sphi 0, %s340
      %s342 = sphi 0, %s340
      %s343 = sphi 0, %s342
      %s357 = sphi 0, %s343
      %s361 = sphi 0, %s361
      %s363 = sphi 0, %s361
      %s364 = sphi 0, %s363
      %s378 = sphi 0, %s364
      %s382 = sphi 0, %s382
      %s384 = sphi 0, %s382
      %s385 = sphi 0, %s384
      %s399 = sphi 0, %s385
      %s405 = sphi 0, %s407
      %s408 = sphi 0, %s405
      %s409 = sphi 0, %s408
      %s425 = sphi 0, %s409
    $region4: #{tpu_custom_call.1} parent=1 // loop_header_branch
      %36 = sbr.rel (%p34) target = $region8
    $region5: #{tpu_custom_call.1} parent=1 // loop_body
      %s38 = ssub.s32 %s33, 1
      %s39 = ssub.s32 %s33, 2
      %s40 = sadd.s32 %s33, 1
      %s41 = ssub.s32 %s33, %s40
      %p42 = scmp.eq.s32.totalorder %s41, 0
      %s44 = sadd.s32 %s43, 1
      %s45 = scalar_select %p42, %s43, %s44
      %p48 = pneg %p42
      %p49 = scmp.eq.s32.totalorder %s33, 1
      %p50 = por %p48, %p49
      %p51 = scmp.ne.s32.totalorder %s43, %s46
      %p52 = scmp.eq.s32.totalorder %s33, 0
      %p53 = por %p51, %p52
      %p54 = scmp.ne.s32.totalorder %s43, %s46
      %p55 = scmp.eq.s32.totalorder %s38, 1
      %p56 = por %p54, %p55
      %p57 = scmp.ne.s32.totalorder %s46, %s47
      %p58 = scmp.eq.s32.totalorder %s38, 0
      %p59 = por %p57, %p58
      %p60 = scmp.ne.s32.totalorder %s46, %s47
      %p61 = scmp.eq.s32.totalorder %s39, 1
      %p62 = por %p60, %p61
      %p64 = scmp.ne.s32.totalorder %s47, %s63
      %p65 = scmp.eq.s32.totalorder %s39, 0
      %p66 = por %p64, %p65
      %s68 = sadd.s32 %s67, 1
      %p71 = scmp.eq.s32.totalorder %s33, 1
      %p72 = scmp.ne.s32.totalorder %s67, %s69
      %p73 = scmp.eq.s32.totalorder %s33, 0
      %p74 = por %p72, %p73
      %p75 = scmp.ne.s32.totalorder %s67, %s69
      %p76 = scmp.eq.s32.totalorder %s38, 1
      %p77 = por %p75, %p76
      %p78 = scmp.ne.s32.totalorder %s69, %s70
      %p79 = scmp.eq.s32.totalorder %s38, 0
      %p80 = por %p78, %p79
      %p81 = scmp.ne.s32.totalorder %s69, %s70
      %p82 = scmp.eq.s32.totalorder %s39, 1
      %p83 = por %p81, %p82
      %p85 = scmp.ne.s32.totalorder %s70, %s84
      %p86 = scmp.eq.s32.totalorder %s39, 0
      %p87 = por %p85, %p86
      %s89 = sadd.s32 %s88, 1
      %p92 = scmp.eq.s32.totalorder %s33, 1
      %p93 = scmp.ne.s32.totalorder %s88, %s90
      %p94 = scmp.eq.s32.totalorder %s33, 0
      %p95 = por %p93, %p94
      %p96 = scmp.ne.s32.totalorder %s88, %s90
      %p97 = scmp.eq.s32.totalorder %s38, 1
      %p98 = por %p96, %p97
      %p99 = scmp.ne.s32.totalorder %s90, %s91
      %p100 = scmp.eq.s32.totalorder %s38, 0
      %p101 = por %p99, %p100
      %p102 = scmp.ne.s32.totalorder %s90, %s91
      %p103 = scmp.eq.s32.totalorder %s39, 1
      %p104 = por %p102, %p103
      %p106 = scmp.ne.s32.totalorder %s91, %s105
      %p107 = scmp.eq.s32.totalorder %s39, 0
      %p108 = por %p106, %p107
      %s110 = sadd.s32 %s109, 1
      %p113 = scmp.eq.s32.totalorder %s33, 1
      %p114 = scmp.ne.s32.totalorder %s109, %s111
      %p115 = scmp.eq.s32.totalorder %s33, 0
      %p116 = por %p114, %p115
      %p117 = scmp.ne.s32.totalorder %s109, %s111
      %p118 = scmp.eq.s32.totalorder %s38, 1
      %p119 = por %p117, %p118
      %p120 = scmp.ne.s32.totalorder %s111, %s112
      %p121 = scmp.eq.s32.totalorder %s38, 0
      %p122 = por %p120, %p121
      %p123 = scmp.ne.s32.totalorder %s111, %s112
      %p124 = scmp.eq.s32.totalorder %s39, 1
      %p125 = por %p123, %p124
      %p127 = scmp.ne.s32.totalorder %s112, %s126
      %p128 = scmp.eq.s32.totalorder %s39, 0
      %p129 = por %p127, %p128
      %s131 = sadd.s32 %s130, 1
      %p134 = scmp.eq.s32.totalorder %s33, 1
      %p135 = scmp.ne.s32.totalorder %s130, %s132
      %p136 = scmp.eq.s32.totalorder %s33, 0
      %p137 = por %p135, %p136
      %p138 = scmp.ne.s32.totalorder %s130, %s132
      %p139 = scmp.eq.s32.totalorder %s38, 1
      %p140 = por %p138, %p139
      %p141 = scmp.ne.s32.totalorder %s132, %s133
      %p142 = scmp.eq.s32.totalorder %s38, 0
      %p143 = por %p141, %p142
      %p144 = scmp.ne.s32.totalorder %s132, %s133
      %p145 = scmp.eq.s32.totalorder %s39, 1
      %p146 = por %p144, %p145
      %p148 = scmp.ne.s32.totalorder %s133, %s147
      %p149 = scmp.eq.s32.totalorder %s39, 0
      %p150 = por %p148, %p149
      %s152 = sadd.s32 %s151, 1
      %p155 = scmp.eq.s32.totalorder %s33, 1
      %p156 = scmp.ne.s32.totalorder %s151, %s153
      %p157 = scmp.eq.s32.totalorder %s33, 0
      %p158 = por %p156, %p157
      %p159 = scmp.ne.s32.totalorder %s151, %s153
      %p160 = scmp.eq.s32.totalorder %s38, 1
      %p161 = por %p159, %p160
      %p162 = scmp.ne.s32.totalorder %s153, %s154
      %p163 = scmp.eq.s32.totalorder %s38, 0
      %p164 = por %p162, %p163
      %p165 = scmp.ne.s32.totalorder %s153, %s154
      %p166 = scmp.eq.s32.totalorder %s39, 1
      %p167 = por %p165, %p166
      %p169 = scmp.ne.s32.totalorder %s154, %s168
      %p170 = scmp.eq.s32.totalorder %s39, 0
      %p171 = por %p169, %p170
      %s173 = sadd.s32 %s172, 1
      %p176 = scmp.eq.s32.totalorder %s33, 1
      %p177 = scmp.ne.s32.totalorder %s172, %s174
      %p178 = scmp.eq.s32.totalorder %s33, 0
      %p179 = por %p177, %p178
      %p180 = scmp.ne.s32.totalorder %s172, %s174
      %p181 = scmp.eq.s32.totalorder %s38, 1
      %p182 = por %p180, %p181
      %p183 = scmp.ne.s32.totalorder %s174, %s175
      %p184 = scmp.eq.s32.totalorder %s38, 0
      %p185 = por %p183, %p184
      %p186 = scmp.ne.s32.totalorder %s174, %s175
      %p187 = scmp.eq.s32.totalorder %s39, 1
      %p188 = por %p186, %p187
      %p190 = scmp.ne.s32.totalorder %s175, %s189
      %p191 = scmp.eq.s32.totalorder %s39, 0
      %p192 = por %p190, %p191
      %s194 = sadd.s32 %s193, 1
      %p197 = scmp.eq.s32.totalorder %s33, 1
      %p198 = scmp.ne.s32.totalorder %s193, %s195
      %p199 = scmp.eq.s32.totalorder %s33, 0
      %p200 = por %p198, %p199
      %p201 = scmp.ne.s32.totalorder %s193, %s195
      %p202 = scmp.eq.s32.totalorder %s38, 1
      %p203 = por %p201, %p202
      %p204 = scmp.ne.s32.totalorder %s195, %s196
      %p205 = scmp.eq.s32.totalorder %s38, 0
      %p206 = por %p204, %p205
      %p207 = scmp.ne.s32.totalorder %s195, %s196
      %p208 = scmp.eq.s32.totalorder %s39, 1
      %p209 = por %p207, %p208
      %p211 = scmp.ne.s32.totalorder %s196, %s210
      %p212 = scmp.eq.s32.totalorder %s39, 0
      %p213 = por %p211, %p212
      %s215 = sadd.s32 %s214, 1
      %p218 = scmp.eq.s32.totalorder %s33, 1
      %p219 = scmp.ne.s32.totalorder %s214, %s216
      %p220 = scmp.eq.s32.totalorder %s33, 0
      %p221 = por %p219, %p220
      %p222 = scmp.ne.s32.totalorder %s214, %s216
      %p223 = scmp.eq.s32.totalorder %s38, 1
      %p224 = por %p222, %p223
      %p225 = scmp.ne.s32.totalorder %s216, %s217
      %p226 = scmp.eq.s32.totalorder %s38, 0
      %p227 = por %p225, %p226
      %p228 = scmp.ne.s32.totalorder %s216, %s217
      %p229 = scmp.eq.s32.totalorder %s39, 1
      %p230 = por %p228, %p229
      %p232 = scmp.ne.s32.totalorder %s217, %s231
      %p233 = scmp.eq.s32.totalorder %s39, 0
      %p234 = por %p232, %p233
      %s236 = sadd.s32 %s235, 1
      %p239 = scmp.eq.s32.totalorder %s33, 1
      %p240 = scmp.ne.s32.totalorder %s235, %s237
      %p241 = scmp.eq.s32.totalorder %s33, 0
      %p242 = por %p240, %p241
      %p243 = scmp.ne.s32.totalorder %s235, %s237
      %p244 = scmp.eq.s32.totalorder %s38, 1
      %p245 = por %p243, %p244
      %p246 = scmp.ne.s32.totalorder %s237, %s238
      %p247 = scmp.eq.s32.totalorder %s38, 0
      %p248 = por %p246, %p247
      %p249 = scmp.ne.s32.totalorder %s237, %s238
      %p250 = scmp.eq.s32.totalorder %s39, 1
      %p251 = por %p249, %p250
      %p253 = scmp.ne.s32.totalorder %s238, %s252
      %p254 = scmp.eq.s32.totalorder %s39, 0
      %p255 = por %p253, %p254
      %s257 = sadd.s32 %s256, 1
      %p260 = scmp.eq.s32.totalorder %s33, 1
      %p261 = scmp.ne.s32.totalorder %s256, %s258
      %p262 = scmp.eq.s32.totalorder %s33, 0
      %p263 = por %p261, %p262
      %p264 = scmp.ne.s32.totalorder %s256, %s258
      %p265 = scmp.eq.s32.totalorder %s38, 1
      %p266 = por %p264, %p265
      %p267 = scmp.ne.s32.totalorder %s258, %s259
      %p268 = scmp.eq.s32.totalorder %s38, 0
      %p269 = por %p267, %p268
      %p270 = scmp.ne.s32.totalorder %s258, %s259
      %p271 = scmp.eq.s32.totalorder %s39, 1
      %p272 = por %p270, %p271
      %p274 = scmp.ne.s32.totalorder %s259, %s273
      %p275 = scmp.eq.s32.totalorder %s39, 0
      %p276 = por %p274, %p275
      %s278 = sadd.s32 %s277, 1
      %p281 = scmp.eq.s32.totalorder %s33, 1
      %p282 = scmp.ne.s32.totalorder %s277, %s279
      %p283 = scmp.eq.s32.totalorder %s33, 0
      %p284 = por %p282, %p283
      %p285 = scmp.ne.s32.totalorder %s277, %s279
      %p286 = scmp.eq.s32.totalorder %s38, 1
      %p287 = por %p285, %p286
      %p288 = scmp.ne.s32.totalorder %s279, %s280
      %p289 = scmp.eq.s32.totalorder %s38, 0
      %p290 = por %p288, %p289
      %p291 = scmp.ne.s32.totalorder %s279, %s280
      %p292 = scmp.eq.s32.totalorder %s39, 1
      %p293 = por %p291, %p292
      %p295 = scmp.ne.s32.totalorder %s280, %s294
      %p296 = scmp.eq.s32.totalorder %s39, 0
      %p297 = por %p295, %p296
      %s299 = sadd.s32 %s298, 1
      %p302 = scmp.eq.s32.totalorder %s33, 1
      %p303 = scmp.ne.s32.totalorder %s298, %s300
      %p304 = scmp.eq.s32.totalorder %s33, 0
      %p305 = por %p303, %p304
      %p306 = scmp.ne.s32.totalorder %s298, %s300
      %p307 = scmp.eq.s32.totalorder %s38, 1
      %p308 = por %p306, %p307
      %p309 = scmp.ne.s32.totalorder %s300, %s301
      %p310 = scmp.eq.s32.totalorder %s38, 0
      %p311 = por %p309, %p310
      %p312 = scmp.ne.s32.totalorder %s300, %s301
      %p313 = scmp.eq.s32.totalorder %s39, 1
      %p314 = por %p312, %p313
      %p316 = scmp.ne.s32.totalorder %s301, %s315
      %p317 = scmp.eq.s32.totalorder %s39, 0
      %p318 = por %p316, %p317
      %s320 = sadd.s32 %s319, 1
      %p323 = scmp.eq.s32.totalorder %s33, 1
      %p324 = scmp.ne.s32.totalorder %s319, %s321
      %p325 = scmp.eq.s32.totalorder %s33, 0
      %p326 = por %p324, %p325
      %p327 = scmp.ne.s32.totalorder %s319, %s321
      %p328 = scmp.eq.s32.totalorder %s38, 1
      %p329 = por %p327, %p328
      %p330 = scmp.ne.s32.totalorder %s321, %s322
      %p331 = scmp.eq.s32.totalorder %s38, 0
      %p332 = por %p330, %p331
      %p333 = scmp.ne.s32.totalorder %s321, %s322
      %p334 = scmp.eq.s32.totalorder %s39, 1
      %p335 = por %p333, %p334
      %p337 = scmp.ne.s32.totalorder %s322, %s336
      %p338 = scmp.eq.s32.totalorder %s39, 0
      %p339 = por %p337, %p338
      %s341 = sadd.s32 %s340, 1
      %p344 = scmp.eq.s32.totalorder %s33, 1
      %p345 = scmp.ne.s32.totalorder %s340, %s342
      %p346 = scmp.eq.s32.totalorder %s33, 0
      %p347 = por %p345, %p346
      %p348 = scmp.ne.s32.totalorder %s340, %s342
      %p349 = scmp.eq.s32.totalorder %s38, 1
      %p350 = por %p348, %p349
      %p351 = scmp.ne.s32.totalorder %s342, %s343
      %p352 = scmp.eq.s32.totalorder %s38, 0
      %p353 = por %p351, %p352
      %p354 = scmp.ne.s32.totalorder %s342, %s343
      %p355 = scmp.eq.s32.totalorder %s39, 1
      %p356 = por %p354, %p355
      %p358 = scmp.ne.s32.totalorder %s343, %s357
      %p359 = scmp.eq.s32.totalorder %s39, 0
      %p360 = por %p358, %p359
      %s362 = sadd.s32 %s361, 1
      %p365 = scmp.eq.s32.totalorder %s33, 1
      %p366 = scmp.ne.s32.totalorder %s361, %s363
      %p367 = scmp.eq.s32.totalorder %s33, 0
      %p368 = por %p366, %p367
      %p369 = scmp.ne.s32.totalorder %s361, %s363
      %p370 = scmp.eq.s32.totalorder %s38, 1
      %p371 = por %p369, %p370
      %p372 = scmp.ne.s32.totalorder %s363, %s364
      %p373 = scmp.eq.s32.totalorder %s38, 0
      %p374 = por %p372, %p373
      %p375 = scmp.ne.s32.totalorder %s363, %s364
      %p376 = scmp.eq.s32.totalorder %s39, 1
      %p377 = por %p375, %p376
      %p379 = scmp.ne.s32.totalorder %s364, %s378
      %p380 = scmp.eq.s32.totalorder %s39, 0
      %p381 = por %p379, %p380
      %s383 = sadd.s32 %s382, 1
      %p386 = scmp.eq.s32.totalorder %s33, 1
      %p387 = scmp.ne.s32.totalorder %s382, %s384
      %p388 = scmp.eq.s32.totalorder %s33, 0
      %p389 = por %p387, %p388
      %p390 = scmp.ne.s32.totalorder %s382, %s384
      %p391 = scmp.eq.s32.totalorder %s38, 1
      %p392 = por %p390, %p391
      %p393 = scmp.ne.s32.totalorder %s384, %s385
      %p394 = scmp.eq.s32.totalorder %s38, 0
      %p395 = por %p393, %p394
      %p396 = scmp.ne.s32.totalorder %s384, %s385
      %p397 = scmp.eq.s32.totalorder %s39, 1
      %p398 = por %p396, %p397
      %p400 = scmp.ne.s32.totalorder %s385, %s399
      %p401 = scmp.eq.s32.totalorder %s39, 0
      %p402 = por %p400, %p401
      %s403 = ssub.s32 %s33, %s40
      %p404 = scmp.eq.s32.totalorder %s403, 0
      %s406 = sadd.s32 %s405, 1
      %s407 = scalar_select %p404, %s405, %s406
      %p410 = pneg %p404
      %p411 = scmp.eq.s32.totalorder %s33, 1
      %p412 = por %p410, %p411
      %p413 = scmp.ne.s32.totalorder %s405, %s408
      %p414 = scmp.eq.s32.totalorder %s33, 0
      %p415 = por %p413, %p414
      %p416 = scmp.ne.s32.totalorder %s405, %s408
      %p417 = scmp.eq.s32.totalorder %s38, 1
      %p418 = por %p416, %p417
      %p419 = scmp.ne.s32.totalorder %s408, %s409
      %p420 = scmp.eq.s32.totalorder %s38, 0
      %p421 = por %p419, %p420
      %p422 = scmp.ne.s32.totalorder %s408, %s409
      %p423 = scmp.eq.s32.totalorder %s39, 1
      %p424 = por %p422, %p423
      %p426 = scmp.ne.s32.totalorder %s409, %s425
      %p427 = scmp.eq.s32.totalorder %s39, 0
      %p428 = por %p426, %p427
      %p429 = scmp.le.s32.totalorder 1, %s33
      %p430 = scmp.lt.s32.totalorder %s33, 3
      %p431 = pnand %p429, %p430
      %p432 = pneg %p431
      // Predicated region
      $region9: #{tpu_custom_call.1} parent=5 // pred_check
        _
      $region10: #{tpu_custom_call.1} parent=5 // pred_check_branch
        %434 = sbr.rel (%p431) target = $region12
      $region11: #{tpu_custom_call.1} parent=5 // pred_region
        %s435 = ssub.s32 %s33, 1
        // Predicated region
        $region13: #{tpu_custom_call.1} parent=11 // pred_check
          %p436 = pneg %p80
        $region14: #{tpu_custom_call.1} parent=11 // pred_check_branch
          %438 = sbr.rel (%p436) target = $region16
        $region15: #{tpu_custom_call.1} parent=11 // pred_region
          %s440 = ssub.s32 1536, 1536
          %441 = vsyncadd [#allocation6], %s440
          %s442 = sshll.u32 [#allocation5], 4
          %s443 = int_to_ptr.vmem [resolvable:$true] %s442
          %448 = dma.hbm_to_vmem [thread:$0]  %s1, 1536, %s443, [#allocation6], 384, 384, 24
        $region16: #{tpu_custom_call.1} parent=11 // pred_fallthru
          _
        // Predicated region
        $region17: #{tpu_custom_call.1} parent=11 // pred_check
          %p449 = pneg %p101
        $region18: #{tpu_custom_call.1} parent=11 // pred_check_branch
          %451 = sbr.rel (%p449) target = $region20
        $region19: #{tpu_custom_call.1} parent=11 // pred_region
          _
        $region20: #{tpu_custom_call.1} parent=11 // pred_fallthru
          _
        // Predicated region
        $region21: #{tpu_custom_call.1} parent=11 // pred_check
          %p452 = pneg %p122
        $region22: #{tpu_custom_call.1} parent=11 // pred_check_branch
          %454 = sbr.rel (%p452) target = $region24
        $region23: #{tpu_custom_call.1} parent=11 // pred_region
          %s456 = ssub.s32 10240, 10240
          %457 = vsyncadd [#allocation6], %s456
          %s458 = sshll.u32 [#allocation7], 4
          %s459 = int_to_ptr.vmem [resolvable:$true] %s458
          %464 = dma.hbm_to_vmem [thread:$0]  %s3, 10240, %s459, [#allocation6], 128, 128, 8
        $region24: #{tpu_custom_call.1} parent=11 // pred_fallthru
          _
        // Predicated region
        $region25: #{tpu_custom_call.1} parent=11 // pred_check
          %p465 = pneg %p143
        $region26: #{tpu_custom_call.1} parent=11 // pred_check_branch
          %467 = sbr.rel (%p465) target = $region28
        $region27: #{tpu_custom_call.1} parent=11 // pred_region
          _
        $region28: #{tpu_custom_call.1} parent=11 // pred_fallthru
          _
        // Predicated region
        $region29: #{tpu_custom_call.1} parent=11 // pred_check
          %p468 = pneg %p164
        $region30: #{tpu_custom_call.1} parent=11 // pred_check_branch
          %470 = sbr.rel (%p468) target = $region32
        $region31: #{tpu_custom_call.1} parent=11 // pred_region
          %s472 = ssub.s32 2048, 2048
          %473 = vsyncadd [#allocation9], %s472
          %s474 = sshll.u32 [#allocation8], 4
          %s475 = int_to_ptr.vmem [resolvable:$true] %s474
          %480 = dma.hbm_to_vmem [thread:$0]  %s5, 2048, %s475, [#allocation9], 64, 64, 4
        $region32: #{tpu_custom_call.1} parent=11 // pred_fallthru
          _
        // Predicated region
        $region33: #{tpu_custom_call.1} parent=11 // pred_check
          %p481 = pneg %p185
        $region34: #{tpu_custom_call.1} parent=11 // pred_check_branch
          %483 = sbr.rel (%p481) target = $region36
        $region35: #{tpu_custom_call.1} parent=11 // pred_region
          _
        $region36: #{tpu_custom_call.1} parent=11 // pred_fallthru
          _
        // Predicated region
        $region37: #{tpu_custom_call.1} parent=11 // pred_check
          %p484 = pneg %p206
        $region38: #{tpu_custom_call.1} parent=11 // pred_check_branch
          %486 = sbr.rel (%p484) target = $region40
        $region39: #{tpu_custom_call.1} parent=11 // pred_region
          %s488 = ssub.s32 1024, 1024
          %489 = vsyncadd [#allocation9], %s488
          %s490 = sshll.u32 [#allocation10], 4
          %s491 = int_to_ptr.vmem [resolvable:$true] %s490
          %496 = dma.hbm_to_vmem [thread:$0]  %s7, 1024, %s491, [#allocation9], 64, 64, 4
        $region40: #{tpu_custom_call.1} parent=11 // pred_fallthru
          _
        // Predicated region
        $region41: #{tpu_custom_call.1} parent=11 // pred_check
          %p497 = pneg %p227
        $region42: #{tpu_custom_call.1} parent=11 // pred_check_branch
          %499 = sbr.rel (%p497) target = $region44
        $region43: #{tpu_custom_call.1} parent=11 // pred_region
          _
        $region44: #{tpu_custom_call.1} parent=11 // pred_fallthru
          _
        // Predicated region
        $region45: #{tpu_custom_call.1} parent=11 // pred_check
          %p500 = pneg %p248
        $region46: #{tpu_custom_call.1} parent=11 // pred_check_branch
          %502 = sbr.rel (%p500) target = $region48
        $region47: #{tpu_custom_call.1} parent=11 // pred_region
          %s504 = ssub.s32 1024, 1024
          %505 = vsyncadd [#allocation12], %s504
          %s506 = sshll.u32 [#allocation11], 4
          %s507 = int_to_ptr.vmem [resolvable:$true] %s506
          %512 = dma.hbm_to_vmem [thread:$0]  %s9, 1024, %s507, [#allocation12], 64, 64, 4
        $region48: #{tpu_custom_call.1} parent=11 // pred_fallthru
          _
        // Predicated region
        $region49: #{tpu_custom_call.1} parent=11 // pred_check
          %p513 = pneg %p269
        $region50: #{tpu_custom_call.1} parent=11 // pred_check_branch
          %515 = sbr.rel (%p513) target = $region52
        $region51: #{tpu_custom_call.1} parent=11 // pred_region
          _
        $region52: #{tpu_custom_call.1} parent=11 // pred_fallthru
          _
        // Predicated region
        $region53: #{tpu_custom_call.1} parent=11 // pred_check
          %p516 = pneg %p290
        $region54: #{tpu_custom_call.1} parent=11 // pred_check_branch
          %518 = sbr.rel (%p516) target = $region56
        $region55: #{tpu_custom_call.1} parent=11 // pred_region
          %s520 = ssub.s32 2048, 2048
          %521 = vsyncadd [#allocation12], %s520
          %s522 = sshll.u32 [#allocation13], 4
          %s523 = int_to_ptr.vmem [resolvable:$true] %s522
          %528 = dma.hbm_to_vmem [thread:$0]  %s11, 2048, %s523, [#allocation12], 128, 128, 8
        $region56: #{tpu_custom_call.1} parent=11 // pred_fallthru
          _
        // Predicated region
        $region57: #{tpu_custom_call.1} parent=11 // pred_check
          %p529 = pneg %p311
        $region58: #{tpu_custom_call.1} parent=11 // pred_check_branch
          %531 = sbr.rel (%p529) target = $region60
        $region59: #{tpu_custom_call.1} parent=11 // pred_region
          _
        $region60: #{tpu_custom_call.1} parent=11 // pred_fallthru
          _
        // Predicated region
        $region61: #{tpu_custom_call.1} parent=11 // pred_check
          %p532 = pneg %p332
        $region62: #{tpu_custom_call.1} parent=11 // pred_check_branch
          %534 = sbr.rel (%p532) target = $region64
        $region63: #{tpu_custom_call.1} parent=11 // pred_region
          %s536 = ssub.s32 10240, 10240
          %537 = vsyncadd [#allocation15], %s536
          %s538 = sshll.u32 [#allocation14], 4
          %s539 = int_to_ptr.vmem [resolvable:$true] %s538
          %544 = dma.hbm_to_vmem [thread:$0]  %s13, 10240, %s539, [#allocation15], 320, 320, 20
        $region64: #{tpu_custom_call.1} parent=11 // pred_fallthru
          _
        // Predicated region
        $region65: #{tpu_custom_call.1} parent=11 // pred_check
          %p545 = pneg %p353
        $region66: #{tpu_custom_call.1} parent=11 // pred_check_branch
          %547 = sbr.rel (%p545) target = $region68
        $region67: #{tpu_custom_call.1} parent=11 // pred_region
          _
        $region68: #{tpu_custom_call.1} parent=11 // pred_fallthru
          _
        // Predicated region
        $region69: #{tpu_custom_call.1} parent=11 // pred_check
          %p548 = pneg %p374
        $region70: #{tpu_custom_call.1} parent=11 // pred_check_branch
          %550 = sbr.rel (%p548) target = $region72
        $region71: #{tpu_custom_call.1} parent=11 // pred_region
          %s552 = ssub.s32 5120, 5120
          %553 = vsyncadd [#allocation15], %s552
          %s554 = sshll.u32 [#allocation16], 4
          %s555 = int_to_ptr.vmem [resolvable:$true] %s554
          %560 = dma.hbm_to_vmem [thread:$0]  %s15, 5120, %s555, [#allocation15], 64, 64, 4
        $region72: #{tpu_custom_call.1} parent=11 // pred_fallthru
          _
        // Predicated region
        $region73: #{tpu_custom_call.1} parent=11 // pred_check
          %p561 = pneg %p395
        $region74: #{tpu_custom_call.1} parent=11 // pred_check_branch
          %563 = sbr.rel (%p561) target = $region76
        $region75: #{tpu_custom_call.1} parent=11 // pred_region
          _
        $region76: #{tpu_custom_call.1} parent=11 // pred_fallthru
          _
      $region12: #{tpu_custom_call.1} parent=5 // pred_fallthru
        _
      %p564 = scmp.lt.s32.totalorder %s33, 2
      // Predicated region
      $region77: #{tpu_custom_call.1} parent=5 // pred_check
        %p565 = pneg %p564
      $region78: #{tpu_custom_call.1} parent=5 // pred_check_branch
        %567 = sbr.rel (%p565) target = $region80
      $region79: #{tpu_custom_call.1} parent=5 // pred_region
        // Predicated region
        $region81: #{tpu_custom_call.1} parent=79 // pred_check
          %p568 = pneg %p53
        $region82: #{tpu_custom_call.1} parent=79 // pred_check_branch
          %570 = sbr.rel (%p568) target = $region84
        $region83: #{tpu_custom_call.1} parent=79 // pred_region
          %s571 = sand.u32 %s43, 1
          %s572 = scalar_lea.sflag [#allocation3], %s571
          %s573 = sand.u32 %s43, 1
          %s574 = smul.addr %s573, 8
          %s575 = scalar_lea.vmem [#allocation2], %s574
          %s576 = smul.u32 2, %s33
          %s578 = ssub.s32 128, 128
          %579 = vsyncadd %s572, %s578
          %s580 = smul.addr %s576, 64
          %s581 = scalar_lea.hbm %s0, %s580
          %s582 = sshll.u32 %s575, 4
          %s583 = int_to_ptr.vmem [resolvable:$true] %s582
          %588 = dma.hbm_to_vmem [thread:$0]  %s581, 128, %s583, %s572, 64, 64, 4
        $region84: #{tpu_custom_call.1} parent=79 // pred_fallthru
          _
      $region80: #{tpu_custom_call.1} parent=5 // pred_fallthru
        _
      %p589 = scmp.le.s32.totalorder 1, %s33
      %p590 = scmp.lt.s32.totalorder %s33, 3
      %p591 = pnand %p589, %p590
      %p592 = pneg %p591
      // Predicated region
      $region85: #{tpu_custom_call.1} parent=5 // pred_check
        _
      $region86: #{tpu_custom_call.1} parent=5 // pred_check_branch
        %594 = sbr.rel (%p591) target = $region88
      $region87: #{tpu_custom_call.1} parent=5 // pred_region
        %s595 = ssub.s32 %s33, 1
        %s596 = sand.u32 %s46, 1
        %s597 = scalar_lea.sflag [#allocation3], %s596
        %s598 = sand.u32 %s46, 1
        %s599 = smul.addr %s598, 8
        %s600 = scalar_lea.vmem [#allocation2], %s599
        // Predicated region
        $region89: #{tpu_custom_call.1} parent=87 // pred_check
          %p601 = pneg %p59
        $region90: #{tpu_custom_call.1} parent=87 // pred_check_branch
          %603 = sbr.rel (%p601) target = $region92
        $region91: #{tpu_custom_call.1} parent=87 // pred_region
          %604 = dma.done %s597, 128
        $region92: #{tpu_custom_call.1} parent=87 // pred_fallthru
          _
        // Predicated region
        $region93: #{tpu_custom_call.1} parent=87 // pred_check
          %p605 = pneg %p80
        $region94: #{tpu_custom_call.1} parent=87 // pred_check_branch
          %607 = sbr.rel (%p605) target = $region96
        $region95: #{tpu_custom_call.1} parent=87 // pred_region
          %608 = dma.done [#allocation6], 1536
        $region96: #{tpu_custom_call.1} parent=87 // pred_fallthru
          _
        // Predicated region
        $region97: #{tpu_custom_call.1} parent=87 // pred_check
          %p609 = pneg %p122
        $region98: #{tpu_custom_call.1} parent=87 // pred_check_branch
          %611 = sbr.rel (%p609) target = $region100
        $region99: #{tpu_custom_call.1} parent=87 // pred_region
          %612 = dma.done [#allocation6], 10240
        $region100: #{tpu_custom_call.1} parent=87 // pred_fallthru
          _
        // Predicated region
        $region101: #{tpu_custom_call.1} parent=87 // pred_check
          %p613 = pneg %p164
        $region102: #{tpu_custom_call.1} parent=87 // pred_check_branch
          %615 = sbr.rel (%p613) target = $region104
        $region103: #{tpu_custom_call.1} parent=87 // pred_region
          %616 = dma.done [#allocation9], 2048
        $region104: #{tpu_custom_call.1} parent=87 // pred_fallthru
          _
        // Predicated region
        $region105: #{tpu_custom_call.1} parent=87 // pred_check
          %p617 = pneg %p206
        $region106: #{tpu_custom_call.1} parent=87 // pred_check_branch
          %619 = sbr.rel (%p617) target = $region108
        $region107: #{tpu_custom_call.1} parent=87 // pred_region
          %620 = dma.done [#allocation9], 1024
        $region108: #{tpu_custom_call.1} parent=87 // pred_fallthru
          _
        // Predicated region
        $region109: #{tpu_custom_call.1} parent=87 // pred_check
          %p621 = pneg %p248
        $region110: #{tpu_custom_call.1} parent=87 // pred_check_branch
          %623 = sbr.rel (%p621) target = $region112
        $region111: #{tpu_custom_call.1} parent=87 // pred_region
          %624 = dma.done [#allocation12], 1024
        $region112: #{tpu_custom_call.1} parent=87 // pred_fallthru
          _
        // Predicated region
        $region113: #{tpu_custom_call.1} parent=87 // pred_check
          %p625 = pneg %p290
        $region114: #{tpu_custom_call.1} parent=87 // pred_check_branch
          %627 = sbr.rel (%p625) target = $region116
        $region115: #{tpu_custom_call.1} parent=87 // pred_region
          %628 = dma.done [#allocation12], 2048
        $region116: #{tpu_custom_call.1} parent=87 // pred_fallthru
          _
        // Predicated region
        $region117: #{tpu_custom_call.1} parent=87 // pred_check
          %p629 = pneg %p332
        $region118: #{tpu_custom_call.1} parent=87 // pred_check_branch
          %631 = sbr.rel (%p629) target = $region120
        $region119: #{tpu_custom_call.1} parent=87 // pred_region
          %632 = dma.done [#allocation15], 10240
        $region120: #{tpu_custom_call.1} parent=87 // pred_fallthru
          _
        // Predicated region
        $region121: #{tpu_custom_call.1} parent=87 // pred_check
          %p633 = pneg %p374
        $region122: #{tpu_custom_call.1} parent=87 // pred_check_branch
          %635 = sbr.rel (%p633) target = $region124
        $region123: #{tpu_custom_call.1} parent=87 // pred_region
          %636 = dma.done [#allocation15], 5120
        $region124: #{tpu_custom_call.1} parent=87 // pred_fallthru
          _
        %s637 = sand.u32 %s46, 1
        %s638 = scalar_lea.sflag [#allocation3], %s637
        %s639 = sand.u32 %s46, 1
        %s640 = smul.addr %s639, 8
        %s641 = scalar_lea.vmem [#allocation2], %s640
        %p642 = pneg %p59
        %p643 = pneg %p56
        %p644 = pneg %p80
        %p645 = pneg %p77
        %p646 = pneg %p101
        %p647 = pneg %p98
        %p648 = pneg %p122
        %p649 = pneg %p119
        %p650 = pneg %p143
        %p651 = pneg %p140
        %p652 = pneg %p164
        %p653 = pneg %p161
        %p654 = pneg %p185
        %p655 = pneg %p182
        %p656 = pneg %p206
        %p657 = pneg %p203
        %p658 = pneg %p227
        %p659 = pneg %p224
        %p660 = pneg %p248
        %p661 = pneg %p245
        %p662 = pneg %p269
        %p663 = pneg %p266
        %p664 = pneg %p290
        %p665 = pneg %p287
        %p666 = pneg %p311
        %p667 = pneg %p308
        %p668 = pneg %p332
        %p669 = pneg %p329
        %p670 = pneg %p353
        %p671 = pneg %p350
        %p672 = pneg %p374
        %p673 = pneg %p371
        %p674 = pneg %p395
        %p675 = pneg %p392
        %p676 = pneg %p421
        %p677 = pneg %p418
        %s678 = sand.u32 %s408, 1
        %s679 = scalar_lea.sflag [#allocation4], %s678
        %s680 = sand.u32 %s408, 1
        %s681 = smul.addr %s680, 16
        %s682 = scalar_lea.vmem [#allocation17], %s681
        %s683 = smul.u32 2, %s38
        %s684 = smul.u32 2, %s38
        %v686 = vld [vmem:[%s600] sm:$0xf]
        %v687 = vld [vmem:[%s600 + $0x4] sm:$0xf]
        %v688 = vld [vmem:[#allocation5] sm:$0xff]
        %v689 = vld [vmem:[#allocation5 + $0x8] sm:$0xff]
        %v690 = vld [vmem:[#allocation5 + $0x10] sm:$0xff]
        %v691 = vld [vmem:[#allocation5 + $0x18] sm:$0xff]
        %v692 = vld [vmem:[#allocation5 + $0x20] sm:$0xff]
        %v693 = vld [vmem:[#allocation5 + $0x28] sm:$0xff]
        %v694 = vld [vmem:[#allocation5 + $0x30] sm:$0xff]
        %v695 = vld [vmem:[#allocation5 + $0x38] sm:$0xff]
        %v696 = vld [vmem:[#allocation5 + $0x40] sm:$0xff]
        %v697 = vld [vmem:[#allocation5 + $0x48] sm:$0xff]
        %v698 = vld [vmem:[#allocation5 + $0x50] sm:$0xff]
        %v699 = vld [vmem:[#allocation5 + $0x58] sm:$0xff]
        %v700 = vld [vmem:[%s2] sm:$0x3f]
        %v702 = vlaneseq
        %v703 = vshrl.u32 %v702, 7
        %v704 = vsub.s32 0, %v703
        %v705 = vrot.slane %v700, %v704
        %v706 = vlaneseq
        %v707 = vshrl.u32 %v706, 7
        %v708 = vsub.s32 1, %v707
        %v709 = vrot.slane %v700, %v708
        %v710 = vlaneseq
        %v711 = vshrl.u32 %v710, 7
        %v712 = vsub.s32 2, %v711
        %v713 = vrot.slane %v700, %v712
        %v714 = vlaneseq
        %v715 = vshrl.u32 %v714, 7
        %v716 = vsub.s32 3, %v715
        %v717 = vrot.slane %v700, %v716
        %v718 = vlaneseq
        %v719 = vshrl.u32 %v718, 7
        %v720 = vsub.s32 4, %v719
        %v721 = vrot.slane %v700, %v720
        %v722 = vlaneseq
        %v723 = vshrl.u32 %v722, 7
        %v724 = vsub.s32 5, %v723
        %v725 = vrot.slane %v700, %v724
        %v734 = vunpack.c.l.b16 %v686
        %v735 = vunpack.c.l.b16 %v687
        %v736 = vpack.c.b16 %v735, %v734
        %v749 = vunpack.c.l.b16 %v688
        %v750 = vunpack.c.h.b16 %v688
        %v751 = vunpack.c.l.b16 %v689
        %v752 = vunpack.c.h.b16 %v689
        %v753 = vunpack.c.l.b16 %v690
        %v754 = vunpack.c.h.b16 %v690
        %v755 = vunpack.c.l.b16 %v691
        %v756 = vunpack.c.h.b16 %v691
        %v757 = vunpack.c.l.b16 %v692
        %v758 = vunpack.c.h.b16 %v692
        %v759 = vunpack.c.l.b16 %v693
        %v760 = vunpack.c.h.b16 %v693
        %v761 = vunpack.c.l.b16 %v694
        %v762 = vunpack.c.h.b16 %v694
        %v763 = vunpack.c.l.b16 %v695
        %v764 = vunpack.c.h.b16 %v695
        %v765 = vunpack.c.l.b16 %v696
        %v766 = vunpack.c.h.b16 %v696
        %v767 = vunpack.c.l.b16 %v697
        %v768 = vunpack.c.h.b16 %v697
        %v769 = vunpack.c.l.b16 %v698
        %v770 = vunpack.c.h.b16 %v698
        %v771 = vunpack.c.l.b16 %v699
        %v772 = vunpack.c.h.b16 %v699
        %v773 = vpack.c.b16 %v755, %v749
        %v774 = vpack.c.b16 %v756, %v750
        %v775 = vpack.c.b16 %v757, %v751
        %v776 = vpack.c.b16 %v758, %v752
        %v777 = vpack.c.b16 %v759, %v753
        %v778 = vpack.c.b16 %v760, %v754
        %v779 = vpack.c.b16 %v767, %v761
        %v780 = vpack.c.b16 %v768, %v762
        %v781 = vpack.c.b16 %v769, %v763
        %v782 = vpack.c.b16 %v770, %v764
        %v783 = vpack.c.b16 %v771, %v765
        %v784 = vpack.c.b16 %v772, %v766
        %vm797 = vcmask 261120
        %v799 = vsel %vm797, %v736, 0
        %801 = vmatprep.subr.bf16.mxu0 %v774
        %802 = vmatpush1.bf16.msra.mxu0 %v773
        %803 = vmatprep.subr.bf16.mxu0 %v780
        %804 = vmatpush1.bf16.msra.mxu0 %v779
        %805 = vmatprep.subr.bf16.mxu0 0
        %806 = vmatpush1.bf16.msra.mxu0 0
        %807 = vmatprep.subr.bf16.mxu0 0
        %808 = vmatpush1.bf16.msra.mxu0 0
        %809 = vmatprep.subr.bf16.mxu0 0
        %810 = vmatpush1.bf16.msra.mxu0 0
        %811 = vmatprep.subr.bf16.mxu0 0
        %812 = vmatpush1.bf16.msra.mxu0 0
        %813 = vmatprep.subr.bf16.mxu0 0
        %814 = vmatpush1.bf16.msra.mxu0 0
        %815 = vmatprep.subr.bf16.mxu0 0
        %816 = vmatpush1.bf16.msra.mxu0 0
        %817 = vmatprep.subr.bf16.mxu0 0
        %818 = vmatpush1.bf16.msra.mxu0 0
        %819 = vmatprep.subr.bf16.mxu0 0
        %820 = vmatpush1.bf16.msra.mxu0 0
        %821 = vmatprep.subr.bf16.mxu0 0
        %822 = vmatpush1.bf16.msra.mxu0 0
        %823 = vmatprep.subr.bf16.mxu0 0
        %824 = vmatpush1.bf16.msra.mxu0 0
        %825 = vmatprep.subr.bf16.mxu0 0
        %826 = vmatpush1.bf16.msra.mxu0 0
        %827 = vmatprep.subr.bf16.mxu0 0
        %828 = vmatpush1.bf16.msra.mxu0 0
        %829 = vmatprep.subr.bf16.mxu0 0
        %830 = vmatpush1.bf16.msra.mxu0 0
        %831 = vmatprep.subr.bf16.mxu0 0
        %832 = vmatpush1.bf16.msra.mxu0 0
        %833 = vmatprep.mubr.bf16.mxu0 0
        %834 = vmatmul.mubr.bf16.gmra.mrb[0].mxu0 %v799
        %v835 = vpop.f32.mrb[0].mxu0
        %v836 = vadd.f32 %v705, %v835
        %v837 = vpop.f32.mrb[0].mxu0
        %v838 = vadd.f32 %v709, %v837
        %v839 = vpop.f32.mrb[0].mxu0
        %v840 = vadd.f32 %v705, %v839
        %v841 = vpop.f32.mrb[0].mxu0
        %v842 = vadd.f32 %v709, %v841
        %843 = vdwg.mxu0
        %844 = vmatprep.subr.bf16.mxu0 %v776
        %845 = vmatpush1.bf16.msra.mxu0 %v775
        %846 = vmatprep.subr.bf16.mxu0 %v782
        %847 = vmatpush1.bf16.msra.mxu0 %v781
        %848 = vmatprep.subr.bf16.mxu0 0
        %849 = vmatpush1.bf16.msra.mxu0 0
        %850 = vmatprep.subr.bf16.mxu0 0
        %851 = vmatpush1.bf16.msra.mxu0 0
        %852 = vmatprep.subr.bf16.mxu0 0
        %853 = vmatpush1.bf16.msra.mxu0 0
        %854 = vmatprep.subr.bf16.mxu0 0
        %855 = vmatpush1.bf16.msra.mxu0 0
        %856 = vmatprep.subr.bf16.mxu0 0
        %857 = vmatpush1.bf16.msra.mxu0 0
        %858 = vmatprep.subr.bf16.mxu0 0
        %859 = vmatpush1.bf16.msra.mxu0 0
        %860 = vmatprep.subr.bf16.mxu0 0
        %861 = vmatpush1.bf16.msra.mxu0 0
        %862 = vmatprep.subr.bf16.mxu0 0
        %863 = vmatpush1.bf16.msra.mxu0 0
        %864 = vmatprep.subr.bf16.mxu0 0
        %865 = vmatpush1.bf16.msra.mxu0 0
        %866 = vmatprep.subr.bf16.mxu0 0
        %867 = vmatpush1.bf16.msra.mxu0 0
        %868 = vmatprep.subr.bf16.mxu0 0
        %869 = vmatpush1.bf16.msra.mxu0 0
        %870 = vmatprep.subr.bf16.mxu0 0
        %871 = vmatpush1.bf16.msra.mxu0 0
        %872 = vmatprep.subr.bf16.mxu0 0
        %873 = vmatpush1.bf16.msra.mxu0 0
        %874 = vmatprep.subr.bf16.mxu0 0
        %875 = vmatpush1.bf16.msra.mxu0 0
        %876 = vmatprep.mubr.bf16.mxu0 0
        %877 = vmatmul.mubr.bf16.gmra.mrb[0].mxu0 %v799
        %v878 = vpop.f32.mrb[0].mxu0
        %v879 = vadd.f32 %v713, %v878
        %v880 = vpop.f32.mrb[0].mxu0
        %v881 = vadd.f32 %v717, %v880
        %v882 = vpop.f32.mrb[0].mxu0
        %v883 = vadd.f32 %v713, %v882
        %v884 = vpop.f32.mrb[0].mxu0
        %v885 = vadd.f32 %v717, %v884
        %886 = vdwg.mxu0
        %887 = vmatprep.subr.bf16.mxu0 %v778
        %888 = vmatpush1.bf16.msra.mxu0 %v777
        %889 = vmatprep.subr.bf16.mxu0 %v784
        %890 = vmatpush1.bf16.msra.mxu0 %v783
        %891 = vmatprep.subr.bf16.mxu0 0
        %892 = vmatpush1.bf16.msra.mxu0 0
        %893 = vmatprep.subr.bf16.mxu0 0
        %894 = vmatpush1.bf16.msra.mxu0 0
        %895 = vmatprep.subr.bf16.mxu0 0
        %896 = vmatpush1.bf16.msra.mxu0 0
        %897 = vmatprep.subr.bf16.mxu0 0
        %898 = vmatpush1.bf16.msra.mxu0 0
        %899 = vmatprep.subr.bf16.mxu0 0
        %900 = vmatpush1.bf16.msra.mxu0 0
        %901 = vmatprep.subr.bf16.mxu0 0
        %902 = vmatpush1.bf16.msra.mxu0 0
        %903 = vmatprep.subr.bf16.mxu0 0
        %904 = vmatpush1.bf16.msra.mxu0 0
        %905 = vmatprep.subr.bf16.mxu0 0
        %906 = vmatpush1.bf16.msra.mxu0 0
        %907 = vmatprep.subr.bf16.mxu0 0
        %908 = vmatpush1.bf16.msra.mxu0 0
        %909 = vmatprep.subr.bf16.mxu0 0
        %910 = vmatpush1.bf16.msra.mxu0 0
        %911 = vmatprep.subr.bf16.mxu0 0
        %912 = vmatpush1.bf16.msra.mxu0 0
        %913 = vmatprep.subr.bf16.mxu0 0
        %914 = vmatpush1.bf16.msra.mxu0 0
        %915 = vmatprep.subr.bf16.mxu0 0
        %916 = vmatpush1.bf16.msra.mxu0 0
        %917 = vmatprep.subr.bf16.mxu0 0
        %918 = vmatpush1.bf16.msra.mxu0 0
        %919 = vmatprep.mubr.bf16.mxu0 0
        %920 = vmatmul.mubr.bf16.gmra.mrb[0].mxu0 %v799
        %v921 = vpop.f32.mrb[0].mxu0
        %v922 = vadd.f32 %v721, %v921
        %v923 = vpop.f32.mrb[0].mxu0
        %v924 = vadd.f32 %v725, %v923
        %v925 = vpop.f32.mrb[0].mxu0
        %v926 = vadd.f32 %v721, %v925
        %v927 = vpop.f32.mrb[0].mxu0
        %v928 = vadd.f32 %v725, %v927
        %929 = vdwg.mxu0
        %v930 = vtanh.pop %v836
        %v931 = vtanh.pop %v838
        %v932 = vtanh.pop %v879
        %v933 = vtanh.pop %v881
        %v934 = vtanh.pop %v922
        %v935 = vtanh.pop %v840
        %v936 = vtanh.pop %v842
        %v937 = vtanh.pop %v883
        %v938 = vtanh.pop %v885
        %v939 = vtanh.pop %v926
        %v940 = vpack.c.bf16 %v935, %v930
        %v941 = vpack.c.bf16 %v936, %v931
        %v942 = vpack.c.bf16 %v937, %v932
        %v943 = vpack.c.bf16 %v938, %v933
        %v944 = vpack.c.bf16 %v939, %v934
        %v945 = vld [vmem:[#allocation7] sm:$0xff]
        %v946 = vld [vmem:[#allocation7 + $0x8] sm:$0xff]
        %v947 = vld [vmem:[#allocation7 + $0x10] sm:$0xff]
        %v948 = vld [vmem:[#allocation7 + $0x18] sm:$0xff]
        %v949 = vld [vmem:[#allocation7 + $0x20] sm:$0xff]
        %v950 = vld [vmem:[#allocation7 + $0x28] sm:$0xff]
        %v951 = vld [vmem:[#allocation7 + $0x30] sm:$0xff]
        %v952 = vld [vmem:[#allocation7 + $0x38] sm:$0xff]
        %v953 = vld [vmem:[#allocation7 + $0x40] sm:$0xff]
        %v954 = vld [vmem:[#allocation7 + $0x48] sm:$0xff]
        %v955 = vld [vmem:[#allocation7 + $0x50] sm:$0xff]
        %v956 = vld [vmem:[#allocation7 + $0x58] sm:$0xff]
        %v957 = vld [vmem:[#allocation7 + $0x60] sm:$0xff]
        %v958 = vld [vmem:[#allocation7 + $0x68] sm:$0xff]
        %v959 = vld [vmem:[#allocation7 + $0x70] sm:$0xff]
        %v960 = vld [vmem:[#allocation7 + $0x78] sm:$0xff]
        %v961 = vld [vmem:[#allocation7 + $0x80] sm:$0xff]
        %v962 = vld [vmem:[#allocation7 + $0x88] sm:$0xff]
        %v963 = vld [vmem:[#allocation7 + $0x90] sm:$0xff]
        %v964 = vld [vmem:[#allocation7 + $0x98] sm:$0xff]
        %v965 = vld [vmem:[#allocation7 + $0xa0] sm:$0xff]
        %v966 = vld [vmem:[#allocation7 + $0xa8] sm:$0xff]
        %v967 = vld [vmem:[#allocation7 + $0xb0] sm:$0xff]
        %v968 = vld [vmem:[#allocation7 + $0xb8] sm:$0xff]
        %v969 = vld [vmem:[#allocation7 + $0xc0] sm:$0xff]
        %v970 = vld [vmem:[#allocation7 + $0xc8] sm:$0xff]
        %v971 = vld [vmem:[#allocation7 + $0xd0] sm:$0xff]
        %v972 = vld [vmem:[#allocation7 + $0xd8] sm:$0xff]
        %v973 = vld [vmem:[#allocation7 + $0xe0] sm:$0xff]
        %v974 = vld [vmem:[#allocation7 + $0xe8] sm:$0xff]
        %v975 = vld [vmem:[#allocation7 + $0xf0] sm:$0xff]
        %v976 = vld [vmem:[#allocation7 + $0xf8] sm:$0xff]
        %v977 = vld [vmem:[#allocation7 + $0x100] sm:$0xff]
        %v978 = vld [vmem:[#allocation7 + $0x108] sm:$0xff]
        %v979 = vld [vmem:[#allocation7 + $0x110] sm:$0xff]
        %v980 = vld [vmem:[#allocation7 + $0x118] sm:$0xff]
        %v981 = vld [vmem:[#allocation7 + $0x120] sm:$0xff]
        %v982 = vld [vmem:[#allocation7 + $0x128] sm:$0xff]
        %v983 = vld [vmem:[#allocation7 + $0x130] sm:$0xff]
        %v984 = vld [vmem:[#allocation7 + $0x138] sm:$0xff]
        %v985 = vld [vmem:[#allocation7 + $0x140] sm:$0xff]
        %v986 = vld [vmem:[#allocation7 + $0x148] sm:$0xff]
        %v987 = vld [vmem:[#allocation7 + $0x150] sm:$0xff]
        %v988 = vld [vmem:[#allocation7 + $0x158] sm:$0xff]
        %v989 = vld [vmem:[#allocation7 + $0x160] sm:$0xff]
        %v990 = vld [vmem:[#allocation7 + $0x168] sm:$0xff]
        %v991 = vld [vmem:[#allocation7 + $0x170] sm:$0xff]
        %v992 = vld [vmem:[#allocation7 + $0x178] sm:$0xff]
        %v993 = vld [vmem:[#allocation7 + $0x180] sm:$0xff]
        %v994 = vld [vmem:[#allocation7 + $0x188] sm:$0xff]
        %v995 = vld [vmem:[#allocation7 + $0x190] sm:$0xff]
        %v996 = vld [vmem:[#allocation7 + $0x198] sm:$0xff]
        %v997 = vld [vmem:[#allocation7 + $0x1a0] sm:$0xff]
        %v998 = vld [vmem:[#allocation7 + $0x1a8] sm:$0xff]
        %v999 = vld [vmem:[#allocation7 + $0x1b0] sm:$0xff]
        %v1000 = vld [vmem:[#allocation7 + $0x1b8] sm:$0xff]
        %v1001 = vld [vmem:[#allocation7 + $0x1c0] sm:$0xff]
        %v1002 = vld [vmem:[#allocation7 + $0x1c8] sm:$0xff]
        %v1003 = vld [vmem:[#allocation7 + $0x1d0] sm:$0xff]
        %v1004 = vld [vmem:[#allocation7 + $0x1d8] sm:$0xff]
        %v1005 = vld [vmem:[#allocation7 + $0x1e0] sm:$0xff]
        %v1006 = vld [vmem:[#allocation7 + $0x1e8] sm:$0xff]
        %v1007 = vld [vmem:[#allocation7 + $0x1f0] sm:$0xff]
        %v1008 = vld [vmem:[#allocation7 + $0x1f8] sm:$0xff]
        %v1009 = vld [vmem:[#allocation7 + $0x200] sm:$0xff]
        %v1010 = vld [vmem:[#allocation7 + $0x208] sm:$0xff]
        %v1011 = vld [vmem:[#allocation7 + $0x210] sm:$0xff]
        %v1012 = vld [vmem:[#allocation7 + $0x218] sm:$0xff]
        %v1013 = vld [vmem:[#allocation7 + $0x220] sm:$0xff]
        %v1014 = vld [vmem:[#allocation7 + $0x228] sm:$0xff]
        %v1015 = vld [vmem:[#allocation7 + $0x230] sm:$0xff]
        %v1016 = vld [vmem:[#allocation7 + $0x238] sm:$0xff]
        %v1017 = vld [vmem:[#allocation7 + $0x240] sm:$0xff]
        %v1018 = vld [vmem:[#allocation7 + $0x248] sm:$0xff]
        %v1019 = vld [vmem:[#allocation7 + $0x250] sm:$0xff]
        %v1020 = vld [vmem:[#allocation7 + $0x258] sm:$0xff]
        %v1021 = vld [vmem:[#allocation7 + $0x260] sm:$0xff]
        %v1022 = vld [vmem:[#allocation7 + $0x268] sm:$0xff]
        %v1023 = vld [vmem:[#allocation7 + $0x270] sm:$0xff]
        %v1024 = vld [vmem:[#allocation7 + $0x278] sm:$0xff]
        %v1025 = vld [vmem:[%s4] sm:$0x3]
        %v1027 = vlaneseq
        %v1028 = vshrl.u32 %v1027, 7
        %v1029 = vsub.s32 0, %v1028
        %v1030 = vrot.slane %v1025, %v1029
        %v1031 = vlaneseq
        %v1032 = vshrl.u32 %v1031, 7
        %v1033 = vsub.s32 1, %v1032
        %v1034 = vrot.slane %v1025, %v1033
        %v1117 = vunpack.c.l.b16 %v945
        %v1118 = vunpack.c.h.b16 %v945
        %v1119 = vunpack.c.l.b16 %v946
        %v1120 = vunpack.c.h.b16 %v946
        %v1121 = vunpack.c.l.b16 %v947
        %v1122 = vunpack.c.h.b16 %v947
        %v1123 = vunpack.c.l.b16 %v948
        %v1124 = vunpack.c.h.b16 %v948
        %v1125 = vunpack.c.l.b16 %v949
        %v1126 = vunpack.c.h.b16 %v949
        %v1127 = vunpack.c.l.b16 %v950
        %v1128 = vunpack.c.h.b16 %v950
        %v1129 = vunpack.c.l.b16 %v951
        %v1130 = vunpack.c.h.b16 %v951
        %v1131 = vunpack.c.l.b16 %v952
        %v1132 = vunpack.c.h.b16 %v952
        %v1133 = vunpack.c.l.b16 %v953
        %v1134 = vunpack.c.h.b16 %v953
        %v1135 = vunpack.c.l.b16 %v954
        %v1136 = vunpack.c.h.b16 %v954
        %v1137 = vunpack.c.l.b16 %v955
        %v1138 = vunpack.c.h.b16 %v955
        %v1139 = vunpack.c.l.b16 %v956
        %v1140 = vunpack.c.h.b16 %v956
        %v1141 = vunpack.c.l.b16 %v957
        %v1142 = vunpack.c.h.b16 %v957
        %v1143 = vunpack.c.l.b16 %v958
        %v1144 = vunpack.c.h.b16 %v958
        %v1145 = vunpack.c.l.b16 %v959
        %v1146 = vunpack.c.h.b16 %v959
        %v1147 = vunpack.c.l.b16 %v960
        %v1148 = vunpack.c.h.b16 %v960
        %v1149 = vunpack.c.l.b16 %v961
        %v1150 = vunpack.c.h.b16 %v961
        %v1151 = vunpack.c.l.b16 %v962
        %v1152 = vunpack.c.h.b16 %v962
        %v1153 = vunpack.c.l.b16 %v963
        %v1154 = vunpack.c.h.b16 %v963
        %v1155 = vunpack.c.l.b16 %v964
        %v1156 = vunpack.c.h.b16 %v964
        %v1157 = vunpack.c.l.b16 %v965
        %v1158 = vunpack.c.h.b16 %v965
        %v1159 = vunpack.c.l.b16 %v966
        %v1160 = vunpack.c.h.b16 %v966
        %v1161 = vunpack.c.l.b16 %v967
        %v1162 = vunpack.c.h.b16 %v967
        %v1163 = vunpack.c.l.b16 %v968
        %v1164 = vunpack.c.h.b16 %v968
        %v1165 = vunpack.c.l.b16 %v969
        %v1166 = vunpack.c.h.b16 %v969
        %v1167 = vunpack.c.l.b16 %v970
        %v1168 = vunpack.c.h.b16 %v970
        %v1169 = vunpack.c.l.b16 %v971
        %v1170 = vunpack.c.h.b16 %v971
        %v1171 = vunpack.c.l.b16 %v972
        %v1172 = vunpack.c.h.b16 %v972
        %v1173 = vunpack.c.l.b16 %v973
        %v1174 = vunpack.c.h.b16 %v973
        %v1175 = vunpack.c.l.b16 %v974
        %v1176 = vunpack.c.h.b16 %v974
        %v1177 = vunpack.c.l.b16 %v975
        %v1178 = vunpack.c.h.b16 %v975
        %v1179 = vunpack.c.l.b16 %v976
        %v1180 = vunpack.c.h.b16 %v976
        %v1181 = vunpack.c.l.b16 %v977
        %v1182 = vunpack.c.h.b16 %v977
        %v1183 = vunpack.c.l.b16 %v978
        %v1184 = vunpack.c.h.b16 %v978
        %v1185 = vunpack.c.l.b16 %v979
        %v1186 = vunpack.c.h.b16 %v979
        %v1187 = vunpack.c.l.b16 %v980
        %v1188 = vunpack.c.h.b16 %v980
        %v1189 = vunpack.c.l.b16 %v981
        %v1190 = vunpack.c.h.b16 %v981
        %v1191 = vunpack.c.l.b16 %v982
        %v1192 = vunpack.c.h.b16 %v982
        %v1193 = vunpack.c.l.b16 %v983
        %v1194 = vunpack.c.h.b16 %v983
        %v1195 = vunpack.c.l.b16 %v984
        %v1196 = vunpack.c.h.b16 %v984
        %v1197 = vunpack.c.l.b16 %v985
        %v1198 = vunpack.c.h.b16 %v985
        %v1199 = vunpack.c.l.b16 %v986
        %v1200 = vunpack.c.h.b16 %v986
        %v1201 = vunpack.c.l.b16 %v987
        %v1202 = vunpack.c.h.b16 %v987
        %v1203 = vunpack.c.l.b16 %v988
        %v1204 = vunpack.c.h.b16 %v988
        %v1205 = vunpack.c.l.b16 %v989
        %v1206 = vunpack.c.h.b16 %v989
        %v1207 = vunpack.c.l.b16 %v990
        %v1208 = vunpack.c.h.b16 %v990
        %v1209 = vunpack.c.l.b16 %v991
        %v1210 = vunpack.c.h.b16 %v991
        %v1211 = vunpack.c.l.b16 %v992
        %v1212 = vunpack.c.h.b16 %v992
        %v1213 = vunpack.c.l.b16 %v993
        %v1214 = vunpack.c.h.b16 %v993
        %v1215 = vunpack.c.l.b16 %v994
        %v1216 = vunpack.c.h.b16 %v994
        %v1217 = vunpack.c.l.b16 %v995
        %v1218 = vunpack.c.h.b16 %v995
        %v1219 = vunpack.c.l.b16 %v996
        %v1220 = vunpack.c.h.b16 %v996
        %v1221 = vunpack.c.l.b16 %v997
        %v1222 = vunpack.c.h.b16 %v997
        %v1223 = vunpack.c.l.b16 %v998
        %v1224 = vunpack.c.h.b16 %v998
        %v1225 = vunpack.c.l.b16 %v999
        %v1226 = vunpack.c.h.b16 %v999
        %v1227 = vunpack.c.l.b16 %v1000
        %v1228 = vunpack.c.h.b16 %v1000
        %v1229 = vunpack.c.l.b16 %v1001
        %v1230 = vunpack.c.h.b16 %v1001
        %v1231 = vunpack.c.l.b16 %v1002
        %v1232 = vunpack.c.h.b16 %v1002
        %v1233 = vunpack.c.l.b16 %v1003
        %v1234 = vunpack.c.h.b16 %v1003
        %v1235 = vunpack.c.l.b16 %v1004
        %v1236 = vunpack.c.h.b16 %v1004
        %v1237 = vunpack.c.l.b16 %v1005
        %v1238 = vunpack.c.h.b16 %v1005
        %v1239 = vunpack.c.l.b16 %v1006
        %v1240 = vunpack.c.h.b16 %v1006
        %v1241 = vunpack.c.l.b16 %v1007
        %v1242 = vunpack.c.h.b16 %v1007
        %v1243 = vunpack.c.l.b16 %v1008
        %v1244 = vunpack.c.h.b16 %v1008
        %v1245 = vunpack.c.l.b16 %v1009
        %v1246 = vunpack.c.h.b16 %v1009
        %v1247 = vunpack.c.l.b16 %v1010
        %v1248 = vunpack.c.h.b16 %v1010
        %v1249 = vunpack.c.l.b16 %v1011
        %v1250 = vunpack.c.h.b16 %v1011
        %v1251 = vunpack.c.l.b16 %v1012
        %v1252 = vunpack.c.h.b16 %v1012
        %v1253 = vunpack.c.l.b16 %v1013
        %v1254 = vunpack.c.h.b16 %v1013
        %v1255 = vunpack.c.l.b16 %v1014
        %v1256 = vunpack.c.h.b16 %v1014
        %v1257 = vunpack.c.l.b16 %v1015
        %v1258 = vunpack.c.h.b16 %v1015
        %v1259 = vunpack.c.l.b16 %v1016
        %v1260 = vunpack.c.h.b16 %v1016
        %v1261 = vunpack.c.l.b16 %v1017
        %v1262 = vunpack.c.h.b16 %v1017
        %v1263 = vunpack.c.l.b16 %v1018
        %v1264 = vunpack.c.h.b16 %v1018
        %v1265 = vunpack.c.l.b16 %v1019
        %v1266 = vunpack.c.h.b16 %v1019
        %v1267 = vunpack.c.l.b16 %v1020
        %v1268 = vunpack.c.h.b16 %v1020
        %v1269 = vunpack.c.l.b16 %v1021
        %v1270 = vunpack.c.h.b16 %v1021
        %v1271 = vunpack.c.l.b16 %v1022
        %v1272 = vunpack.c.h.b16 %v1022
        %v1273 = vunpack.c.l.b16 %v1023
        %v1274 = vunpack.c.h.b16 %v1023
        %v1275 = vunpack.c.l.b16 %v1024
        %v1276 = vunpack.c.h.b16 %v1024
        %v1277 = vpack.c.b16 %v1119, %v1117
        %v1278 = vpack.c.b16 %v1120, %v1118
        %v1279 = vpack.c.b16 %v1123, %v1121
        %v1280 = vpack.c.b16 %v1124, %v1122
        %v1281 = vpack.c.b16 %v1127, %v1125
        %v1282 = vpack.c.b16 %v1128, %v1126
        %v1283 = vpack.c.b16 %v1131, %v1129
        %v1284 = vpack.c.b16 %v1132, %v1130
        %v1285 = vpack.c.b16 %v1135, %v1133
        %v1286 = vpack.c.b16 %v1136, %v1134
        %v1287 = vpack.c.b16 %v1139, %v1137
        %v1288 = vpack.c.b16 %v1140, %v1138
        %v1289 = vpack.c.b16 %v1143, %v1141
        %v1290 = vpack.c.b16 %v1144, %v1142
        %v1291 = vpack.c.b16 %v1147, %v1145
        %v1292 = vpack.c.b16 %v1148, %v1146
        %v1293 = vpack.c.b16 %v1151, %v1149
        %v1294 = vpack.c.b16 %v1152, %v1150
        %v1295 = vpack.c.b16 %v1155, %v1153
        %v1296 = vpack.c.b16 %v1156, %v1154
        %v1297 = vpack.c.b16 %v1159, %v1157
        %v1298 = vpack.c.b16 %v1160, %v1158
        %v1299 = vpack.c.b16 %v1163, %v1161
        %v1300 = vpack.c.b16 %v1164, %v1162
        %v1301 = vpack.c.b16 %v1167, %v1165
        %v1302 = vpack.c.b16 %v1168, %v1166
        %v1303 = vpack.c.b16 %v1171, %v1169
        %v1304 = vpack.c.b16 %v1172, %v1170
        %v1305 = vpack.c.b16 %v1175, %v1173
        %v1306 = vpack.c.b16 %v1176, %v1174
        %v1307 = vpack.c.b16 %v1179, %v1177
        %v1308 = vpack.c.b16 %v1180, %v1178
        %v1309 = vpack.c.b16 %v1183, %v1181
        %v1310 = vpack.c.b16 %v1184, %v1182
        %v1311 = vpack.c.b16 %v1187, %v1185
        %v1312 = vpack.c.b16 %v1188, %v1186
        %v1313 = vpack.c.b16 %v1191, %v1189
        %v1314 = vpack.c.b16 %v1192, %v1190
        %v1315 = vpack.c.b16 %v1195, %v1193
        %v1316 = vpack.c.b16 %v1196, %v1194
        %v1317 = vpack.c.b16 %v1199, %v1197
        %v1318 = vpack.c.b16 %v1200, %v1198
        %v1319 = vpack.c.b16 %v1203, %v1201
        %v1320 = vpack.c.b16 %v1204, %v1202
        %v1321 = vpack.c.b16 %v1207, %v1205
        %v1322 = vpack.c.b16 %v1208, %v1206
        %v1323 = vpack.c.b16 %v1211, %v1209
        %v1324 = vpack.c.b16 %v1212, %v1210
        %v1325 = vpack.c.b16 %v1215, %v1213
        %v1326 = vpack.c.b16 %v1216, %v1214
        %v1327 = vpack.c.b16 %v1219, %v1217
        %v1328 = vpack.c.b16 %v1220, %v1218
        %v1329 = vpack.c.b16 %v1223, %v1221
        %v1330 = vpack.c.b16 %v1224, %v1222
        %v1331 = vpack.c.b16 %v1227, %v1225
        %v1332 = vpack.c.b16 %v1228, %v1226
        %v1333 = vpack.c.b16 %v1231, %v1229
        %v1334 = vpack.c.b16 %v1232, %v1230
        %v1335 = vpack.c.b16 %v1235, %v1233
        %v1336 = vpack.c.b16 %v1236, %v1234
        %v1337 = vpack.c.b16 %v1239, %v1237
        %v1338 = vpack.c.b16 %v1240, %v1238
        %v1339 = vpack.c.b16 %v1243, %v1241
        %v1340 = vpack.c.b16 %v1244, %v1242
        %v1341 = vpack.c.b16 %v1247, %v1245
        %v1342 = vpack.c.b16 %v1248, %v1246
        %v1343 = vpack.c.b16 %v1251, %v1249
        %v1344 = vpack.c.b16 %v1252, %v1250
        %v1345 = vpack.c.b16 %v1255, %v1253
        %v1346 = vpack.c.b16 %v1256, %v1254
        %v1347 = vpack.c.b16 %v1259, %v1257
        %v1348 = vpack.c.b16 %v1260, %v1258
        %v1349 = vpack.c.b16 %v1263, %v1261
        %v1350 = vpack.c.b16 %v1264, %v1262
        %v1351 = vpack.c.b16 %v1267, %v1265
        %v1352 = vpack.c.b16 %v1268, %v1266
        %v1353 = vpack.c.b16 %v1271, %v1269
        %v1354 = vpack.c.b16 %v1272, %v1270
        %v1355 = vpack.c.b16 %v1275, %v1273
        %v1356 = vpack.c.b16 %v1276, %v1274
        %1437 = vmatprep.subr.bf16.mxu0 %v1278
        %1438 = vmatpush1.bf16.msra.mxu0 %v1277
        %1439 = vmatprep.subr.bf16.mxu0 %v1280
        %1440 = vmatpush1.bf16.msra.mxu0 %v1279
        %1441 = vmatprep.subr.bf16.mxu0 %v1282
        %1442 = vmatpush1.bf16.msra.mxu0 %v1281
        %1443 = vmatprep.subr.bf16.mxu0 %v1284
        %1444 = vmatpush1.bf16.msra.mxu0 %v1283
        %1445 = vmatprep.subr.bf16.mxu0 %v1286
        %1446 = vmatpush1.bf16.msra.mxu0 %v1285
        %1447 = vmatprep.subr.bf16.mxu0 %v1288
        %1448 = vmatpush1.bf16.msra.mxu0 %v1287
        %1449 = vmatprep.subr.bf16.mxu0 %v1290
        %1450 = vmatpush1.bf16.msra.mxu0 %v1289
        %1451 = vmatprep.subr.bf16.mxu0 %v1292
        %1452 = vmatpush1.bf16.msra.mxu0 %v1291
        %1453 = vmatprep.subr.bf16.mxu0 %v1294
        %1454 = vmatpush1.bf16.msra.mxu0 %v1293
        %1455 = vmatprep.subr.bf16.mxu0 %v1296
        %1456 = vmatpush1.bf16.msra.mxu0 %v1295
        %1457 = vmatprep.subr.bf16.mxu0 %v1298
        %1458 = vmatpush1.bf16.msra.mxu0 %v1297
        %1459 = vmatprep.subr.bf16.mxu0 %v1300
        %1460 = vmatpush1.bf16.msra.mxu0 %v1299
        %1461 = vmatprep.subr.bf16.mxu0 %v1302
        %1462 = vmatpush1.bf16.msra.mxu0 %v1301
        %1463 = vmatprep.subr.bf16.mxu0 %v1304
        %1464 = vmatpush1.bf16.msra.mxu0 %v1303
        %1465 = vmatprep.subr.bf16.mxu0 %v1306
        %1466 = vmatpush1.bf16.msra.mxu0 %v1305
        %1467 = vmatprep.subr.bf16.mxu0 %v1308
        %1468 = vmatpush1.bf16.msra.mxu0 %v1307
        %1469 = vmatprep.mubr.bf16.mxu0 %v941
        %1470 = vmatmul.mubr.bf16.gmra.mrb[0].mxu0 %v940
        %v1471 = vpop.f32.mrb[0].mxu0
        %v1472 = vadd.f32 %v1030, %v1471
        %v1473 = vpop.f32.mrb[0].mxu0
        %v1474 = vadd.f32 %v1034, %v1473
        %v1475 = vpop.f32.mrb[0].mxu0
        %v1476 = vadd.f32 %v1030, %v1475
        %v1477 = vpop.f32.mrb[0].mxu0
        %v1478 = vadd.f32 %v1034, %v1477
        %1479 = vdwg.mxu0
        %1480 = vmatprep.subr.bf16.mxu0 %v1310
        %1481 = vmatpush1.bf16.msra.mxu0 %v1309
        %1482 = vmatprep.subr.bf16.mxu0 %v1312
        %1483 = vmatpush1.bf16.msra.mxu0 %v1311
        %1484 = vmatprep.subr.bf16.mxu0 %v1314
        %1485 = vmatpush1.bf16.msra.mxu0 %v1313
        %1486 = vmatprep.subr.bf16.mxu0 %v1316
        %1487 = vmatpush1.bf16.msra.mxu0 %v1315
        %1488 = vmatprep.subr.bf16.mxu0 %v1318
        %1489 = vmatpush1.bf16.msra.mxu0 %v1317
        %1490 = vmatprep.subr.bf16.mxu0 %v1320
        %1491 = vmatpush1.bf16.msra.mxu0 %v1319
        %1492 = vmatprep.subr.bf16.mxu0 %v1322
        %1493 = vmatpush1.bf16.msra.mxu0 %v1321
        %1494 = vmatprep.subr.bf16.mxu0 %v1324
        %1495 = vmatpush1.bf16.msra.mxu0 %v1323
        %1496 = vmatprep.subr.bf16.mxu0 %v1326
        %1497 = vmatpush1.bf16.msra.mxu0 %v1325
        %1498 = vmatprep.subr.bf16.mxu0 %v1328
        %1499 = vmatpush1.bf16.msra.mxu0 %v1327
        %1500 = vmatprep.subr.bf16.mxu0 %v1330
        %1501 = vmatpush1.bf16.msra.mxu0 %v1329
        %1502 = vmatprep.subr.bf16.mxu0 %v1332
        %1503 = vmatpush1.bf16.msra.mxu0 %v1331
        %1504 = vmatprep.subr.bf16.mxu0 %v1334
        %1505 = vmatpush1.bf16.msra.mxu0 %v1333
        %1506 = vmatprep.subr.bf16.mxu0 %v1336
        %1507 = vmatpush1.bf16.msra.mxu0 %v1335
        %1508 = vmatprep.subr.bf16.mxu0 %v1338
        %1509 = vmatpush1.bf16.msra.mxu0 %v1337
        %1510 = vmatprep.subr.bf16.mxu0 %v1340
        %1511 = vmatpush1.bf16.msra.mxu0 %v1339
        %1512 = vmatprep.mubr.bf16.mxu0 %v943
        %1513 = vmatmul.mubr.bf16.gmra.mrb[0].mxu0 %v942
        %v1514 = vpop.f32.mrb[0].mxu0
        %v1515 = vadd.f32 %v1472, %v1514
        %v1516 = vpop.f32.mrb[0].mxu0
        %v1517 = vadd.f32 %v1474, %v1516
        %v1518 = vpop.f32.mrb[0].mxu0
        %v1519 = vadd.f32 %v1476, %v1518
        %v1520 = vpop.f32.mrb[0].mxu0
        %v1521 = vadd.f32 %v1478, %v1520
        %1522 = vdwg.mxu0
        %1523 = vmatprep.subr.bf16.mxu0 %v1342
        %1524 = vmatpush1.bf16.msra.mxu0 %v1341
        %1525 = vmatprep.subr.bf16.mxu0 %v1344
        %1526 = vmatpush1.bf16.msra.mxu0 %v1343
        %1527 = vmatprep.subr.bf16.mxu0 %v1346
        %1528 = vmatpush1.bf16.msra.mxu0 %v1345
        %1529 = vmatprep.subr.bf16.mxu0 %v1348
        %1530 = vmatpush1.bf16.msra.mxu0 %v1347
        %1531 = vmatprep.subr.bf16.mxu0 %v1350
        %1532 = vmatpush1.bf16.msra.mxu0 %v1349
        %1533 = vmatprep.subr.bf16.mxu0 %v1352
        %1534 = vmatpush1.bf16.msra.mxu0 %v1351
        %1535 = vmatprep.subr.bf16.mxu0 %v1354
        %1536 = vmatpush1.bf16.msra.mxu0 %v1353
        %1537 = vmatprep.subr.bf16.mxu0 %v1356
        %1538 = vmatpush1.bf16.msra.mxu0 %v1355
        %1539 = vmatprep.subr.bf16.mxu0 0
        %1540 = vmatpush1.bf16.msra.mxu0 0
        %1541 = vmatprep.subr.bf16.mxu0 0
        %1542 = vmatpush1.bf16.msra.mxu0 0
        %1543 = vmatprep.subr.bf16.mxu0 0
        %1544 = vmatpush1.bf16.msra.mxu0 0
        %1545 = vmatprep.subr.bf16.mxu0 0
        %1546 = vmatpush1.bf16.msra.mxu0 0
        %1547 = vmatprep.subr.bf16.mxu0 0
        %1548 = vmatpush1.bf16.msra.mxu0 0
        %1549 = vmatprep.subr.bf16.mxu0 0
        %1550 = vmatpush1.bf16.msra.mxu0 0
        %1551 = vmatprep.subr.bf16.mxu0 0
        %1552 = vmatpush1.bf16.msra.mxu0 0
        %1553 = vmatprep.subr.bf16.mxu0 0
        %1554 = vmatpush1.bf16.msra.mxu0 0
        %1555 = vmatprep.mubr.bf16.mxu0 0
        %1556 = vmatmul.mubr.bf16.gmra.mrb[0].mxu0 %v944
        %v1557 = vpop.f32.mrb[0].mxu0
        %v1558 = vadd.f32 %v1515, %v1557
        %v1559 = vpop.f32.mrb[0].mxu0
        %v1560 = vadd.f32 %v1517, %v1559
        %v1561 = vpop.f32.mrb[0].mxu0
        %v1562 = vadd.f32 %v1519, %v1561
        %v1563 = vpop.f32.mrb[0].mxu0
        %v1564 = vadd.f32 %v1521, %v1563
        %1565 = vdwg.mxu0
        %v1566 = vtanh.pop %v1558
        %v1567 = vtanh.pop %v1560
        %v1568 = vtanh.pop %v1562
        %v1569 = vtanh.pop %v1564
        %v1570 = vpack.c.bf16 %v1568, %v1566
        %v1571 = vpack.c.bf16 %v1569, %v1567
        %v1572 = vld [vmem:[#allocation8] sm:$0xf]
        %v1573 = vld [vmem:[#allocation8 + $0x4] sm:$0xf]
        %v1574 = vld [vmem:[#allocation8 + $0x8] sm:$0xf]
        %v1575 = vld [vmem:[#allocation8 + $0xc] sm:$0xf]
        %v1576 = vld [vmem:[#allocation8 + $0x10] sm:$0xf]
        %v1577 = vld [vmem:[#allocation8 + $0x14] sm:$0xf]
        %v1578 = vld [vmem:[#allocation8 + $0x18] sm:$0xf]
        %v1579 = vld [vmem:[#allocation8 + $0x1c] sm:$0xf]
        %v1580 = vld [vmem:[#allocation8 + $0x20] sm:$0xf]
        %v1581 = vld [vmem:[#allocation8 + $0x24] sm:$0xf]
        %v1582 = vld [vmem:[#allocation8 + $0x28] sm:$0xf]
        %v1583 = vld [vmem:[#allocation8 + $0x2c] sm:$0xf]
        %v1584 = vld [vmem:[#allocation8 + $0x30] sm:$0xf]
        %v1585 = vld [vmem:[#allocation8 + $0x34] sm:$0xf]
        %v1586 = vld [vmem:[#allocation8 + $0x38] sm:$0xf]
        %v1587 = vld [vmem:[#allocation8 + $0x3c] sm:$0xf]
        %v1588 = vld [vmem:[#allocation8 + $0x40] sm:$0xf]
        %v1589 = vld [vmem:[#allocation8 + $0x44] sm:$0xf]
        %v1590 = vld [vmem:[#allocation8 + $0x48] sm:$0xf]
        %v1591 = vld [vmem:[#allocation8 + $0x4c] sm:$0xf]
        %v1592 = vld [vmem:[#allocation8 + $0x50] sm:$0xf]
        %v1593 = vld [vmem:[#allocation8 + $0x54] sm:$0xf]
        %v1594 = vld [vmem:[#allocation8 + $0x58] sm:$0xf]
        %v1595 = vld [vmem:[#allocation8 + $0x5c] sm:$0xf]
        %v1596 = vld [vmem:[#allocation8 + $0x60] sm:$0xf]
        %v1597 = vld [vmem:[#allocation8 + $0x64] sm:$0xf]
        %v1598 = vld [vmem:[#allocation8 + $0x68] sm:$0xf]
        %v1599 = vld [vmem:[#allocation8 + $0x6c] sm:$0xf]
        %v1600 = vld [vmem:[#allocation8 + $0x70] sm:$0xf]
        %v1601 = vld [vmem:[#allocation8 + $0x74] sm:$0xf]
        %v1602 = vld [vmem:[#allocation8 + $0x78] sm:$0xf]
        %v1603 = vld [vmem:[#allocation8 + $0x7c] sm:$0xf]
        %v1604 = vld [vmem:[%s6] sm:$0x1]
        %v1606 = vlaneseq
        %v1607 = vshrl.u32 %v1606, 7
        %v1608 = vsub.s32 0, %v1607
        %v1609 = vrot.slane %v1604, %v1608
        %v1643 = vunpack.c.l.b16 %v1572
        %v1644 = vunpack.c.l.b16 %v1573
        %v1645 = vunpack.c.l.b16 %v1574
        %v1646 = vunpack.c.l.b16 %v1575
        %v1647 = vunpack.c.l.b16 %v1576
        %v1648 = vunpack.c.l.b16 %v1577
        %v1649 = vunpack.c.l.b16 %v1578
        %v1650 = vunpack.c.l.b16 %v1579
        %v1651 = vunpack.c.l.b16 %v1580
        %v1652 = vunpack.c.l.b16 %v1581
        %v1653 = vunpack.c.l.b16 %v1582
        %v1654 = vunpack.c.l.b16 %v1583
        %v1655 = vunpack.c.l.b16 %v1584
        %v1656 = vunpack.c.l.b16 %v1585
        %v1657 = vunpack.c.l.b16 %v1586
        %v1658 = vunpack.c.l.b16 %v1587
        %v1659 = vunpack.c.l.b16 %v1588
        %v1660 = vunpack.c.l.b16 %v1589
        %v1661 = vunpack.c.l.b16 %v1590
        %v1662 = vunpack.c.l.b16 %v1591
        %v1663 = vunpack.c.l.b16 %v1592
        %v1664 = vunpack.c.l.b16 %v1593
        %v1665 = vunpack.c.l.b16 %v1594
        %v1666 = vunpack.c.l.b16 %v1595
        %v1667 = vunpack.c.l.b16 %v1596
        %v1668 = vunpack.c.l.b16 %v1597
        %v1669 = vunpack.c.l.b16 %v1598
        %v1670 = vunpack.c.l.b16 %v1599
        %v1671 = vunpack.c.l.b16 %v1600
        %v1672 = vunpack.c.l.b16 %v1601
        %v1673 = vunpack.c.l.b16 %v1602
        %v1674 = vunpack.c.l.b16 %v1603
        %v1675 = vpack.c.b16 %v1644, %v1643
        %v1676 = vpack.c.b16 %v1646, %v1645
        %v1677 = vpack.c.b16 %v1648, %v1647
        %v1678 = vpack.c.b16 %v1650, %v1649
        %v1679 = vpack.c.b16 %v1652, %v1651
        %v1680 = vpack.c.b16 %v1654, %v1653
        %v1681 = vpack.c.b16 %v1656, %v1655
        %v1682 = vpack.c.b16 %v1658, %v1657
        %v1683 = vpack.c.b16 %v1660, %v1659
        %v1684 = vpack.c.b16 %v1662, %v1661
        %v1685 = vpack.c.b16 %v1664, %v1663
        %v1686 = vpack.c.b16 %v1666, %v1665
        %v1687 = vpack.c.b16 %v1668, %v1667
        %v1688 = vpack.c.b16 %v1670, %v1669
        %v1689 = vpack.c.b16 %v1672, %v1671
        %v1690 = vpack.c.b16 %v1674, %v1673
        %1707 = vmatprep.subr.bf16.mxu0 0
        %1708 = vmatpush1.bf16.msra.mxu0 %v1675
        %1709 = vmatprep.subr.bf16.mxu0 0
        %1710 = vmatpush1.bf16.msra.mxu0 %v1676
        %1711 = vmatprep.subr.bf16.mxu0 0
        %1712 = vmatpush1.bf16.msra.mxu0 %v1677
        %1713 = vmatprep.subr.bf16.mxu0 0
        %1714 = vmatpush1.bf16.msra.mxu0 %v1678
        %1715 = vmatprep.subr.bf16.mxu0 0
        %1716 = vmatpush1.bf16.msra.mxu0 %v1679
        %1717 = vmatprep.subr.bf16.mxu0 0
        %1718 = vmatpush1.bf16.msra.mxu0 %v1680
        %1719 = vmatprep.subr.bf16.mxu0 0
        %1720 = vmatpush1.bf16.msra.mxu0 %v1681
        %1721 = vmatprep.subr.bf16.mxu0 0
        %1722 = vmatpush1.bf16.msra.mxu0 %v1682
        %1723 = vmatprep.subr.bf16.mxu0 0
        %1724 = vmatpush1.bf16.msra.mxu0 %v1683
        %1725 = vmatprep.subr.bf16.mxu0 0
        %1726 = vmatpush1.bf16.msra.mxu0 %v1684
        %1727 = vmatprep.subr.bf16.mxu0 0
        %1728 = vmatpush1.bf16.msra.mxu0 %v1685
        %1729 = vmatprep.subr.bf16.mxu0 0
        %1730 = vmatpush1.bf16.msra.mxu0 %v1686
        %1731 = vmatprep.subr.bf16.mxu0 0
        %1732 = vmatpush1.bf16.msra.mxu0 %v1687
        %1733 = vmatprep.subr.bf16.mxu0 0
        %1734 = vmatpush1.bf16.msra.mxu0 %v1688
        %1735 = vmatprep.subr.bf16.mxu0 0
        %1736 = vmatpush1.bf16.msra.mxu0 %v1689
        %1737 = vmatprep.subr.bf16.mxu0 0
        %1738 = vmatpush1.bf16.msra.mxu0 %v1690
        %1739 = vmatprep.mubr.bf16.mxu0 %v1571
        %1740 = vmatmul.mubr.bf16.gmra.mrb[0].mxu0 %v1570
        %v1741 = vpop.f32.mrb[0].mxu0
        %v1742 = vadd.f32 %v1609, %v1741
        %v1743 = vpop.f32.mrb[0].mxu0
        %v1744 = vpop.f32.mrb[0].mxu0
        %v1745 = vadd.f32 %v1609, %v1744
        %v1746 = vpop.f32.mrb[0].mxu0
        %1747 = vdwg.mxu0
        %v1748 = vtanh.pop %v1742
        %v1749 = vtanh.pop %v1745
        %v1750 = vpack.c.bf16 %v1749, %v1748
        %v1751 = vld [vmem:[#allocation10] sm:$0xf]
        %v1752 = vld [vmem:[#allocation10 + $0x4] sm:$0xf]
        %v1753 = vld [vmem:[#allocation10 + $0x8] sm:$0xf]
        %v1754 = vld [vmem:[#allocation10 + $0xc] sm:$0xf]
        %v1755 = vld [vmem:[#allocation10 + $0x10] sm:$0xf]
        %v1756 = vld [vmem:[#allocation10 + $0x14] sm:$0xf]
        %v1757 = vld [vmem:[#allocation10 + $0x18] sm:$0xf]
        %v1758 = vld [vmem:[#allocation10 + $0x1c] sm:$0xf]
        %v1759 = vld [vmem:[#allocation10 + $0x20] sm:$0xf]
        %v1760 = vld [vmem:[#allocation10 + $0x24] sm:$0xf]
        %v1761 = vld [vmem:[#allocation10 + $0x28] sm:$0xf]
        %v1762 = vld [vmem:[#allocation10 + $0x2c] sm:$0xf]
        %v1763 = vld [vmem:[#allocation10 + $0x30] sm:$0xf]
        %v1764 = vld [vmem:[#allocation10 + $0x34] sm:$0xf]
        %v1765 = vld [vmem:[#allocation10 + $0x38] sm:$0xf]
        %v1766 = vld [vmem:[#allocation10 + $0x3c] sm:$0xf]
        %v1767 = vld [vmem:[%s8] sm:$0x1]
        %v1769 = vlaneseq
        %v1770 = vshrl.u32 %v1769, 7
        %v1771 = vsub.s32 0, %v1770
        %v1772 = vrot.slane %v1767, %v1771
        %v1790 = vunpack.c.l.b16 %v1751
        %v1791 = vunpack.c.l.b16 %v1752
        %v1792 = vunpack.c.l.b16 %v1753
        %v1793 = vunpack.c.l.b16 %v1754
        %v1794 = vunpack.c.l.b16 %v1755
        %v1795 = vunpack.c.l.b16 %v1756
        %v1796 = vunpack.c.l.b16 %v1757
        %v1797 = vunpack.c.l.b16 %v1758
        %v1798 = vunpack.c.l.b16 %v1759
        %v1799 = vunpack.c.l.b16 %v1760
        %v1800 = vunpack.c.l.b16 %v1761
        %v1801 = vunpack.c.l.b16 %v1762
        %v1802 = vunpack.c.l.b16 %v1763
        %v1803 = vunpack.c.l.b16 %v1764
        %v1804 = vunpack.c.l.b16 %v1765
        %v1805 = vunpack.c.l.b16 %v1766
        %v1806 = vpack.c.b16 %v1791, %v1790
        %v1807 = vpack.c.b16 %v1793, %v1792
        %v1808 = vpack.c.b16 %v1795, %v1794
        %v1809 = vpack.c.b16 %v1797, %v1796
        %v1810 = vpack.c.b16 %v1799, %v1798
        %v1811 = vpack.c.b16 %v1801, %v1800
        %v1812 = vpack.c.b16 %v1803, %v1802
        %v1813 = vpack.c.b16 %v1805, %v1804
        %1822 = vmatprep.subr.bf16.mxu0 0
        %1823 = vmatpush1.bf16.msra.mxu0 %v1806
        %1824 = vmatprep.subr.bf16.mxu0 0
        %1825 = vmatpush1.bf16.msra.mxu0 %v1807
        %1826 = vmatprep.subr.bf16.mxu0 0
        %1827 = vmatpush1.bf16.msra.mxu0 %v1808
        %1828 = vmatprep.subr.bf16.mxu0 0
        %1829 = vmatpush1.bf16.msra.mxu0 %v1809
        %1830 = vmatprep.subr.bf16.mxu0 0
        %1831 = vmatpush1.bf16.msra.mxu0 %v1810
        %1832 = vmatprep.subr.bf16.mxu0 0
        %1833 = vmatpush1.bf16.msra.mxu0 %v1811
        %1834 = vmatprep.subr.bf16.mxu0 0
        %1835 = vmatpush1.bf16.msra.mxu0 %v1812
        %1836 = vmatprep.subr.bf16.mxu0 0
        %1837 = vmatpush1.bf16.msra.mxu0 %v1813
        %1838 = vmatprep.subr.bf16.mxu0 0
        %1839 = vmatpush1.bf16.msra.mxu0 0
        %1840 = vmatprep.subr.bf16.mxu0 0
        %1841 = vmatpush1.bf16.msra.mxu0 0
        %1842 = vmatprep.subr.bf16.mxu0 0
        %1843 = vmatpush1.bf16.msra.mxu0 0
        %1844 = vmatprep.subr.bf16.mxu0 0
        %1845 = vmatpush1.bf16.msra.mxu0 0
        %1846 = vmatprep.subr.bf16.mxu0 0
        %1847 = vmatpush1.bf16.msra.mxu0 0
        %1848 = vmatprep.subr.bf16.mxu0 0
        %1849 = vmatpush1.bf16.msra.mxu0 0
        %1850 = vmatprep.subr.bf16.mxu0 0
        %1851 = vmatpush1.bf16.msra.mxu0 0
        %1852 = vmatprep.subr.bf16.mxu0 0
        %1853 = vmatpush1.bf16.msra.mxu0 0
        %1854 = vmatprep.mubr.bf16.mxu0 0
        %1855 = vmatmul.mubr.bf16.gmra.mrb[0].mxu0 %v1750
        %v1856 = vpop.f32.mrb[0].mxu0
        %v1857 = vadd.f32 %v1772, %v1856
        %v1858 = vpop.f32.mrb[0].mxu0
        %v1859 = vpop.f32.mrb[0].mxu0
        %v1860 = vadd.f32 %v1772, %v1859
        %v1861 = vpop.f32.mrb[0].mxu0
        %1862 = vdwg.mxu0
        %v1863 = vtanh.pop %v1857
        %v1864 = vtanh.pop %v1860
        %v1865 = vadd.f32 %v1863, %v924
        %v1866 = vadd.f32 %v1864, %v928
        %v1867 = vpack.c.bf16 %v1866, %v1865
        %v1868 = vld [vmem:[#allocation11] sm:$0xf]
        %v1869 = vld [vmem:[#allocation11 + $0x4] sm:$0xf]
        %v1870 = vld [vmem:[#allocation11 + $0x8] sm:$0xf]
        %v1871 = vld [vmem:[#allocation11 + $0xc] sm:$0xf]
        %v1872 = vld [vmem:[#allocation11 + $0x10] sm:$0xf]
        %v1873 = vld [vmem:[#allocation11 + $0x14] sm:$0xf]
        %v1874 = vld [vmem:[#allocation11 + $0x18] sm:$0xf]
        %v1875 = vld [vmem:[#allocation11 + $0x1c] sm:$0xf]
        %v1876 = vld [vmem:[#allocation11 + $0x20] sm:$0xf]
        %v1877 = vld [vmem:[#allocation11 + $0x24] sm:$0xf]
        %v1878 = vld [vmem:[#allocation11 + $0x28] sm:$0xf]
        %v1879 = vld [vmem:[#allocation11 + $0x2c] sm:$0xf]
        %v1880 = vld [vmem:[#allocation11 + $0x30] sm:$0xf]
        %v1881 = vld [vmem:[#allocation11 + $0x34] sm:$0xf]
        %v1882 = vld [vmem:[#allocation11 + $0x38] sm:$0xf]
        %v1883 = vld [vmem:[#allocation11 + $0x3c] sm:$0xf]
        %v1884 = vld [vmem:[%s10] sm:$0x1]
        %v1886 = vlaneseq
        %v1887 = vshrl.u32 %v1886, 7
        %v1888 = vsub.s32 0, %v1887
        %v1889 = vrot.slane %v1884, %v1888
        %v1907 = vunpack.c.l.b16 %v1868
        %v1908 = vunpack.c.l.b16 %v1869
        %v1909 = vunpack.c.l.b16 %v1870
        %v1910 = vunpack.c.l.b16 %v1871
        %v1911 = vunpack.c.l.b16 %v1872
        %v1912 = vunpack.c.l.b16 %v1873
        %v1913 = vunpack.c.l.b16 %v1874
        %v1914 = vunpack.c.l.b16 %v1875
        %v1915 = vunpack.c.l.b16 %v1876
        %v1916 = vunpack.c.l.b16 %v1877
        %v1917 = vunpack.c.l.b16 %v1878
        %v1918 = vunpack.c.l.b16 %v1879
        %v1919 = vunpack.c.l.b16 %v1880
        %v1920 = vunpack.c.l.b16 %v1881
        %v1921 = vunpack.c.l.b16 %v1882
        %v1922 = vunpack.c.l.b16 %v1883
        %v1923 = vpack.c.b16 %v1908, %v1907
        %v1924 = vpack.c.b16 %v1910, %v1909
        %v1925 = vpack.c.b16 %v1912, %v1911
        %v1926 = vpack.c.b16 %v1914, %v1913
        %v1927 = vpack.c.b16 %v1916, %v1915
        %v1928 = vpack.c.b16 %v1918, %v1917
        %v1929 = vpack.c.b16 %v1920, %v1919
        %v1930 = vpack.c.b16 %v1922, %v1921
        %1939 = vmatprep.subr.bf16.mxu0 0
        %1940 = vmatpush1.bf16.msra.mxu0 %v1923
        %1941 = vmatprep.subr.bf16.mxu0 0
        %1942 = vmatpush1.bf16.msra.mxu0 %v1924
        %1943 = vmatprep.subr.bf16.mxu0 0
        %1944 = vmatpush1.bf16.msra.mxu0 %v1925
        %1945 = vmatprep.subr.bf16.mxu0 0
        %1946 = vmatpush1.bf16.msra.mxu0 %v1926
        %1947 = vmatprep.subr.bf16.mxu0 0
        %1948 = vmatpush1.bf16.msra.mxu0 %v1927
        %1949 = vmatprep.subr.bf16.mxu0 0
        %1950 = vmatpush1.bf16.msra.mxu0 %v1928
        %1951 = vmatprep.subr.bf16.mxu0 0
        %1952 = vmatpush1.bf16.msra.mxu0 %v1929
        %1953 = vmatprep.subr.bf16.mxu0 0
        %1954 = vmatpush1.bf16.msra.mxu0 %v1930
        %1955 = vmatprep.subr.bf16.mxu0 0
        %1956 = vmatpush1.bf16.msra.mxu0 0
        %1957 = vmatprep.subr.bf16.mxu0 0
        %1958 = vmatpush1.bf16.msra.mxu0 0
        %1959 = vmatprep.subr.bf16.mxu0 0
        %1960 = vmatpush1.bf16.msra.mxu0 0
        %1961 = vmatprep.subr.bf16.mxu0 0
        %1962 = vmatpush1.bf16.msra.mxu0 0
        %1963 = vmatprep.subr.bf16.mxu0 0
        %1964 = vmatpush1.bf16.msra.mxu0 0
        %1965 = vmatprep.subr.bf16.mxu0 0
        %1966 = vmatpush1.bf16.msra.mxu0 0
        %1967 = vmatprep.subr.bf16.mxu0 0
        %1968 = vmatpush1.bf16.msra.mxu0 0
        %1969 = vmatprep.subr.bf16.mxu0 0
        %1970 = vmatpush1.bf16.msra.mxu0 0
        %1971 = vmatprep.mubr.bf16.mxu0 0
        %1972 = vmatmul.mubr.bf16.gmra.mrb[0].mxu0 %v1867
        %v1973 = vpop.f32.mrb[0].mxu0
        %v1974 = vadd.f32 %v1889, %v1973
        %v1975 = vpop.f32.mrb[0].mxu0
        %v1976 = vpop.f32.mrb[0].mxu0
        %v1977 = vadd.f32 %v1889, %v1976
        %v1978 = vpop.f32.mrb[0].mxu0
        %1979 = vdwg.mxu0
        %v1980 = vtanh.pop %v1974
        %v1981 = vtanh.pop %v1977
        %v1982 = vpack.c.bf16 %v1981, %v1980
        %v1983 = vld [vmem:[#allocation13] sm:$0xff]
        %v1984 = vld [vmem:[#allocation13 + $0x8] sm:$0xff]
        %v1985 = vld [vmem:[#allocation13 + $0x10] sm:$0xff]
        %v1986 = vld [vmem:[#allocation13 + $0x18] sm:$0xff]
        %v1987 = vld [vmem:[#allocation13 + $0x20] sm:$0xff]
        %v1988 = vld [vmem:[#allocation13 + $0x28] sm:$0xff]
        %v1989 = vld [vmem:[#allocation13 + $0x30] sm:$0xff]
        %v1990 = vld [vmem:[#allocation13 + $0x38] sm:$0xff]
        %v1991 = vld [vmem:[#allocation13 + $0x40] sm:$0xff]
        %v1992 = vld [vmem:[#allocation13 + $0x48] sm:$0xff]
        %v1993 = vld [vmem:[#allocation13 + $0x50] sm:$0xff]
        %v1994 = vld [vmem:[#allocation13 + $0x58] sm:$0xff]
        %v1995 = vld [vmem:[#allocation13 + $0x60] sm:$0xff]
        %v1996 = vld [vmem:[#allocation13 + $0x68] sm:$0xff]
        %v1997 = vld [vmem:[#allocation13 + $0x70] sm:$0xff]
        %v1998 = vld [vmem:[#allocation13 + $0x78] sm:$0xff]
        %v1999 = vld [vmem:[%s12] sm:$0x3]
        %v2001 = vlaneseq
        %v2002 = vshrl.u32 %v2001, 7
        %v2003 = vsub.s32 0, %v2002
        %v2004 = vrot.slane %v1999, %v2003
        %v2005 = vlaneseq
        %v2006 = vshrl.u32 %v2005, 7
        %v2007 = vsub.s32 1, %v2006
        %v2008 = vrot.slane %v1999, %v2007
        %v2027 = vunpack.c.l.b16 %v1983
        %v2028 = vunpack.c.h.b16 %v1983
        %v2029 = vunpack.c.l.b16 %v1984
        %v2030 = vunpack.c.h.b16 %v1984
        %v2031 = vunpack.c.l.b16 %v1985
        %v2032 = vunpack.c.h.b16 %v1985
        %v2033 = vunpack.c.l.b16 %v1986
        %v2034 = vunpack.c.h.b16 %v1986
        %v2035 = vunpack.c.l.b16 %v1987
        %v2036 = vunpack.c.h.b16 %v1987
        %v2037 = vunpack.c.l.b16 %v1988
        %v2038 = vunpack.c.h.b16 %v1988
        %v2039 = vunpack.c.l.b16 %v1989
        %v2040 = vunpack.c.h.b16 %v1989
        %v2041 = vunpack.c.l.b16 %v1990
        %v2042 = vunpack.c.h.b16 %v1990
        %v2043 = vunpack.c.l.b16 %v1991
        %v2044 = vunpack.c.h.b16 %v1991
        %v2045 = vunpack.c.l.b16 %v1992
        %v2046 = vunpack.c.h.b16 %v1992
        %v2047 = vunpack.c.l.b16 %v1993
        %v2048 = vunpack.c.h.b16 %v1993
        %v2049 = vunpack.c.l.b16 %v1994
        %v2050 = vunpack.c.h.b16 %v1994
        %v2051 = vunpack.c.l.b16 %v1995
        %v2052 = vunpack.c.h.b16 %v1995
        %v2053 = vunpack.c.l.b16 %v1996
        %v2054 = vunpack.c.h.b16 %v1996
        %v2055 = vunpack.c.l.b16 %v1997
        %v2056 = vunpack.c.h.b16 %v1997
        %v2057 = vunpack.c.l.b16 %v1998
        %v2058 = vunpack.c.h.b16 %v1998
        %v2059 = vpack.c.b16 %v2029, %v2027
        %v2060 = vpack.c.b16 %v2030, %v2028
        %v2061 = vpack.c.b16 %v2033, %v2031
        %v2062 = vpack.c.b16 %v2034, %v2032
        %v2063 = vpack.c.b16 %v2037, %v2035
        %v2064 = vpack.c.b16 %v2038, %v2036
        %v2065 = vpack.c.b16 %v2041, %v2039
        %v2066 = vpack.c.b16 %v2042, %v2040
        %v2067 = vpack.c.b16 %v2045, %v2043
        %v2068 = vpack.c.b16 %v2046, %v2044
        %v2069 = vpack.c.b16 %v2049, %v2047
        %v2070 = vpack.c.b16 %v2050, %v2048
        %v2071 = vpack.c.b16 %v2053, %v2051
        %v2072 = vpack.c.b16 %v2054, %v2052
        %v2073 = vpack.c.b16 %v2057, %v2055
        %v2074 = vpack.c.b16 %v2058, %v2056
        %2091 = vmatprep.subr.bf16.mxu0 %v2060
        %2092 = vmatpush1.bf16.msra.mxu0 %v2059
        %2093 = vmatprep.subr.bf16.mxu0 %v2062
        %2094 = vmatpush1.bf16.msra.mxu0 %v2061
        %2095 = vmatprep.subr.bf16.mxu0 %v2064
        %2096 = vmatpush1.bf16.msra.mxu0 %v2063
        %2097 = vmatprep.subr.bf16.mxu0 %v2066
        %2098 = vmatpush1.bf16.msra.mxu0 %v2065
        %2099 = vmatprep.subr.bf16.mxu0 %v2068
        %2100 = vmatpush1.bf16.msra.mxu0 %v2067
        %2101 = vmatprep.subr.bf16.mxu0 %v2070
        %2102 = vmatpush1.bf16.msra.mxu0 %v2069
        %2103 = vmatprep.subr.bf16.mxu0 %v2072
        %2104 = vmatpush1.bf16.msra.mxu0 %v2071
        %2105 = vmatprep.subr.bf16.mxu0 %v2074
        %2106 = vmatpush1.bf16.msra.mxu0 %v2073
        %2107 = vmatprep.subr.bf16.mxu0 0
        %2108 = vmatpush1.bf16.msra.mxu0 0
        %2109 = vmatprep.subr.bf16.mxu0 0
        %2110 = vmatpush1.bf16.msra.mxu0 0
        %2111 = vmatprep.subr.bf16.mxu0 0
        %2112 = vmatpush1.bf16.msra.mxu0 0
        %2113 = vmatprep.subr.bf16.mxu0 0
        %2114 = vmatpush1.bf16.msra.mxu0 0
        %2115 = vmatprep.subr.bf16.mxu0 0
        %2116 = vmatpush1.bf16.msra.mxu0 0
        %2117 = vmatprep.subr.bf16.mxu0 0
        %2118 = vmatpush1.bf16.msra.mxu0 0
        %2119 = vmatprep.subr.bf16.mxu0 0
        %2120 = vmatpush1.bf16.msra.mxu0 0
        %2121 = vmatprep.subr.bf16.mxu0 0
        %2122 = vmatpush1.bf16.msra.mxu0 0
        %2123 = vmatprep.mubr.bf16.mxu0 0
        %2124 = vmatmul.mubr.bf16.gmra.mrb[0].mxu0 %v1982
        %v2125 = vpop.f32.mrb[0].mxu0
        %v2126 = vadd.f32 %v2004, %v2125
        %v2127 = vpop.f32.mrb[0].mxu0
        %v2128 = vadd.f32 %v2008, %v2127
        %v2129 = vpop.f32.mrb[0].mxu0
        %v2130 = vadd.f32 %v2004, %v2129
        %v2131 = vpop.f32.mrb[0].mxu0
        %v2132 = vadd.f32 %v2008, %v2131
        %2133 = vdwg.mxu0
        %v2134 = vtanh.pop %v2126
        %v2135 = vtanh.pop %v2128
        %v2136 = vtanh.pop %v2130
        %v2137 = vtanh.pop %v2132
        %v2138 = vpack.c.bf16 %v2136, %v2134
        %v2139 = vpack.c.bf16 %v2137, %v2135
        %v2140 = vld [vmem:[#allocation14] sm:$0xff]
        %v2141 = vld [vmem:[#allocation14 + $0x8] sm:$0xff]
        %v2142 = vld [vmem:[#allocation14 + $0x10] sm:$0xf]
        %v2143 = vld [vmem:[#allocation14 + $0x14] sm:$0xff]
        %v2144 = vld [vmem:[#allocation14 + $0x1c] sm:$0xff]
        %v2145 = vld [vmem:[#allocation14 + $0x24] sm:$0xf]
        %v2146 = vld [vmem:[#allocation14 + $0x28] sm:$0xff]
        %v2147 = vld [vmem:[#allocation14 + $0x30] sm:$0xff]
        %v2148 = vld [vmem:[#allocation14 + $0x38] sm:$0xf]
        %v2149 = vld [vmem:[#allocation14 + $0x3c] sm:$0xff]
        %v2150 = vld [vmem:[#allocation14 + $0x44] sm:$0xff]
        %v2151 = vld [vmem:[#allocation14 + $0x4c] sm:$0xf]
        %v2152 = vld [vmem:[#allocation14 + $0x50] sm:$0xff]
        %v2153 = vld [vmem:[#allocation14 + $0x58] sm:$0xff]
        %v2154 = vld [vmem:[#allocation14 + $0x60] sm:$0xf]
        %v2155 = vld [vmem:[#allocation14 + $0x64] sm:$0xff]
        %v2156 = vld [vmem:[#allocation14 + $0x6c] sm:$0xff]
        %v2157 = vld [vmem:[#allocation14 + $0x74] sm:$0xf]
        %v2158 = vld [vmem:[#allocation14 + $0x78] sm:$0xff]
        %v2159 = vld [vmem:[#allocation14 + $0x80] sm:$0xff]
        %v2160 = vld [vmem:[#allocation14 + $0x88] sm:$0xf]
        %v2161 = vld [vmem:[#allocation14 + $0x8c] sm:$0xff]
        %v2162 = vld [vmem:[#allocation14 + $0x94] sm:$0xff]
        %v2163 = vld [vmem:[#allocation14 + $0x9c] sm:$0xf]
        %v2164 = vld [vmem:[#allocation14 + $0xa0] sm:$0xff]
        %v2165 = vld [vmem:[#allocation14 + $0xa8] sm:$0xff]
        %v2166 = vld [vmem:[#allocation14 + $0xb0] sm:$0xf]
        %v2167 = vld [vmem:[#allocation14 + $0xb4] sm:$0xff]
        %v2168 = vld [vmem:[#allocation14 + $0xbc] sm:$0xff]
        %v2169 = vld [vmem:[#allocation14 + $0xc4] sm:$0xf]
        %v2170 = vld [vmem:[#allocation14 + $0xc8] sm:$0xff]
        %v2171 = vld [vmem:[#allocation14 + $0xd0] sm:$0xff]
        %v2172 = vld [vmem:[#allocation14 + $0xd8] sm:$0xf]
        %v2173 = vld [vmem:[#allocation14 + $0xdc] sm:$0xff]
        %v2174 = vld [vmem:[#allocation14 + $0xe4] sm:$0xff]
        %v2175 = vld [vmem:[#allocation14 + $0xec] sm:$0xf]
        %v2176 = vld [vmem:[#allocation14 + $0xf0] sm:$0xff]
        %v2177 = vld [vmem:[#allocation14 + $0xf8] sm:$0xff]
        %v2178 = vld [vmem:[#allocation14 + $0x100] sm:$0xf]
        %v2179 = vld [vmem:[#allocation14 + $0x104] sm:$0xff]
        %v2180 = vld [vmem:[#allocation14 + $0x10c] sm:$0xff]
        %v2181 = vld [vmem:[#allocation14 + $0x114] sm:$0xf]
        %v2182 = vld [vmem:[#allocation14 + $0x118] sm:$0xff]
        %v2183 = vld [vmem:[#allocation14 + $0x120] sm:$0xff]
        %v2184 = vld [vmem:[#allocation14 + $0x128] sm:$0xf]
        %v2185 = vld [vmem:[#allocation14 + $0x12c] sm:$0xff]
        %v2186 = vld [vmem:[#allocation14 + $0x134] sm:$0xff]
        %v2187 = vld [vmem:[#allocation14 + $0x13c] sm:$0xf]
        %v2188 = vld [vmem:[#allocation14 + $0x140] sm:$0xff]
        %v2189 = vld [vmem:[#allocation14 + $0x148] sm:$0xff]
        %v2190 = vld [vmem:[#allocation14 + $0x150] sm:$0xf]
        %v2191 = vld [vmem:[#allocation14 + $0x154] sm:$0xff]
        %v2192 = vld [vmem:[#allocation14 + $0x15c] sm:$0xff]
        %v2193 = vld [vmem:[#allocation14 + $0x164] sm:$0xf]
        %v2194 = vld [vmem:[#allocation14 + $0x168] sm:$0xff]
        %v2195 = vld [vmem:[#allocation14 + $0x170] sm:$0xff]
        %v2196 = vld [vmem:[#allocation14 + $0x178] sm:$0xf]
        %v2197 = vld [vmem:[#allocation14 + $0x17c] sm:$0xff]
        %v2198 = vld [vmem:[#allocation14 + $0x184] sm:$0xff]
        %v2199 = vld [vmem:[#allocation14 + $0x18c] sm:$0xf]
        %v2200 = vld [vmem:[#allocation14 + $0x190] sm:$0xff]
        %v2201 = vld [vmem:[#allocation14 + $0x198] sm:$0xff]
        %v2202 = vld [vmem:[#allocation14 + $0x1a0] sm:$0xf]
        %v2203 = vld [vmem:[#allocation14 + $0x1a4] sm:$0xff]
        %v2204 = vld [vmem:[#allocation14 + $0x1ac] sm:$0xff]
        %v2205 = vld [vmem:[#allocation14 + $0x1b4] sm:$0xf]
        %v2206 = vld [vmem:[#allocation14 + $0x1b8] sm:$0xff]
        %v2207 = vld [vmem:[#allocation14 + $0x1c0] sm:$0xff]
        %v2208 = vld [vmem:[#allocation14 + $0x1c8] sm:$0xf]
        %v2209 = vld [vmem:[#allocation14 + $0x1cc] sm:$0xff]
        %v2210 = vld [vmem:[#allocation14 + $0x1d4] sm:$0xff]
        %v2211 = vld [vmem:[#allocation14 + $0x1dc] sm:$0xf]
        %v2212 = vld [vmem:[#allocation14 + $0x1e0] sm:$0xff]
        %v2213 = vld [vmem:[#allocation14 + $0x1e8] sm:$0xff]
        %v2214 = vld [vmem:[#allocation14 + $0x1f0] sm:$0xf]
        %v2215 = vld [vmem:[#allocation14 + $0x1f4] sm:$0xff]
        %v2216 = vld [vmem:[#allocation14 + $0x1fc] sm:$0xff]
        %v2217 = vld [vmem:[#allocation14 + $0x204] sm:$0xf]
        %v2218 = vld [vmem:[#allocation14 + $0x208] sm:$0xff]
        %v2219 = vld [vmem:[#allocation14 + $0x210] sm:$0xff]
        %v2220 = vld [vmem:[#allocation14 + $0x218] sm:$0xf]
        %v2221 = vld [vmem:[#allocation14 + $0x21c] sm:$0xff]
        %v2222 = vld [vmem:[#allocation14 + $0x224] sm:$0xff]
        %v2223 = vld [vmem:[#allocation14 + $0x22c] sm:$0xf]
        %v2224 = vld [vmem:[#allocation14 + $0x230] sm:$0xff]
        %v2225 = vld [vmem:[#allocation14 + $0x238] sm:$0xff]
        %v2226 = vld [vmem:[#allocation14 + $0x240] sm:$0xf]
        %v2227 = vld [vmem:[#allocation14 + $0x244] sm:$0xff]
        %v2228 = vld [vmem:[#allocation14 + $0x24c] sm:$0xff]
        %v2229 = vld [vmem:[#allocation14 + $0x254] sm:$0xf]
        %v2230 = vld [vmem:[#allocation14 + $0x258] sm:$0xff]
        %v2231 = vld [vmem:[#allocation14 + $0x260] sm:$0xff]
        %v2232 = vld [vmem:[#allocation14 + $0x268] sm:$0xf]
        %v2233 = vld [vmem:[#allocation14 + $0x26c] sm:$0xff]
        %v2234 = vld [vmem:[#allocation14 + $0x274] sm:$0xff]
        %v2235 = vld [vmem:[#allocation14 + $0x27c] sm:$0xf]
        %v2236 = vld [vmem:[%s14] sm:$0x1f]
        %v2238 = vlaneseq
        %v2239 = vshrl.u32 %v2238, 7
        %v2240 = vsub.s32 0, %v2239
        %v2241 = vrot.slane %v2236, %v2240
        %v2242 = vlaneseq
        %v2243 = vshrl.u32 %v2242, 7
        %v2244 = vsub.s32 1, %v2243
        %v2245 = vrot.slane %v2236, %v2244
        %v2246 = vlaneseq
        %v2247 = vshrl.u32 %v2246, 7
        %v2248 = vsub.s32 2, %v2247
        %v2249 = vrot.slane %v2236, %v2248
        %v2250 = vlaneseq
        %v2251 = vshrl.u32 %v2250, 7
        %v2252 = vsub.s32 3, %v2251
        %v2253 = vrot.slane %v2236, %v2252
        %v2254 = vlaneseq
        %v2255 = vshrl.u32 %v2254, 7
        %v2256 = vsub.s32 4, %v2255
        %v2257 = vrot.slane %v2236, %v2256
        %v2359 = vunpack.c.l.b16 %v2140
        %v2360 = vunpack.c.h.b16 %v2140
        %v2361 = vunpack.c.l.b16 %v2141
        %v2362 = vunpack.c.h.b16 %v2141
        %v2363 = vunpack.c.l.b16 %v2142
        %v2364 = vunpack.c.l.b16 %v2143
        %v2365 = vunpack.c.h.b16 %v2143
        %v2366 = vunpack.c.l.b16 %v2144
        %v2367 = vunpack.c.h.b16 %v2144
        %v2368 = vunpack.c.l.b16 %v2145
        %v2369 = vunpack.c.l.b16 %v2146
        %v2370 = vunpack.c.h.b16 %v2146
        %v2371 = vunpack.c.l.b16 %v2147
        %v2372 = vunpack.c.h.b16 %v2147
        %v2373 = vunpack.c.l.b16 %v2148
        %v2374 = vunpack.c.l.b16 %v2149
        %v2375 = vunpack.c.h.b16 %v2149
        %v2376 = vunpack.c.l.b16 %v2150
        %v2377 = vunpack.c.h.b16 %v2150
        %v2378 = vunpack.c.l.b16 %v2151
        %v2379 = vunpack.c.l.b16 %v2152
        %v2380 = vunpack.c.h.b16 %v2152
        %v2381 = vunpack.c.l.b16 %v2153
        %v2382 = vunpack.c.h.b16 %v2153
        %v2383 = vunpack.c.l.b16 %v2154
        %v2384 = vunpack.c.l.b16 %v2155
        %v2385 = vunpack.c.h.b16 %v2155
        %v2386 = vunpack.c.l.b16 %v2156
        %v2387 = vunpack.c.h.b16 %v2156
        %v2388 = vunpack.c.l.b16 %v2157
        %v2389 = vunpack.c.l.b16 %v2158
        %v2390 = vunpack.c.h.b16 %v2158
        %v2391 = vunpack.c.l.b16 %v2159
        %v2392 = vunpack.c.h.b16 %v2159
        %v2393 = vunpack.c.l.b16 %v2160
        %v2394 = vunpack.c.l.b16 %v2161
        %v2395 = vunpack.c.h.b16 %v2161
        %v2396 = vunpack.c.l.b16 %v2162
        %v2397 = vunpack.c.h.b16 %v2162
        %v2398 = vunpack.c.l.b16 %v2163
        %v2399 = vunpack.c.l.b16 %v2164
        %v2400 = vunpack.c.h.b16 %v2164
        %v2401 = vunpack.c.l.b16 %v2165
        %v2402 = vunpack.c.h.b16 %v2165
        %v2403 = vunpack.c.l.b16 %v2166
        %v2404 = vunpack.c.l.b16 %v2167
        %v2405 = vunpack.c.h.b16 %v2167
        %v2406 = vunpack.c.l.b16 %v2168
        %v2407 = vunpack.c.h.b16 %v2168
        %v2408 = vunpack.c.l.b16 %v2169
        %v2409 = vunpack.c.l.b16 %v2170
        %v2410 = vunpack.c.h.b16 %v2170
        %v2411 = vunpack.c.l.b16 %v2171
        %v2412 = vunpack.c.h.b16 %v2171
        %v2413 = vunpack.c.l.b16 %v2172
        %v2414 = vunpack.c.l.b16 %v2173
        %v2415 = vunpack.c.h.b16 %v2173
        %v2416 = vunpack.c.l.b16 %v2174
        %v2417 = vunpack.c.h.b16 %v2174
        %v2418 = vunpack.c.l.b16 %v2175
        %v2419 = vunpack.c.l.b16 %v2176
        %v2420 = vunpack.c.h.b16 %v2176
        %v2421 = vunpack.c.l.b16 %v2177
        %v2422 = vunpack.c.h.b16 %v2177
        %v2423 = vunpack.c.l.b16 %v2178
        %v2424 = vunpack.c.l.b16 %v2179
        %v2425 = vunpack.c.h.b16 %v2179
        %v2426 = vunpack.c.l.b16 %v2180
        %v2427 = vunpack.c.h.b16 %v2180
        %v2428 = vunpack.c.l.b16 %v2181
        %v2429 = vunpack.c.l.b16 %v2182
        %v2430 = vunpack.c.h.b16 %v2182
        %v2431 = vunpack.c.l.b16 %v2183
        %v2432 = vunpack.c.h.b16 %v2183
        %v2433 = vunpack.c.l.b16 %v2184
        %v2434 = vunpack.c.l.b16 %v2185
        %v2435 = vunpack.c.h.b16 %v2185
        %v2436 = vunpack.c.l.b16 %v2186
        %v2437 = vunpack.c.h.b16 %v2186
        %v2438 = vunpack.c.l.b16 %v2187
        %v2439 = vunpack.c.l.b16 %v2188
        %v2440 = vunpack.c.h.b16 %v2188
        %v2441 = vunpack.c.l.b16 %v2189
        %v2442 = vunpack.c.h.b16 %v2189
        %v2443 = vunpack.c.l.b16 %v2190
        %v2444 = vunpack.c.l.b16 %v2191
        %v2445 = vunpack.c.h.b16 %v2191
        %v2446 = vunpack.c.l.b16 %v2192
        %v2447 = vunpack.c.h.b16 %v2192
        %v2448 = vunpack.c.l.b16 %v2193
        %v2449 = vunpack.c.l.b16 %v2194
        %v2450 = vunpack.c.h.b16 %v2194
        %v2451 = vunpack.c.l.b16 %v2195
        %v2452 = vunpack.c.h.b16 %v2195
        %v2453 = vunpack.c.l.b16 %v2196
        %v2454 = vunpack.c.l.b16 %v2197
        %v2455 = vunpack.c.h.b16 %v2197
        %v2456 = vunpack.c.l.b16 %v2198
        %v2457 = vunpack.c.h.b16 %v2198
        %v2458 = vunpack.c.l.b16 %v2199
        %v2459 = vunpack.c.l.b16 %v2200
        %v2460 = vunpack.c.h.b16 %v2200
        %v2461 = vunpack.c.l.b16 %v2201
        %v2462 = vunpack.c.h.b16 %v2201
        %v2463 = vunpack.c.l.b16 %v2202
        %v2464 = vunpack.c.l.b16 %v2203
        %v2465 = vunpack.c.h.b16 %v2203
        %v2466 = vunpack.c.l.b16 %v2204
        %v2467 = vunpack.c.h.b16 %v2204
        %v2468 = vunpack.c.l.b16 %v2205
        %v2469 = vunpack.c.l.b16 %v2206
        %v2470 = vunpack.c.h.b16 %v2206
        %v2471 = vunpack.c.l.b16 %v2207
        %v2472 = vunpack.c.h.b16 %v2207
        %v2473 = vunpack.c.l.b16 %v2208
        %v2474 = vunpack.c.l.b16 %v2209
        %v2475 = vunpack.c.h.b16 %v2209
        %v2476 = vunpack.c.l.b16 %v2210
        %v2477 = vunpack.c.h.b16 %v2210
        %v2478 = vunpack.c.l.b16 %v2211
        %v2479 = vunpack.c.l.b16 %v2212
        %v2480 = vunpack.c.h.b16 %v2212
        %v2481 = vunpack.c.l.b16 %v2213
        %v2482 = vunpack.c.h.b16 %v2213
        %v2483 = vunpack.c.l.b16 %v2214
        %v2484 = vunpack.c.l.b16 %v2215
        %v2485 = vunpack.c.h.b16 %v2215
        %v2486 = vunpack.c.l.b16 %v2216
        %v2487 = vunpack.c.h.b16 %v2216
        %v2488 = vunpack.c.l.b16 %v2217
        %v2489 = vunpack.c.l.b16 %v2218
        %v2490 = vunpack.c.h.b16 %v2218
        %v2491 = vunpack.c.l.b16 %v2219
        %v2492 = vunpack.c.h.b16 %v2219
        %v2493 = vunpack.c.l.b16 %v2220
        %v2494 = vunpack.c.l.b16 %v2221
        %v2495 = vunpack.c.h.b16 %v2221
        %v2496 = vunpack.c.l.b16 %v2222
        %v2497 = vunpack.c.h.b16 %v2222
        %v2498 = vunpack.c.l.b16 %v2223
        %v2499 = vunpack.c.l.b16 %v2224
        %v2500 = vunpack.c.h.b16 %v2224
        %v2501 = vunpack.c.l.b16 %v2225
        %v2502 = vunpack.c.h.b16 %v2225
        %v2503 = vunpack.c.l.b16 %v2226
        %v2504 = vunpack.c.l.b16 %v2227
        %v2505 = vunpack.c.h.b16 %v2227
        %v2506 = vunpack.c.l.b16 %v2228
        %v2507 = vunpack.c.h.b16 %v2228
        %v2508 = vunpack.c.l.b16 %v2229
        %v2509 = vunpack.c.l.b16 %v2230
        %v2510 = vunpack.c.h.b16 %v2230
        %v2511 = vunpack.c.l.b16 %v2231
        %v2512 = vunpack.c.h.b16 %v2231
        %v2513 = vunpack.c.l.b16 %v2232
        %v2514 = vunpack.c.l.b16 %v2233
        %v2515 = vunpack.c.h.b16 %v2233
        %v2516 = vunpack.c.l.b16 %v2234
        %v2517 = vunpack.c.h.b16 %v2234
        %v2518 = vunpack.c.l.b16 %v2235
        %v2519 = vpack.c.b16 %v2364, %v2359
        %v2520 = vpack.c.b16 %v2365, %v2360
        %v2521 = vpack.c.b16 %v2366, %v2361
        %v2522 = vpack.c.b16 %v2367, %v2362
        %v2523 = vpack.c.b16 %v2368, %v2363
        %v2524 = vpack.c.b16 %v2374, %v2369
        %v2525 = vpack.c.b16 %v2375, %v2370
        %v2526 = vpack.c.b16 %v2376, %v2371
        %v2527 = vpack.c.b16 %v2377, %v2372
        %v2528 = vpack.c.b16 %v2378, %v2373
        %v2529 = vpack.c.b16 %v2384, %v2379
        %v2530 = vpack.c.b16 %v2385, %v2380
        %v2531 = vpack.c.b16 %v2386, %v2381
        %v2532 = vpack.c.b16 %v2387, %v2382
        %v2533 = vpack.c.b16 %v2388, %v2383
        %v2534 = vpack.c.b16 %v2394, %v2389
        %v2535 = vpack.c.b16 %v2395, %v2390
        %v2536 = vpack.c.b16 %v2396, %v2391
        %v2537 = vpack.c.b16 %v2397, %v2392
        %v2538 = vpack.c.b16 %v2398, %v2393
        %v2539 = vpack.c.b16 %v2404, %v2399
        %v2540 = vpack.c.b16 %v2405, %v2400
        %v2541 = vpack.c.b16 %v2406, %v2401
        %v2542 = vpack.c.b16 %v2407, %v2402
        %v2543 = vpack.c.b16 %v2408, %v2403
        %v2544 = vpack.c.b16 %v2414, %v2409
        %v2545 = vpack.c.b16 %v2415, %v2410
        %v2546 = vpack.c.b16 %v2416, %v2411
        %v2547 = vpack.c.b16 %v2417, %v2412
        %v2548 = vpack.c.b16 %v2418, %v2413
        %v2549 = vpack.c.b16 %v2424, %v2419
        %v2550 = vpack.c.b16 %v2425, %v2420
        %v2551 = vpack.c.b16 %v2426, %v2421
        %v2552 = vpack.c.b16 %v2427, %v2422
        %v2553 = vpack.c.b16 %v2428, %v2423
        %v2554 = vpack.c.b16 %v2434, %v2429
        %v2555 = vpack.c.b16 %v2435, %v2430
        %v2556 = vpack.c.b16 %v2436, %v2431
        %v2557 = vpack.c.b16 %v2437, %v2432
        %v2558 = vpack.c.b16 %v2438, %v2433
        %v2559 = vpack.c.b16 %v2444, %v2439
        %v2560 = vpack.c.b16 %v2445, %v2440
        %v2561 = vpack.c.b16 %v2446, %v2441
        %v2562 = vpack.c.b16 %v2447, %v2442
        %v2563 = vpack.c.b16 %v2448, %v2443
        %v2564 = vpack.c.b16 %v2454, %v2449
        %v2565 = vpack.c.b16 %v2455, %v2450
        %v2566 = vpack.c.b16 %v2456, %v2451
        %v2567 = vpack.c.b16 %v2457, %v2452
        %v2568 = vpack.c.b16 %v2458, %v2453
        %v2569 = vpack.c.b16 %v2464, %v2459
        %v2570 = vpack.c.b16 %v2465, %v2460
        %v2571 = vpack.c.b16 %v2466, %v2461
        %v2572 = vpack.c.b16 %v2467, %v2462
        %v2573 = vpack.c.b16 %v2468, %v2463
        %v2574 = vpack.c.b16 %v2474, %v2469
        %v2575 = vpack.c.b16 %v2475, %v2470
        %v2576 = vpack.c.b16 %v2476, %v2471
        %v2577 = vpack.c.b16 %v2477, %v2472
        %v2578 = vpack.c.b16 %v2478, %v2473
        %v2579 = vpack.c.b16 %v2484, %v2479
        %v2580 = vpack.c.b16 %v2485, %v2480
        %v2581 = vpack.c.b16 %v2486, %v2481
        %v2582 = vpack.c.b16 %v2487, %v2482
        %v2583 = vpack.c.b16 %v2488, %v2483
        %v2584 = vpack.c.b16 %v2494, %v2489
        %v2585 = vpack.c.b16 %v2495, %v2490
        %v2586 = vpack.c.b16 %v2496, %v2491
        %v2587 = vpack.c.b16 %v2497, %v2492
        %v2588 = vpack.c.b16 %v2498, %v2493
        %v2589 = vpack.c.b16 %v2504, %v2499
        %v2590 = vpack.c.b16 %v2505, %v2500
        %v2591 = vpack.c.b16 %v2506, %v2501
        %v2592 = vpack.c.b16 %v2507, %v2502
        %v2593 = vpack.c.b16 %v2508, %v2503
        %v2594 = vpack.c.b16 %v2514, %v2509
        %v2595 = vpack.c.b16 %v2515, %v2510
        %v2596 = vpack.c.b16 %v2516, %v2511
        %v2597 = vpack.c.b16 %v2517, %v2512
        %v2598 = vpack.c.b16 %v2518, %v2513
        %2679 = vmatprep.subr.bf16.mxu0 %v2520
        %2680 = vmatpush1.bf16.msra.mxu0 %v2519
        %2681 = vmatprep.subr.bf16.mxu0 %v2525
        %2682 = vmatpush1.bf16.msra.mxu0 %v2524
        %2683 = vmatprep.subr.bf16.mxu0 %v2530
        %2684 = vmatpush1.bf16.msra.mxu0 %v2529
        %2685 = vmatprep.subr.bf16.mxu0 %v2535
        %2686 = vmatpush1.bf16.msra.mxu0 %v2534
        %2687 = vmatprep.subr.bf16.mxu0 %v2540
        %2688 = vmatpush1.bf16.msra.mxu0 %v2539
        %2689 = vmatprep.subr.bf16.mxu0 %v2545
        %2690 = vmatpush1.bf16.msra.mxu0 %v2544
        %2691 = vmatprep.subr.bf16.mxu0 %v2550
        %2692 = vmatpush1.bf16.msra.mxu0 %v2549
        %2693 = vmatprep.subr.bf16.mxu0 %v2555
        %2694 = vmatpush1.bf16.msra.mxu0 %v2554
        %2695 = vmatprep.subr.bf16.mxu0 %v2560
        %2696 = vmatpush1.bf16.msra.mxu0 %v2559
        %2697 = vmatprep.subr.bf16.mxu0 %v2565
        %2698 = vmatpush1.bf16.msra.mxu0 %v2564
        %2699 = vmatprep.subr.bf16.mxu0 %v2570
        %2700 = vmatpush1.bf16.msra.mxu0 %v2569
        %2701 = vmatprep.subr.bf16.mxu0 %v2575
        %2702 = vmatpush1.bf16.msra.mxu0 %v2574
        %2703 = vmatprep.subr.bf16.mxu0 %v2580
        %2704 = vmatpush1.bf16.msra.mxu0 %v2579
        %2705 = vmatprep.subr.bf16.mxu0 %v2585
        %2706 = vmatpush1.bf16.msra.mxu0 %v2584
        %2707 = vmatprep.subr.bf16.mxu0 %v2590
        %2708 = vmatpush1.bf16.msra.mxu0 %v2589
        %2709 = vmatprep.subr.bf16.mxu0 %v2595
        %2710 = vmatpush1.bf16.msra.mxu0 %v2594
        %2711 = vmatprep.mubr.bf16.mxu0 %v2139
        %2712 = vmatmul.mubr.bf16.gmra.mrb[0].mxu0 %v2138
        %v2713 = vpop.f32.mrb[0].mxu0
        %v2714 = vadd.f32 %v2241, %v2713
        %v2715 = vpop.f32.mrb[0].mxu0
        %v2716 = vadd.f32 %v2245, %v2715
        %v2717 = vpop.f32.mrb[0].mxu0
        %v2718 = vadd.f32 %v2241, %v2717
        %v2719 = vpop.f32.mrb[0].mxu0
        %v2720 = vadd.f32 %v2245, %v2719
        %2721 = vdwg.mxu0
        %2722 = vmatprep.subr.bf16.mxu0 %v2522
        %2723 = vmatpush1.bf16.msra.mxu0 %v2521
        %2724 = vmatprep.subr.bf16.mxu0 %v2527
        %2725 = vmatpush1.bf16.msra.mxu0 %v2526
        %2726 = vmatprep.subr.bf16.mxu0 %v2532
        %2727 = vmatpush1.bf16.msra.mxu0 %v2531
        %2728 = vmatprep.subr.bf16.mxu0 %v2537
        %2729 = vmatpush1.bf16.msra.mxu0 %v2536
        %2730 = vmatprep.subr.bf16.mxu0 %v2542
        %2731 = vmatpush1.bf16.msra.mxu0 %v2541
        %2732 = vmatprep.subr.bf16.mxu0 %v2547
        %2733 = vmatpush1.bf16.msra.mxu0 %v2546
        %2734 = vmatprep.subr.bf16.mxu0 %v2552
        %2735 = vmatpush1.bf16.msra.mxu0 %v2551
        %2736 = vmatprep.subr.bf16.mxu0 %v2557
        %2737 = vmatpush1.bf16.msra.mxu0 %v2556
        %2738 = vmatprep.subr.bf16.mxu0 %v2562
        %2739 = vmatpush1.bf16.msra.mxu0 %v2561
        %2740 = vmatprep.subr.bf16.mxu0 %v2567
        %2741 = vmatpush1.bf16.msra.mxu0 %v2566
        %2742 = vmatprep.subr.bf16.mxu0 %v2572
        %2743 = vmatpush1.bf16.msra.mxu0 %v2571
        %2744 = vmatprep.subr.bf16.mxu0 %v2577
        %2745 = vmatpush1.bf16.msra.mxu0 %v2576
        %2746 = vmatprep.subr.bf16.mxu0 %v2582
        %2747 = vmatpush1.bf16.msra.mxu0 %v2581
        %2748 = vmatprep.subr.bf16.mxu0 %v2587
        %2749 = vmatpush1.bf16.msra.mxu0 %v2586
        %2750 = vmatprep.subr.bf16.mxu0 %v2592
        %2751 = vmatpush1.bf16.msra.mxu0 %v2591
        %2752 = vmatprep.subr.bf16.mxu0 %v2597
        %2753 = vmatpush1.bf16.msra.mxu0 %v2596
        %2754 = vmatprep.mubr.bf16.mxu0 %v2139
        %2755 = vmatmul.mubr.bf16.gmra.mrb[0].mxu0 %v2138
        %v2756 = vpop.f32.mrb[0].mxu0
        %v2757 = vadd.f32 %v2249, %v2756
        %v2758 = vpop.f32.mrb[0].mxu0
        %v2759 = vadd.f32 %v2253, %v2758
        %v2760 = vpop.f32.mrb[0].mxu0
        %v2761 = vadd.f32 %v2249, %v2760
        %v2762 = vpop.f32.mrb[0].mxu0
        %v2763 = vadd.f32 %v2253, %v2762
        %2764 = vdwg.mxu0
        %2765 = vmatprep.subr.bf16.mxu0 0
        %2766 = vmatpush1.bf16.msra.mxu0 %v2523
        %2767 = vmatprep.subr.bf16.mxu0 0
        %2768 = vmatpush1.bf16.msra.mxu0 %v2528
        %2769 = vmatprep.subr.bf16.mxu0 0
        %2770 = vmatpush1.bf16.msra.mxu0 %v2533
        %2771 = vmatprep.subr.bf16.mxu0 0
        %2772 = vmatpush1.bf16.msra.mxu0 %v2538
        %2773 = vmatprep.subr.bf16.mxu0 0
        %2774 = vmatpush1.bf16.msra.mxu0 %v2543
        %2775 = vmatprep.subr.bf16.mxu0 0
        %2776 = vmatpush1.bf16.msra.mxu0 %v2548
        %2777 = vmatprep.subr.bf16.mxu0 0
        %2778 = vmatpush1.bf16.msra.mxu0 %v2553
        %2779 = vmatprep.subr.bf16.mxu0 0
        %2780 = vmatpush1.bf16.msra.mxu0 %v2558
        %2781 = vmatprep.subr.bf16.mxu0 0
        %2782 = vmatpush1.bf16.msra.mxu0 %v2563
        %2783 = vmatprep.subr.bf16.mxu0 0
        %2784 = vmatpush1.bf16.msra.mxu0 %v2568
        %2785 = vmatprep.subr.bf16.mxu0 0
        %2786 = vmatpush1.bf16.msra.mxu0 %v2573
        %2787 = vmatprep.subr.bf16.mxu0 0
        %2788 = vmatpush1.bf16.msra.mxu0 %v2578
        %2789 = vmatprep.subr.bf16.mxu0 0
        %2790 = vmatpush1.bf16.msra.mxu0 %v2583
        %2791 = vmatprep.subr.bf16.mxu0 0
        %2792 = vmatpush1.bf16.msra.mxu0 %v2588
        %2793 = vmatprep.subr.bf16.mxu0 0
        %2794 = vmatpush1.bf16.msra.mxu0 %v2593
        %2795 = vmatprep.subr.bf16.mxu0 0
        %2796 = vmatpush1.bf16.msra.mxu0 %v2598
        %2797 = vmatprep.mubr.bf16.mxu0 %v2139
        %2798 = vmatmul.mubr.bf16.gmra.mrb[0].mxu0 %v2138
        %v2799 = vpop.f32.mrb[0].mxu0
        %v2800 = vadd.f32 %v2257, %v2799
        %v2801 = vpop.f32.mrb[0].mxu0
        %v2802 = vpop.f32.mrb[0].mxu0
        %v2803 = vadd.f32 %v2257, %v2802
        %v2804 = vpop.f32.mrb[0].mxu0
        %2805 = vdwg.mxu0
        %v2806 = vtanh.pop %v2714
        %v2807 = vtanh.pop %v2716
        %v2808 = vtanh.pop %v2757
        %v2809 = vtanh.pop %v2759
        %v2810 = vtanh.pop %v2800
        %v2811 = vtanh.pop %v2718
        %v2812 = vtanh.pop %v2720
        %v2813 = vtanh.pop %v2761
        %v2814 = vtanh.pop %v2763
        %v2815 = vtanh.pop %v2803
        %v2816 = vpack.c.bf16 %v2811, %v2806
        %v2817 = vpack.c.bf16 %v2812, %v2807
        %v2818 = vpack.c.bf16 %v2813, %v2808
        %v2819 = vpack.c.bf16 %v2814, %v2809
        %v2820 = vpack.c.bf16 %v2815, %v2810
        %v2821 = vld [vmem:[#allocation16] sm:$0xf]
        %v2822 = vld [vmem:[#allocation16 + $0x4] sm:$0xf]
        %v2823 = vld [vmem:[#allocation16 + $0x8] sm:$0xf]
        %v2824 = vld [vmem:[#allocation16 + $0xc] sm:$0xf]
        %v2825 = vld [vmem:[#allocation16 + $0x10] sm:$0xf]
        %v2826 = vld [vmem:[#allocation16 + $0x14] sm:$0xf]
        %v2827 = vld [vmem:[#allocation16 + $0x18] sm:$0xf]
        %v2828 = vld [vmem:[#allocation16 + $0x1c] sm:$0xf]
        %v2829 = vld [vmem:[#allocation16 + $0x20] sm:$0xf]
        %v2830 = vld [vmem:[#allocation16 + $0x24] sm:$0xf]
        %v2831 = vld [vmem:[#allocation16 + $0x28] sm:$0xf]
        %v2832 = vld [vmem:[#allocation16 + $0x2c] sm:$0xf]
        %v2833 = vld [vmem:[#allocation16 + $0x30] sm:$0xf]
        %v2834 = vld [vmem:[#allocation16 + $0x34] sm:$0xf]
        %v2835 = vld [vmem:[#allocation16 + $0x38] sm:$0xf]
        %v2836 = vld [vmem:[#allocation16 + $0x3c] sm:$0xf]
        %v2837 = vld [vmem:[#allocation16 + $0x40] sm:$0xf]
        %v2838 = vld [vmem:[#allocation16 + $0x44] sm:$0xf]
        %v2839 = vld [vmem:[#allocation16 + $0x48] sm:$0xf]
        %v2840 = vld [vmem:[#allocation16 + $0x4c] sm:$0xf]
        %v2841 = vld [vmem:[#allocation16 + $0x50] sm:$0xf]
        %v2842 = vld [vmem:[#allocation16 + $0x54] sm:$0xf]
        %v2843 = vld [vmem:[#allocation16 + $0x58] sm:$0xf]
        %v2844 = vld [vmem:[#allocation16 + $0x5c] sm:$0xf]
        %v2845 = vld [vmem:[#allocation16 + $0x60] sm:$0xf]
        %v2846 = vld [vmem:[#allocation16 + $0x64] sm:$0xf]
        %v2847 = vld [vmem:[#allocation16 + $0x68] sm:$0xf]
        %v2848 = vld [vmem:[#allocation16 + $0x6c] sm:$0xf]
        %v2849 = vld [vmem:[#allocation16 + $0x70] sm:$0xf]
        %v2850 = vld [vmem:[#allocation16 + $0x74] sm:$0xf]
        %v2851 = vld [vmem:[#allocation16 + $0x78] sm:$0xf]
        %v2852 = vld [vmem:[#allocation16 + $0x7c] sm:$0xf]
        %v2853 = vld [vmem:[#allocation16 + $0x80] sm:$0xf]
        %v2854 = vld [vmem:[#allocation16 + $0x84] sm:$0xf]
        %v2855 = vld [vmem:[#allocation16 + $0x88] sm:$0xf]
        %v2856 = vld [vmem:[#allocation16 + $0x8c] sm:$0xf]
        %v2857 = vld [vmem:[#allocation16 + $0x90] sm:$0xf]
        %v2858 = vld [vmem:[#allocation16 + $0x94] sm:$0xf]
        %v2859 = vld [vmem:[#allocation16 + $0x98] sm:$0xf]
        %v2860 = vld [vmem:[#allocation16 + $0x9c] sm:$0xf]
        %v2861 = vld [vmem:[#allocation16 + $0xa0] sm:$0xf]
        %v2862 = vld [vmem:[#allocation16 + $0xa4] sm:$0xf]
        %v2863 = vld [vmem:[#allocation16 + $0xa8] sm:$0xf]
        %v2864 = vld [vmem:[#allocation16 + $0xac] sm:$0xf]
        %v2865 = vld [vmem:[#allocation16 + $0xb0] sm:$0xf]
        %v2866 = vld [vmem:[#allocation16 + $0xb4] sm:$0xf]
        %v2867 = vld [vmem:[#allocation16 + $0xb8] sm:$0xf]
        %v2868 = vld [vmem:[#allocation16 + $0xbc] sm:$0xf]
        %v2869 = vld [vmem:[#allocation16 + $0xc0] sm:$0xf]
        %v2870 = vld [vmem:[#allocation16 + $0xc4] sm:$0xf]
        %v2871 = vld [vmem:[#allocation16 + $0xc8] sm:$0xf]
        %v2872 = vld [vmem:[#allocation16 + $0xcc] sm:$0xf]
        %v2873 = vld [vmem:[#allocation16 + $0xd0] sm:$0xf]
        %v2874 = vld [vmem:[#allocation16 + $0xd4] sm:$0xf]
        %v2875 = vld [vmem:[#allocation16 + $0xd8] sm:$0xf]
        %v2876 = vld [vmem:[#allocation16 + $0xdc] sm:$0xf]
        %v2877 = vld [vmem:[#allocation16 + $0xe0] sm:$0xf]
        %v2878 = vld [vmem:[#allocation16 + $0xe4] sm:$0xf]
        %v2879 = vld [vmem:[#allocation16 + $0xe8] sm:$0xf]
        %v2880 = vld [vmem:[#allocation16 + $0xec] sm:$0xf]
        %v2881 = vld [vmem:[#allocation16 + $0xf0] sm:$0xf]
        %v2882 = vld [vmem:[#allocation16 + $0xf4] sm:$0xf]
        %v2883 = vld [vmem:[#allocation16 + $0xf8] sm:$0xf]
        %v2884 = vld [vmem:[#allocation16 + $0xfc] sm:$0xf]
        %v2885 = vld [vmem:[#allocation16 + $0x100] sm:$0xf]
        %v2886 = vld [vmem:[#allocation16 + $0x104] sm:$0xf]
        %v2887 = vld [vmem:[#allocation16 + $0x108] sm:$0xf]
        %v2888 = vld [vmem:[#allocation16 + $0x10c] sm:$0xf]
        %v2889 = vld [vmem:[#allocation16 + $0x110] sm:$0xf]
        %v2890 = vld [vmem:[#allocation16 + $0x114] sm:$0xf]
        %v2891 = vld [vmem:[#allocation16 + $0x118] sm:$0xf]
        %v2892 = vld [vmem:[#allocation16 + $0x11c] sm:$0xf]
        %v2893 = vld [vmem:[#allocation16 + $0x120] sm:$0xf]
        %v2894 = vld [vmem:[#allocation16 + $0x124] sm:$0xf]
        %v2895 = vld [vmem:[#allocation16 + $0x128] sm:$0xf]
        %v2896 = vld [vmem:[#allocation16 + $0x12c] sm:$0xf]
        %v2897 = vld [vmem:[#allocation16 + $0x130] sm:$0xf]
        %v2898 = vld [vmem:[#allocation16 + $0x134] sm:$0xf]
        %v2899 = vld [vmem:[#allocation16 + $0x138] sm:$0xf]
        %v2900 = vld [vmem:[#allocation16 + $0x13c] sm:$0xf]
        %v2901 = vld [vmem:[%s16] sm:$0x1]
        %v2903 = vlaneseq
        %v2904 = vshrl.u32 %v2903, 7
        %v2905 = vsub.s32 0, %v2904
        %v2906 = vrot.slane %v2901, %v2905
        %v2988 = vunpack.c.l.b16 %v2821
        %v2989 = vunpack.c.l.b16 %v2822
        %v2990 = vunpack.c.l.b16 %v2823
        %v2991 = vunpack.c.l.b16 %v2824
        %v2992 = vunpack.c.l.b16 %v2825
        %v2993 = vunpack.c.l.b16 %v2826
        %v2994 = vunpack.c.l.b16 %v2827
        %v2995 = vunpack.c.l.b16 %v2828
        %v2996 = vunpack.c.l.b16 %v2829
        %v2997 = vunpack.c.l.b16 %v2830
        %v2998 = vunpack.c.l.b16 %v2831
        %v2999 = vunpack.c.l.b16 %v2832
        %v3000 = vunpack.c.l.b16 %v2833
        %v3001 = vunpack.c.l.b16 %v2834
        %v3002 = vunpack.c.l.b16 %v2835
        %v3003 = vunpack.c.l.b16 %v2836
        %v3004 = vunpack.c.l.b16 %v2837
        %v3005 = vunpack.c.l.b16 %v2838
        %v3006 = vunpack.c.l.b16 %v2839
        %v3007 = vunpack.c.l.b16 %v2840
        %v3008 = vunpack.c.l.b16 %v2841
        %v3009 = vunpack.c.l.b16 %v2842
        %v3010 = vunpack.c.l.b16 %v2843
        %v3011 = vunpack.c.l.b16 %v2844
        %v3012 = vunpack.c.l.b16 %v2845
        %v3013 = vunpack.c.l.b16 %v2846
        %v3014 = vunpack.c.l.b16 %v2847
        %v3015 = vunpack.c.l.b16 %v2848
        %v3016 = vunpack.c.l.b16 %v2849
        %v3017 = vunpack.c.l.b16 %v2850
        %v3018 = vunpack.c.l.b16 %v2851
        %v3019 = vunpack.c.l.b16 %v2852
        %v3020 = vunpack.c.l.b16 %v2853
        %v3021 = vunpack.c.l.b16 %v2854
        %v3022 = vunpack.c.l.b16 %v2855
        %v3023 = vunpack.c.l.b16 %v2856
        %v3024 = vunpack.c.l.b16 %v2857
        %v3025 = vunpack.c.l.b16 %v2858
        %v3026 = vunpack.c.l.b16 %v2859
        %v3027 = vunpack.c.l.b16 %v2860
        %v3028 = vunpack.c.l.b16 %v2861
        %v3029 = vunpack.c.l.b16 %v2862
        %v3030 = vunpack.c.l.b16 %v2863
        %v3031 = vunpack.c.l.b16 %v2864
        %v3032 = vunpack.c.l.b16 %v2865
        %v3033 = vunpack.c.l.b16 %v2866
        %v3034 = vunpack.c.l.b16 %v2867
        %v3035 = vunpack.c.l.b16 %v2868
        %v3036 = vunpack.c.l.b16 %v2869
        %v3037 = vunpack.c.l.b16 %v2870
        %v3038 = vunpack.c.l.b16 %v2871
        %v3039 = vunpack.c.l.b16 %v2872
        %v3040 = vunpack.c.l.b16 %v2873
        %v3041 = vunpack.c.l.b16 %v2874
        %v3042 = vunpack.c.l.b16 %v2875
        %v3043 = vunpack.c.l.b16 %v2876
        %v3044 = vunpack.c.l.b16 %v2877
        %v3045 = vunpack.c.l.b16 %v2878
        %v3046 = vunpack.c.l.b16 %v2879
        %v3047 = vunpack.c.l.b16 %v2880
        %v3048 = vunpack.c.l.b16 %v2881
        %v3049 = vunpack.c.l.b16 %v2882
        %v3050 = vunpack.c.l.b16 %v2883
        %v3051 = vunpack.c.l.b16 %v2884
        %v3052 = vunpack.c.l.b16 %v2885
        %v3053 = vunpack.c.l.b16 %v2886
        %v3054 = vunpack.c.l.b16 %v2887
        %v3055 = vunpack.c.l.b16 %v2888
        %v3056 = vunpack.c.l.b16 %v2889
        %v3057 = vunpack.c.l.b16 %v2890
        %v3058 = vunpack.c.l.b16 %v2891
        %v3059 = vunpack.c.l.b16 %v2892
        %v3060 = vunpack.c.l.b16 %v2893
        %v3061 = vunpack.c.l.b16 %v2894
        %v3062 = vunpack.c.l.b16 %v2895
        %v3063 = vunpack.c.l.b16 %v2896
        %v3064 = vunpack.c.l.b16 %v2897
        %v3065 = vunpack.c.l.b16 %v2898
        %v3066 = vunpack.c.l.b16 %v2899
        %v3067 = vunpack.c.l.b16 %v2900
        %v3068 = vpack.c.b16 %v2989, %v2988
        %v3069 = vpack.c.b16 %v2991, %v2990
        %v3070 = vpack.c.b16 %v2993, %v2992
        %v3071 = vpack.c.b16 %v2995, %v2994
        %v3072 = vpack.c.b16 %v2997, %v2996
        %v3073 = vpack.c.b16 %v2999, %v2998
        %v3074 = vpack.c.b16 %v3001, %v3000
        %v3075 = vpack.c.b16 %v3003, %v3002
        %v3076 = vpack.c.b16 %v3005, %v3004
        %v3077 = vpack.c.b16 %v3007, %v3006
        %v3078 = vpack.c.b16 %v3009, %v3008
        %v3079 = vpack.c.b16 %v3011, %v3010
        %v3080 = vpack.c.b16 %v3013, %v3012
        %v3081 = vpack.c.b16 %v3015, %v3014
        %v3082 = vpack.c.b16 %v3017, %v3016
        %v3083 = vpack.c.b16 %v3019, %v3018
        %v3084 = vpack.c.b16 %v3021, %v3020
        %v3085 = vpack.c.b16 %v3023, %v3022
        %v3086 = vpack.c.b16 %v3025, %v3024
        %v3087 = vpack.c.b16 %v3027, %v3026
        %v3088 = vpack.c.b16 %v3029, %v3028
        %v3089 = vpack.c.b16 %v3031, %v3030
        %v3090 = vpack.c.b16 %v3033, %v3032
        %v3091 = vpack.c.b16 %v3035, %v3034
        %v3092 = vpack.c.b16 %v3037, %v3036
        %v3093 = vpack.c.b16 %v3039, %v3038
        %v3094 = vpack.c.b16 %v3041, %v3040
        %v3095 = vpack.c.b16 %v3043, %v3042
        %v3096 = vpack.c.b16 %v3045, %v3044
        %v3097 = vpack.c.b16 %v3047, %v3046
        %v3098 = vpack.c.b16 %v3049, %v3048
        %v3099 = vpack.c.b16 %v3051, %v3050
        %v3100 = vpack.c.b16 %v3053, %v3052
        %v3101 = vpack.c.b16 %v3055, %v3054
        %v3102 = vpack.c.b16 %v3057, %v3056
        %v3103 = vpack.c.b16 %v3059, %v3058
        %v3104 = vpack.c.b16 %v3061, %v3060
        %v3105 = vpack.c.b16 %v3063, %v3062
        %v3106 = vpack.c.b16 %v3065, %v3064
        %v3107 = vpack.c.b16 %v3067, %v3066
        %3148 = vmatprep.subr.bf16.mxu0 0
        %3149 = vmatpush1.bf16.msra.mxu0 %v3068
        %3150 = vmatprep.subr.bf16.mxu0 0
        %3151 = vmatpush1.bf16.msra.mxu0 %v3069
        %3152 = vmatprep.subr.bf16.mxu0 0
        %3153 = vmatpush1.bf16.msra.mxu0 %v3070
        %3154 = vmatprep.subr.bf16.mxu0 0
        %3155 = vmatpush1.bf16.msra.mxu0 %v3071
        %3156 = vmatprep.subr.bf16.mxu0 0
        %3157 = vmatpush1.bf16.msra.mxu0 %v3072
        %3158 = vmatprep.subr.bf16.mxu0 0
        %3159 = vmatpush1.bf16.msra.mxu0 %v3073
        %3160 = vmatprep.subr.bf16.mxu0 0
        %3161 = vmatpush1.bf16.msra.mxu0 %v3074
        %3162 = vmatprep.subr.bf16.mxu0 0
        %3163 = vmatpush1.bf16.msra.mxu0 %v3075
        %3164 = vmatprep.subr.bf16.mxu0 0
        %3165 = vmatpush1.bf16.msra.mxu0 %v3076
        %3166 = vmatprep.subr.bf16.mxu0 0
        %3167 = vmatpush1.bf16.msra.mxu0 %v3077
        %3168 = vmatprep.subr.bf16.mxu0 0
        %3169 = vmatpush1.bf16.msra.mxu0 %v3078
        %3170 = vmatprep.subr.bf16.mxu0 0
        %3171 = vmatpush1.bf16.msra.mxu0 %v3079
        %3172 = vmatprep.subr.bf16.mxu0 0
        %3173 = vmatpush1.bf16.msra.mxu0 %v3080
        %3174 = vmatprep.subr.bf16.mxu0 0
        %3175 = vmatpush1.bf16.msra.mxu0 %v3081
        %3176 = vmatprep.subr.bf16.mxu0 0
        %3177 = vmatpush1.bf16.msra.mxu0 %v3082
        %3178 = vmatprep.subr.bf16.mxu0 0
        %3179 = vmatpush1.bf16.msra.mxu0 %v3083
        %3180 = vmatprep.mubr.bf16.mxu0 %v2817
        %3181 = vmatmul.mubr.bf16.gmra.mrb[0].mxu0 %v2816
        %v3182 = vpop.f32.mrb[0].mxu0
        %v3183 = vadd.f32 %v2906, %v3182
        %v3184 = vpop.f32.mrb[0].mxu0
        %v3185 = vpop.f32.mrb[0].mxu0
        %v3186 = vadd.f32 %v2906, %v3185
        %v3187 = vpop.f32.mrb[0].mxu0
        %3188 = vdwg.mxu0
        %3189 = vmatprep.subr.bf16.mxu0 0
        %3190 = vmatpush1.bf16.msra.mxu0 %v3084
        %3191 = vmatprep.subr.bf16.mxu0 0
        %3192 = vmatpush1.bf16.msra.mxu0 %v3085
        %3193 = vmatprep.subr.bf16.mxu0 0
        %3194 = vmatpush1.bf16.msra.mxu0 %v3086
        %3195 = vmatprep.subr.bf16.mxu0 0
        %3196 = vmatpush1.bf16.msra.mxu0 %v3087
        %3197 = vmatprep.subr.bf16.mxu0 0
        %3198 = vmatpush1.bf16.msra.mxu0 %v3088
        %3199 = vmatprep.subr.bf16.mxu0 0
        %3200 = vmatpush1.bf16.msra.mxu0 %v3089
        %3201 = vmatprep.subr.bf16.mxu0 0
        %3202 = vmatpush1.bf16.msra.mxu0 %v3090
        %3203 = vmatprep.subr.bf16.mxu0 0
        %3204 = vmatpush1.bf16.msra.mxu0 %v3091
        %3205 = vmatprep.subr.bf16.mxu0 0
        %3206 = vmatpush1.bf16.msra.mxu0 %v3092
        %3207 = vmatprep.subr.bf16.mxu0 0
        %3208 = vmatpush1.bf16.msra.mxu0 %v3093
        %3209 = vmatprep.subr.bf16.mxu0 0
        %3210 = vmatpush1.bf16.msra.mxu0 %v3094
        %3211 = vmatprep.subr.bf16.mxu0 0
        %3212 = vmatpush1.bf16.msra.mxu0 %v3095
        %3213 = vmatprep.subr.bf16.mxu0 0
        %3214 = vmatpush1.bf16.msra.mxu0 %v3096
        %3215 = vmatprep.subr.bf16.mxu0 0
        %3216 = vmatpush1.bf16.msra.mxu0 %v3097
        %3217 = vmatprep.subr.bf16.mxu0 0
        %3218 = vmatpush1.bf16.msra.mxu0 %v3098
        %3219 = vmatprep.subr.bf16.mxu0 0
        %3220 = vmatpush1.bf16.msra.mxu0 %v3099
        %3221 = vmatprep.mubr.bf16.mxu0 %v2819
        %3222 = vmatmul.mubr.bf16.gmra.mrb[0].mxu0 %v2818
        %v3223 = vpop.f32.mrb[0].mxu0
        %v3224 = vadd.f32 %v3183, %v3223
        %v3225 = vpop.f32.mrb[0].mxu0
        %v3226 = vpop.f32.mrb[0].mxu0
        %v3227 = vadd.f32 %v3186, %v3226
        %v3228 = vpop.f32.mrb[0].mxu0
        %3229 = vdwg.mxu0
        %3230 = vmatprep.subr.bf16.mxu0 0
        %3231 = vmatpush1.bf16.msra.mxu0 %v3100
        %3232 = vmatprep.subr.bf16.mxu0 0
        %3233 = vmatpush1.bf16.msra.mxu0 %v3101
        %3234 = vmatprep.subr.bf16.mxu0 0
        %3235 = vmatpush1.bf16.msra.mxu0 %v3102
        %3236 = vmatprep.subr.bf16.mxu0 0
        %3237 = vmatpush1.bf16.msra.mxu0 %v3103
        %3238 = vmatprep.subr.bf16.mxu0 0
        %3239 = vmatpush1.bf16.msra.mxu0 %v3104
        %3240 = vmatprep.subr.bf16.mxu0 0
        %3241 = vmatpush1.bf16.msra.mxu0 %v3105
        %3242 = vmatprep.subr.bf16.mxu0 0
        %3243 = vmatpush1.bf16.msra.mxu0 %v3106
        %3244 = vmatprep.subr.bf16.mxu0 0
        %3245 = vmatpush1.bf16.msra.mxu0 %v3107
        %3246 = vmatprep.subr.bf16.mxu0 0
        %3247 = vmatpush1.bf16.msra.mxu0 0
        %3248 = vmatprep.subr.bf16.mxu0 0
        %3249 = vmatpush1.bf16.msra.mxu0 0
        %3250 = vmatprep.subr.bf16.mxu0 0
        %3251 = vmatpush1.bf16.msra.mxu0 0
        %3252 = vmatprep.subr.bf16.mxu0 0
        %3253 = vmatpush1.bf16.msra.mxu0 0
        %3254 = vmatprep.subr.bf16.mxu0 0
        %3255 = vmatpush1.bf16.msra.mxu0 0
        %3256 = vmatprep.subr.bf16.mxu0 0
        %3257 = vmatpush1.bf16.msra.mxu0 0
        %3258 = vmatprep.subr.bf16.mxu0 0
        %3259 = vmatpush1.bf16.msra.mxu0 0
        %3260 = vmatprep.subr.bf16.mxu0 0
        %3261 = vmatpush1.bf16.msra.mxu0 0
        %3262 = vmatprep.mubr.bf16.mxu0 0
        %3263 = vmatmul.mubr.bf16.gmra.mrb[0].mxu0 %v2820
        %v3264 = vpop.f32.mrb[0].mxu0
        %v3265 = vadd.f32 %v3224, %v3264
        %v3266 = vpop.f32.mrb[0].mxu0
        %v3267 = vpop.f32.mrb[0].mxu0
        %v3268 = vadd.f32 %v3227, %v3267
        %v3269 = vpop.f32.mrb[0].mxu0
        %3270 = vdwg.mxu0
        %3271 = vst [vmem:[%s682] sm:$0xff] %v3265
        %3272 = vst [vmem:[%s682 + $0x8] sm:$0xff] %v3268
        %s3273 = sand.u32 %s408, 1
        %s3274 = scalar_lea.sflag [#allocation4], %s3273
        %s3275 = sand.u32 %s408, 1
        %s3276 = smul.addr %s3275, 16
        %s3277 = scalar_lea.vmem [#allocation17], %s3276
        // Predicated region
        $region125: #{tpu_custom_call.1} parent=87 // pred_check
          %p3278 = pneg %p418
        $region126: #{tpu_custom_call.1} parent=87 // pred_check_branch
          %3280 = sbr.rel (%p3278) target = $region128
        $region127: #{tpu_custom_call.1} parent=87 // pred_region
          %s3281 = smul.u32 2, %s38
          %s3283 = ssub.s32 256, 256
          %3284 = vsyncadd %s3274, %s3283
          %s3285 = smul.addr %s3281, 128
          %s3286 = scalar_lea.hbm %s17, %s3285
          %s3287 = sshll.u32 %s3277, 4
          %s3288 = int_to_ptr.vmem [resolvable:$true] %s3287
          %3293 = dma.vmem_to_hbm [thread:$0]  %s3288, 256, %s3286, %s3274, 128, 128, 8
        $region128: #{tpu_custom_call.1} parent=87 // pred_fallthru
          _
      $region88: #{tpu_custom_call.1} parent=5 // pred_fallthru
        _
      %p3294 = scmp.le.s32.totalorder 2, %s33
      // Predicated region
      $region129: #{tpu_custom_call.1} parent=5 // pred_check
        %p3295 = pneg %p3294
      $region130: #{tpu_custom_call.1} parent=5 // pred_check_branch
        %3297 = sbr.rel (%p3295) target = $region132
      $region131: #{tpu_custom_call.1} parent=5 // pred_region
        %s3298 = ssub.s32 %s33, 2
        // Predicated region
        $region133: #{tpu_custom_call.1} parent=131 // pred_check
          %p3299 = pneg %p424
        $region134: #{tpu_custom_call.1} parent=131 // pred_check_branch
          %3301 = sbr.rel (%p3299) target = $region136
        $region135: #{tpu_custom_call.1} parent=131 // pred_region
          %s3302 = sand.u32 %s409, 1
          %s3303 = scalar_lea.sflag [#allocation4], %s3302
          %s3304 = sand.u32 %s409, 1
          %s3305 = smul.addr %s3304, 16
          %s3306 = scalar_lea.vmem [#allocation17], %s3305
          %3307 = dma.done %s3303, 256
        $region136: #{tpu_custom_call.1} parent=131 // pred_fallthru
          _
      $region132: #{tpu_custom_call.1} parent=5 // pred_fallthru
        _
    $region6: #{tpu_custom_call.1} parent=1 // loop_footer
      %s37 = sadd.s32 1, %s33
    $region7: #{tpu_custom_call.1} parent=1 // loop_footer_branch
      %32 = sbr.rel target = $region3
    $region8: #{tpu_custom_call.1} parent=1 // loop_exit
      _
    %3308 = vsyncpa [#allocation3], 1
    %s3309 = scalar_lea.sflag [#allocation3], 1
    %3310 = vsyncpa %s3309, 1
    %3311 = vsyncpa [#allocation6], 1
    %3312 = vsyncpa [#allocation9], 1
    %3313 = vsyncpa [#allocation12], 1
    %3314 = vsyncpa [#allocation15], 1
    %3315 = vsyncpa [#allocation4], 1
    %s3316 = scalar_lea.sflag [#allocation4], 1
    %3317 = vsyncpa %s3316, 1

</llo_original>
